<compile_context>
chip_gen: v7x
topology: tpu7x:2x2x1
jax: 0.10.0
libtpu: 0.0.40
codegen_flags: <defaults>
</compile_context>

<pallas_src>
import jax
import jax.numpy as jnp
import numpy as np
from jax.experimental import pallas as pl
from jax.experimental.pallas import tpu as pltpu

# ---- model hyper-parameters (small, consistent with the module) ----
DIM = 32          # dim
DEPTH = 2         # depth
HEADS = 4         # heads
DIM_HEAD = 8      # dim_head
MLP_DIM = 64      # mlp_dim
INNER = HEADS * DIM_HEAD          # 32
EPS = 1e-5

BATCH = 2
NUM_PATCH = 8
BN = BATCH * NUM_PATCH            # 16 rows fed to every matmul
GROUPS = HEADS * BATCH            # fused (head, batch) attention batch dim

PARAM_ORDER = ("ln1_g", "ln1_b", "wqkv", "wo", "bo",
               "ln2_g", "ln2_b", "w1", "b1", "w2", "b2")


# ----------------------------- kernel helpers -----------------------------
def _layer_norm(x, g, b):
    # PyTorch nn.LayerNorm: biased variance over the last dim, eps=1e-5.
    mu = jnp.mean(x, axis=-1, keepdims=True)
    var = jnp.mean((x - mu) ** 2, axis=-1, keepdims=True)
    return (x - mu) * jax.lax.rsqrt(var + EPS) * g + b


def _erf_poly(x):
    # Abramowitz & Stegun 7.1.26 polynomial erf, max abs error ~1.5e-7
    # (plus ~2^-12 rel. error from the EUP approx reciprocal -> still well
    # inside the 5e-3 test tolerance).  Avoids relying on a lax.erf lowering.
    a1, a2, a3, a4, a5 = (0.254829592, -0.284496736, 1.421413741,
                          -1.453152027, 1.061405429)
    p = 0.3275911
    z = jnp.abs(x)
    t = pl.reciprocal(1.0 + p * z, approx=True)        # EUP slot, frees VALU
    poly = ((((a5 * t + a4) * t + a3) * t + a2) * t + a1) * t
    y = 1.0 - poly * jnp.exp(-z * z)
    return jnp.where(x >= 0.0, y, -y)


def _gelu_exact(x):
    # Exact erf-GELU, matching PyTorch nn.GELU() default.
    return 0.5 * x * (1.0 + _erf_poly(x * 0.7071067811865476))


# ------------------------------- the kernel -------------------------------
def transformer_kernel(x_ref,
                       ln1_g_ref, ln1_b_ref, wqkv_ref, wo_ref, bo_ref,
                       ln2_g_ref, ln2_b_ref, w1_ref, b1_ref, w2_ref, b2_ref,
                       o_ref):
    x = x_ref[...]                                            # (BN, D)

    for d in range(DEPTH):                                    # static unroll
        # ------------------ Attention (pre-LN) ------------------
        xn = _layer_norm(x, ln1_g_ref[d], ln1_b_ref[d])       # (BN, D)

        # Fused QKV: single (BN,32)@(32,96) MXU matmul; q-scale folded in.
        qkv = jnp.dot(xn, wqkv_ref[d],
                      preferred_element_type=jnp.float32)     # (BN, 3*INNER)

        def head_slab(proj, h):
            # static lane slice + pure leading-dim reshape -> (B, N, dh)
            s = proj * INNER + h * DIM_HEAD
            return qkv[:, s:s + DIM_HEAD].reshape(BATCH, NUM_PATCH, DIM_HEAD)

        # group dim g = h*BATCH + b (leading-axis concat of (B,N,dh) slabs).
        qg = jnp.concatenate([head_slab(0, h) for h in range(HEADS)], axis=0)
        kg = jnp.concatenate([head_slab(1, h) for h in range(HEADS)], axis=0)
        vg = jnp.concatenate([head_slab(2, h) for h in range(HEADS)], axis=0)

        dots = jnp.einsum('gne,gme->gnm', qg, kg,
                          preferred_element_type=jnp.float32)  # (G, N, N)
        m = jnp.max(dots, axis=-1, keepdims=True)
        e = jnp.exp(dots - m)
        attn = e * pl.reciprocal(jnp.sum(e, axis=-1, keepdims=True),
                                 approx=True)                  # softmax(dim=-1)
        og = jnp.einsum('gnm,gme->gne', attn, vg,
                        preferred_element_type=jnp.float32)    # (G, N, dh)

        # (H*B, N, dh) -> (H, B*N, dh): layout-identical leading reshape,
        # then lane-concatenate heads back to 'b n (h d)' and do ONE
        # (BN,32)@(32,32) output-projection matmul.
        oh = og.reshape(HEADS, BN, DIM_HEAD)
        out = jnp.concatenate([oh[h] for h in range(HEADS)], axis=-1)  # (BN, INNER)
        x = x + jnp.dot(out, wo_ref[d],
                        preferred_element_type=jnp.float32) + bo_ref[d]

        # ------------------ FeedForward (pre-LN) ------------------
        xn2 = _layer_norm(x, ln2_g_ref[d], ln2_b_ref[d])
        h1 = jnp.dot(xn2, w1_ref[d],
                     preferred_element_type=jnp.float32) + b1_ref[d]
        h1 = _gelu_exact(h1)
        h2 = jnp.dot(h1, w2_ref[d],
                     preferred_element_type=jnp.float32) + b2_ref[d]
        x = x + h2                                             # residual

    o_ref[...] = x.astype(o_ref.dtype)


# ------------------------------ the wrapper -------------------------------
def _full_spec(a):
    zeros = (0,) * a.ndim
    return pl.BlockSpec(a.shape, lambda i, _z=zeros: _z)


def transformer_forward_pallas(x, packed):
    B, N, D = x.shape
    x2 = x.reshape(B * N, D)                                   # flat row slab
    args = [packed[name] for name in PARAM_ORDER]

    out = pl.pallas_call(
        transformer_kernel,
        out_shape=jax.ShapeDtypeStruct((B * N, D), x.dtype),
        grid=(1,),                                             # single step: whole problem
        in_specs=[_full_spec(x2)] + [_full_spec(a) for a in args],
        out_specs=pl.BlockSpec((B * N, D), lambda i: (0, 0)),
        input_output_aliases={0: 0},                           # reuse x2's HBM buffer
        compiler_params=pltpu.CompilerParams(
            dimension_semantics=("arbitrary",)),
    )(x2, *args)
    return out.reshape(B, N, D)


transformer_forward = jax.jit(transformer_forward_pallas)


# -------------------------- deterministic params --------------------------
def init_params(key):
    """PyTorch-layout parameters (Linear weights stored as (in, out))."""
    params = []
    for i in range(DEPTH):
        k = jax.random.fold_in(key, i)
        ks = jax.random.split(k, 10)
        params.append({
            # Attention
            "ln1_g": 1.0 + 0.1 * jax.random.normal(ks[0], (DIM,), jnp.float32),
            "ln1_b": 0.1 * jax.random.normal(ks[1], (DIM,), jnp.float32),
            "wqkv": 0.05 * jax.random.normal(ks[2], (DIM, 3 * INNER), jnp.float32),
            "wout": 0.05 * jax.random.normal(ks[3], (INNER, DIM), jnp.float32),
            "bout": 0.1 * jax.random.normal(ks[4], (DIM,), jnp.float32),
            # FeedForward
            "ln2_g": 1.0 + 0.1 * jax.random.normal(ks[5], (DIM,), jnp.float32),
            "ln2_b": 0.1 * jax.random.normal(ks[6], (DIM,), jnp.float32),
            "w1": 0.05 * jax.random.normal(ks[7], (DIM, MLP_DIM), jnp.float32),
            "b1": 0.1 * jax.random.normal(ks[8], (MLP_DIM,), jnp.float32),
            "w2": 0.05 * jax.random.normal(ks[9], (MLP_DIM, DIM), jnp.float32),
            "b2": jnp.zeros((DIM,), jnp.float32),
        })
    return params


def pack_params(params):
    """Restructure PyTorch-layout params into the fused-kernel layout:
    single (DIM, 3*INNER) QKV weight with the attention scale folded into the
    Q columns; DEPTH stacked on a leading axis."""
    scale = DIM_HEAD ** -0.5

    def per_layer(p):
        wq, wk, wv = jnp.split(p["wqkv"], 3, axis=-1)
        return {
            "ln1_g": p["ln1_g"].reshape(1, DIM),
            "ln1_b": p["ln1_b"].reshape(1, DIM),
            "wqkv": jnp.concatenate([wq * scale, wk, wv], axis=-1),  # (DIM, 96)
            "wo": p["wout"],                                         # (INNER, DIM)
            "bo": p["bout"].reshape(1, DIM),
            "ln2_g": p["ln2_g"].reshape(1, DIM),
            "ln2_b": p["ln2_b"].reshape(1, DIM),
            "w1": p["w1"],
            "b1": p["b1"].reshape(1, MLP_DIM),
            "w2": p["w2"],
            "b2": p["b2"].reshape(1, DIM),
        }

    layers = [per_layer(p) for p in params]
    return {k: jnp.stack([lay[k] for lay in layers], axis=0)
            for k in PARAM_ORDER}


# ---------------------------- pure-JAX reference ---------------------------
def ref_layer(x, p):
    def ln(t, g, b):
        mu = t.mean(-1, keepdims=True)
        var = ((t - mu) ** 2).mean(-1, keepdims=True)
        return (t - mu) / jnp.sqrt(var + EPS) * g + b

    B, N, _ = x.shape
    xn = ln(x, p["ln1_g"], p["ln1_b"])
    qkv = xn @ p["wqkv"]
    q, k, v = jnp.split(qkv, 3, axis=-1)
    split_heads = lambda t: t.reshape(B, N, HEADS, DIM_HEAD).transpose(0, 2, 1, 3)
    q, k, v = split_heads(q), split_heads(k), split_heads(v)
    dots = jnp.einsum("bhnd,bhmd->bhnm", q, k) * DIM_HEAD ** -0.5
    attn = jax.nn.softmax(dots, axis=-1)
    out = jnp.einsum("bhnm,bhmd->bhnd", attn, v)
    out = out.transpose(0, 2, 1, 3).reshape(B, N, INNER)
    x = x + (out @ p["wout"] + p["bout"])
    xn2 = ln(x, p["ln2_g"], p["ln2_b"])
    h = jax.nn.gelu(xn2 @ p["w1"] + p["b1"], approximate=False)  # exact erf-GELU
    x = x + (h @ p["w2"] + p["b2"])
    return x


def ref_forward(x, params):
    for p in params:
        x = ref_layer(x, p)
    return x


# --------------------------------- main ------------------------------------
if __name__ == "__main__":
    key = jax.random.PRNGKey(0)
    kx, kp = jax.random.split(key)

    x = jax.random.normal(kx, (BATCH, NUM_PATCH, DIM), jnp.float32)
    params = init_params(kp)
    packed = pack_params(params)

    out = transformer_forward(x, packed)
    out = jax.block_until_ready(out)

    ref = ref_forward(x, params)
    np.testing.assert_allclose(np.asarray(out), np.asarray(ref),
                               atol=5e-3, rtol=5e-3)

    print("KERNEL_OK")
</pallas_src>

<mosaic_0001>
module attributes {stable_mosaic.version = 11 : i64} {
  func.func @transformer_kernel(%arg0: i32, %arg1: memref<16x32xf32, #tpu.memory_space<vmem>>, %arg2: memref<2x1x32xf32, #tpu.memory_space<vmem>>, %arg3: memref<2x1x32xf32, #tpu.memory_space<vmem>>, %arg4: memref<2x32x96xf32, #tpu.memory_space<vmem>>, %arg5: memref<2x32x32xf32, #tpu.memory_space<vmem>>, %arg6: memref<2x1x32xf32, #tpu.memory_space<vmem>>, %arg7: memref<2x1x32xf32, #tpu.memory_space<vmem>>, %arg8: memref<2x1x32xf32, #tpu.memory_space<vmem>>, %arg9: memref<2x32x64xf32, #tpu.memory_space<vmem>>, %arg10: memref<2x1x64xf32, #tpu.memory_space<vmem>>, %arg11: memref<2x64x32xf32, #tpu.memory_space<vmem>>, %arg12: memref<2x1x32xf32, #tpu.memory_space<vmem>>, %arg13: memref<16x32xf32, #tpu.memory_space<vmem>>) attributes {dimension_semantics = [#tpu.dimension_semantics<arbitrary>], iteration_bounds = array<i64: 1>, scalar_prefetch = 0 : i64, scratch_operands = 0 : i64, tpu.core_type = #tpu.core_type<tc>, window_params = [{pipeline_mode = #tpu.pipeline_mode<synchronous>, transform_indices = @transform_0, window_bounds = array<i64: 16, 32>}, {pipeline_mode = #tpu.pipeline_mode<synchronous>, transform_indices = @transform_1, window_bounds = array<i64: 2, 1, 32>}, {pipeline_mode = #tpu.pipeline_mode<synchronous>, transform_indices = @transform_2, window_bounds = array<i64: 2, 1, 32>}, {pipeline_mode = #tpu.pipeline_mode<synchronous>, transform_indices = @transform_3, window_bounds = array<i64: 2, 32, 96>}, {pipeline_mode = #tpu.pipeline_mode<synchronous>, transform_indices = @transform_4, window_bounds = array<i64: 2, 32, 32>}, {pipeline_mode = #tpu.pipeline_mode<synchronous>, transform_indices = @transform_5, window_bounds = array<i64: 2, 1, 32>}, {pipeline_mode = #tpu.pipeline_mode<synchronous>, transform_indices = @transform_6, window_bounds = array<i64: 2, 1, 32>}, {pipeline_mode = #tpu.pipeline_mode<synchronous>, transform_indices = @transform_7, window_bounds = array<i64: 2, 1, 32>}, {pipeline_mode = #tpu.pipeline_mode<synchronous>, transform_indices = @transform_8, window_bounds = array<i64: 2, 32, 64>}, {pipeline_mode = #tpu.pipeline_mode<synchronous>, transform_indices = @transform_9, window_bounds = array<i64: 2, 1, 64>}, {pipeline_mode = #tpu.pipeline_mode<synchronous>, transform_indices = @transform_10, window_bounds = array<i64: 2, 64, 32>}, {pipeline_mode = #tpu.pipeline_mode<synchronous>, transform_indices = @transform_11, window_bounds = array<i64: 2, 1, 32>}, {pipeline_mode = #tpu.pipeline_mode<synchronous>, transform_indices = @transform_12, window_bounds = array<i64: 16, 32>}]} {
    %c0 = arith.constant 0 : index
    %c0_0 = arith.constant 0 : index
    %0 = vector.load %arg1[%c0, %c0_0] : memref<16x32xf32, #tpu.memory_space<vmem>>, vector<16x32xf32>
    %c0_1 = arith.constant 0 : index
    %c0_2 = arith.constant 0 : index
    %c0_3 = arith.constant 0 : index
    %1 = vector.load %arg2[%c0_1, %c0_2, %c0_3] : memref<2x1x32xf32, #tpu.memory_space<vmem>>, vector<1x1x32xf32>
    %2 = vector.shape_cast %1 : vector<1x1x32xf32> to vector<1x32xf32>
    %c0_4 = arith.constant 0 : index
    %c0_5 = arith.constant 0 : index
    %c0_6 = arith.constant 0 : index
    %3 = vector.load %arg3[%c0_4, %c0_5, %c0_6] : memref<2x1x32xf32, #tpu.memory_space<vmem>>, vector<1x1x32xf32>
    %4 = vector.shape_cast %3 : vector<1x1x32xf32> to vector<1x32xf32>
    %cst = arith.constant dense<0.000000e+00> : vector<16xf32>
    %5 = vector.multi_reduction <add>, %0, %cst [1] : vector<16x32xf32> to vector<16xf32>
    %6 = vector.shape_cast %5 : vector<16xf32> to vector<16x1xf32>
    %cst_7 = arith.constant 3.200000e+01 : f32
    %7 = vector.broadcast %cst_7 : f32 to vector<16x1xf32>
    %8 = arith.divf %6, %7 : vector<16x1xf32>
    %9 = vector.broadcast %8 : vector<16x1xf32> to vector<16x32xf32>
    %10 = arith.subf %0, %9 : vector<16x32xf32>
    %11 = arith.mulf %10, %10 : vector<16x32xf32>
    %cst_8 = arith.constant dense<0.000000e+00> : vector<16xf32>
    %12 = vector.multi_reduction <add>, %11, %cst_8 [1] : vector<16x32xf32> to vector<16xf32>
    %13 = vector.shape_cast %12 : vector<16xf32> to vector<16x1xf32>
    %cst_9 = arith.constant 3.200000e+01 : f32
    %14 = vector.broadcast %cst_9 : f32 to vector<16x1xf32>
    %15 = arith.divf %13, %14 : vector<16x1xf32>
    %16 = vector.broadcast %8 : vector<16x1xf32> to vector<16x32xf32>
    %17 = arith.subf %0, %16 : vector<16x32xf32>
    %cst_10 = arith.constant 9.99999974E-6 : f32
    %18 = vector.broadcast %cst_10 : f32 to vector<16x1xf32>
    %19 = arith.addf %15, %18 : vector<16x1xf32>
    %20 = math.rsqrt %19 : vector<16x1xf32>
    %21 = vector.broadcast %20 : vector<16x1xf32> to vector<16x32xf32>
    %22 = arith.mulf %17, %21 : vector<16x32xf32>
    %23 = vector.broadcast %2 : vector<1x32xf32> to vector<16x32xf32>
    %24 = arith.mulf %22, %23 : vector<16x32xf32>
    %25 = vector.broadcast %4 : vector<1x32xf32> to vector<16x32xf32>
    %26 = arith.addf %24, %25 : vector<16x32xf32>
    %c0_11 = arith.constant 0 : index
    %c0_12 = arith.constant 0 : index
    %c0_13 = arith.constant 0 : index
    %27 = vector.load %arg4[%c0_11, %c0_12, %c0_13] : memref<2x32x96xf32, #tpu.memory_space<vmem>>, vector<1x32x96xf32>
    %28 = vector.shape_cast %27 : vector<1x32x96xf32> to vector<32x96xf32>
    %cst_14 = arith.constant dense<0.000000e+00> : vector<16x96xf32>
    %29 = tpu.matmul %26, %28, %cst_14 {dimension_numbers = #tpu.dot_dimension_numbers<[1], [0], [0], [1], [0, 0, 1, 1], [], []>} : vector<16x32xf32>, vector<32x96xf32>, vector<16x96xf32> -> vector<16x96xf32>
    %30 = vector.extract_strided_slice %29 {offsets = [0, 0], sizes = [16, 8], strides = [1, 1]} : vector<16x96xf32> to vector<16x8xf32>
    %31 = vector.shape_cast %30 : vector<16x8xf32> to vector<2x8x8xf32>
    %32 = vector.extract_strided_slice %29 {offsets = [0, 8], sizes = [16, 8], strides = [1, 1]} : vector<16x96xf32> to vector<16x8xf32>
    %33 = vector.shape_cast %32 : vector<16x8xf32> to vector<2x8x8xf32>
    %34 = vector.extract_strided_slice %29 {offsets = [0, 16], sizes = [16, 8], strides = [1, 1]} : vector<16x96xf32> to vector<16x8xf32>
    %35 = vector.shape_cast %34 : vector<16x8xf32> to vector<2x8x8xf32>
    %36 = vector.extract_strided_slice %29 {offsets = [0, 24], sizes = [16, 8], strides = [1, 1]} : vector<16x96xf32> to vector<16x8xf32>
    %37 = vector.shape_cast %36 : vector<16x8xf32> to vector<2x8x8xf32>
    %38 = tpu.concatenate %31, %33, %35, %37 in 0 : vector<2x8x8xf32>, vector<2x8x8xf32>, vector<2x8x8xf32>, vector<2x8x8xf32> -> vector<8x8x8xf32>
    %39 = vector.extract_strided_slice %29 {offsets = [0, 32], sizes = [16, 8], strides = [1, 1]} : vector<16x96xf32> to vector<16x8xf32>
    %40 = vector.shape_cast %39 : vector<16x8xf32> to vector<2x8x8xf32>
    %41 = vector.extract_strided_slice %29 {offsets = [0, 40], sizes = [16, 8], strides = [1, 1]} : vector<16x96xf32> to vector<16x8xf32>
    %42 = vector.shape_cast %41 : vector<16x8xf32> to vector<2x8x8xf32>
    %43 = vector.extract_strided_slice %29 {offsets = [0, 48], sizes = [16, 8], strides = [1, 1]} : vector<16x96xf32> to vector<16x8xf32>
    %44 = vector.shape_cast %43 : vector<16x8xf32> to vector<2x8x8xf32>
    %45 = vector.extract_strided_slice %29 {offsets = [0, 56], sizes = [16, 8], strides = [1, 1]} : vector<16x96xf32> to vector<16x8xf32>
    %46 = vector.shape_cast %45 : vector<16x8xf32> to vector<2x8x8xf32>
    %47 = tpu.concatenate %40, %42, %44, %46 in 0 : vector<2x8x8xf32>, vector<2x8x8xf32>, vector<2x8x8xf32>, vector<2x8x8xf32> -> vector<8x8x8xf32>
    %48 = vector.extract_strided_slice %29 {offsets = [0, 64], sizes = [16, 8], strides = [1, 1]} : vector<16x96xf32> to vector<16x8xf32>
    %49 = vector.shape_cast %48 : vector<16x8xf32> to vector<2x8x8xf32>
    %50 = vector.extract_strided_slice %29 {offsets = [0, 72], sizes = [16, 8], strides = [1, 1]} : vector<16x96xf32> to vector<16x8xf32>
    %51 = vector.shape_cast %50 : vector<16x8xf32> to vector<2x8x8xf32>
    %52 = vector.extract_strided_slice %29 {offsets = [0, 80], sizes = [16, 8], strides = [1, 1]} : vector<16x96xf32> to vector<16x8xf32>
    %53 = vector.shape_cast %52 : vector<16x8xf32> to vector<2x8x8xf32>
    %54 = vector.extract_strided_slice %29 {offsets = [0, 88], sizes = [16, 8], strides = [1, 1]} : vector<16x96xf32> to vector<16x8xf32>
    %55 = vector.shape_cast %54 : vector<16x8xf32> to vector<2x8x8xf32>
    %56 = tpu.concatenate %49, %51, %53, %55 in 0 : vector<2x8x8xf32>, vector<2x8x8xf32>, vector<2x8x8xf32>, vector<2x8x8xf32> -> vector<8x8x8xf32>
    "tpu.trace_start"() <{level = 10 : i32, message = "gne,gme->gnm"}> : () -> ()
    %cst_15 = arith.constant dense<0.000000e+00> : vector<8x8x8xf32>
    %57 = tpu.matmul %38, %47, %cst_15 {dimension_numbers = #tpu.dot_dimension_numbers<[2], [2], [1], [1], [0, 0, 0, 1, 1, 1], [0], [0]>} : vector<8x8x8xf32>, vector<8x8x8xf32>, vector<8x8x8xf32> -> vector<8x8x8xf32>
    "tpu.trace_stop"() : () -> ()
    %cst_16 = arith.constant dense<0xFF800000> : vector<8x8xf32>
    %58 = vector.multi_reduction <maximumf>, %57, %cst_16 [2] : vector<8x8x8xf32> to vector<8x8xf32>
    %59 = vector.shape_cast %58 : vector<8x8xf32> to vector<8x8x1xf32>
    %60 = vector.broadcast %59 : vector<8x8x1xf32> to vector<8x8x8xf32>
    %61 = arith.subf %57, %60 : vector<8x8x8xf32>
    %62 = math.exp %61 : vector<8x8x8xf32>
    %cst_17 = arith.constant dense<0.000000e+00> : vector<8x8xf32>
    %63 = vector.multi_reduction <add>, %62, %cst_17 [2] : vector<8x8x8xf32> to vector<8x8xf32>
    %64 = vector.shape_cast %63 : vector<8x8xf32> to vector<8x8x1xf32>
    %65 = tpu.reciprocal %64 {approx = true} : vector<8x8x1xf32> -> vector<8x8x1xf32>
    %66 = vector.broadcast %65 : vector<8x8x1xf32> to vector<8x8x8xf32>
    %67 = arith.mulf %62, %66 : vector<8x8x8xf32>
    "tpu.trace_start"() <{level = 10 : i32, message = "gnm,gme->gne"}> : () -> ()
    %cst_18 = arith.constant dense<0.000000e+00> : vector<8x8x8xf32>
    %68 = tpu.matmul %67, %56, %cst_18 {dimension_numbers = #tpu.dot_dimension_numbers<[2], [1], [1], [2], [0, 0, 0, 1, 1, 2], [0], [0]>} : vector<8x8x8xf32>, vector<8x8x8xf32>, vector<8x8x8xf32> -> vector<8x8x8xf32>
    "tpu.trace_stop"() : () -> ()
    %69 = vector.shape_cast %68 : vector<8x8x8xf32> to vector<4x16x8xf32>
    %70 = vector.extract_strided_slice %69 {offsets = [0, 0, 0], sizes = [1, 16, 8], strides = [1, 1, 1]} : vector<4x16x8xf32> to vector<1x16x8xf32>
    %71 = vector.shape_cast %70 : vector<1x16x8xf32> to vector<16x8xf32>
    %72 = vector.extract_strided_slice %69 {offsets = [1, 0, 0], sizes = [1, 16, 8], strides = [1, 1, 1]} : vector<4x16x8xf32> to vector<1x16x8xf32>
    %73 = vector.shape_cast %72 : vector<1x16x8xf32> to vector<16x8xf32>
    %74 = vector.extract_strided_slice %69 {offsets = [2, 0, 0], sizes = [1, 16, 8], strides = [1, 1, 1]} : vector<4x16x8xf32> to vector<1x16x8xf32>
    %75 = vector.shape_cast %74 : vector<1x16x8xf32> to vector<16x8xf32>
    %76 = vector.extract_strided_slice %69 {offsets = [3, 0, 0], sizes = [1, 16, 8], strides = [1, 1, 1]} : vector<4x16x8xf32> to vector<1x16x8xf32>
    %77 = vector.shape_cast %76 : vector<1x16x8xf32> to vector<16x8xf32>
    %78 = tpu.concatenate %71, %73, %75, %77 in 1 : vector<16x8xf32>, vector<16x8xf32>, vector<16x8xf32>, vector<16x8xf32> -> vector<16x32xf32>
    %c0_19 = arith.constant 0 : index
    %c0_20 = arith.constant 0 : index
    %c0_21 = arith.constant 0 : index
    %79 = vector.load %arg5[%c0_19, %c0_20, %c0_21] : memref<2x32x32xf32, #tpu.memory_space<vmem>>, vector<1x32x32xf32>
    %80 = vector.shape_cast %79 : vector<1x32x32xf32> to vector<32x32xf32>
    %cst_22 = arith.constant dense<0.000000e+00> : vector<16x32xf32>
    %81 = tpu.matmul %78, %80, %cst_22 {dimension_numbers = #tpu.dot_dimension_numbers<[1], [0], [0], [1], [0, 0, 1, 1], [], []>} : vector<16x32xf32>, vector<32x32xf32>, vector<16x32xf32> -> vector<16x32xf32>
    %82 = arith.addf %0, %81 : vector<16x32xf32>
    %c0_23 = arith.constant 0 : index
    %c0_24 = arith.constant 0 : index
    %c0_25 = arith.constant 0 : index
    %83 = vector.load %arg6[%c0_23, %c0_24, %c0_25] : memref<2x1x32xf32, #tpu.memory_space<vmem>>, vector<1x1x32xf32>
    %84 = vector.shape_cast %83 : vector<1x1x32xf32> to vector<1x32xf32>
    %85 = vector.broadcast %84 : vector<1x32xf32> to vector<16x32xf32>
    %86 = arith.addf %82, %85 : vector<16x32xf32>
    %c0_26 = arith.constant 0 : index
    %c0_27 = arith.constant 0 : index
    %c0_28 = arith.constant 0 : index
    %87 = vector.load %arg7[%c0_26, %c0_27, %c0_28] : memref<2x1x32xf32, #tpu.memory_space<vmem>>, vector<1x1x32xf32>
    %88 = vector.shape_cast %87 : vector<1x1x32xf32> to vector<1x32xf32>
    %c0_29 = arith.constant 0 : index
    %c0_30 = arith.constant 0 : index
    %c0_31 = arith.constant 0 : index
    %89 = vector.load %arg8[%c0_29, %c0_30, %c0_31] : memref<2x1x32xf32, #tpu.memory_space<vmem>>, vector<1x1x32xf32>
    %90 = vector.shape_cast %89 : vector<1x1x32xf32> to vector<1x32xf32>
    %cst_32 = arith.constant dense<0.000000e+00> : vector<16xf32>
    %91 = vector.multi_reduction <add>, %86, %cst_32 [1] : vector<16x32xf32> to vector<16xf32>
    %92 = vector.shape_cast %91 : vector<16xf32> to vector<16x1xf32>
    %cst_33 = arith.constant 3.200000e+01 : f32
    %93 = vector.broadcast %cst_33 : f32 to vector<16x1xf32>
    %94 = arith.divf %92, %93 : vector<16x1xf32>
    %95 = vector.broadcast %94 : vector<16x1xf32> to vector<16x32xf32>
    %96 = arith.subf %86, %95 : vector<16x32xf32>
    %97 = arith.mulf %96, %96 : vector<16x32xf32>
    %cst_34 = arith.constant dense<0.000000e+00> : vector<16xf32>
    %98 = vector.multi_reduction <add>, %97, %cst_34 [1] : vector<16x32xf32> to vector<16xf32>
    %99 = vector.shape_cast %98 : vector<16xf32> to vector<16x1xf32>
    %cst_35 = arith.constant 3.200000e+01 : f32
    %100 = vector.broadcast %cst_35 : f32 to vector<16x1xf32>
    %101 = arith.divf %99, %100 : vector<16x1xf32>
    %102 = vector.broadcast %94 : vector<16x1xf32> to vector<16x32xf32>
    %103 = arith.subf %86, %102 : vector<16x32xf32>
    %cst_36 = arith.constant 9.99999974E-6 : f32
    %104 = vector.broadcast %cst_36 : f32 to vector<16x1xf32>
    %105 = arith.addf %101, %104 : vector<16x1xf32>
    %106 = math.rsqrt %105 : vector<16x1xf32>
    %107 = vector.broadcast %106 : vector<16x1xf32> to vector<16x32xf32>
    %108 = arith.mulf %103, %107 : vector<16x32xf32>
    %109 = vector.broadcast %88 : vector<1x32xf32> to vector<16x32xf32>
    %110 = arith.mulf %108, %109 : vector<16x32xf32>
    %111 = vector.broadcast %90 : vector<1x32xf32> to vector<16x32xf32>
    %112 = arith.addf %110, %111 : vector<16x32xf32>
    %c0_37 = arith.constant 0 : index
    %c0_38 = arith.constant 0 : index
    %c0_39 = arith.constant 0 : index
    %113 = vector.load %arg9[%c0_37, %c0_38, %c0_39] : memref<2x32x64xf32, #tpu.memory_space<vmem>>, vector<1x32x64xf32>
    %114 = vector.shape_cast %113 : vector<1x32x64xf32> to vector<32x64xf32>
    %cst_40 = arith.constant dense<0.000000e+00> : vector<16x64xf32>
    %115 = tpu.matmul %112, %114, %cst_40 {dimension_numbers = #tpu.dot_dimension_numbers<[1], [0], [0], [1], [0, 0, 1, 1], [], []>} : vector<16x32xf32>, vector<32x64xf32>, vector<16x64xf32> -> vector<16x64xf32>
    %c0_41 = arith.constant 0 : index
    %c0_42 = arith.constant 0 : index
    %c0_43 = arith.constant 0 : index
    %116 = vector.load %arg10[%c0_41, %c0_42, %c0_43] : memref<2x1x64xf32, #tpu.memory_space<vmem>>, vector<1x1x64xf32>
    %117 = vector.shape_cast %116 : vector<1x1x64xf32> to vector<1x64xf32>
    %118 = vector.broadcast %117 : vector<1x64xf32> to vector<16x64xf32>
    %119 = arith.addf %115, %118 : vector<16x64xf32>
    %cst_44 = arith.constant 5.000000e-01 : f32
    %120 = vector.broadcast %cst_44 : f32 to vector<16x64xf32>
    %121 = arith.mulf %120, %119 : vector<16x64xf32>
    %cst_45 = arith.constant 0.707106769 : f32
    %122 = vector.broadcast %cst_45 : f32 to vector<16x64xf32>
    %123 = arith.mulf %119, %122 : vector<16x64xf32>
    %124 = math.absf %123 : vector<16x64xf32>
    %cst_46 = arith.constant 0.327591091 : f32
    %125 = vector.broadcast %cst_46 : f32 to vector<16x64xf32>
    %126 = arith.mulf %125, %124 : vector<16x64xf32>
    %cst_47 = arith.constant 1.000000e+00 : f32
    %127 = vector.broadcast %cst_47 : f32 to vector<16x64xf32>
    %128 = arith.addf %127, %126 : vector<16x64xf32>
    %129 = tpu.reciprocal %128 {approx = true} : vector<16x64xf32> -> vector<16x64xf32>
    %cst_48 = arith.constant 1.06140542 : f32
    %130 = vector.broadcast %cst_48 : f32 to vector<16x64xf32>
    %131 = arith.mulf %130, %129 : vector<16x64xf32>
    %cst_49 = arith.constant -1.45315206 : f32
    %132 = vector.broadcast %cst_49 : f32 to vector<16x64xf32>
    %133 = arith.addf %131, %132 : vector<16x64xf32>
    %134 = arith.mulf %133, %129 : vector<16x64xf32>
    %cst_50 = arith.constant 1.42141378 : f32
    %135 = vector.broadcast %cst_50 : f32 to vector<16x64xf32>
    %136 = arith.addf %134, %135 : vector<16x64xf32>
    %137 = arith.mulf %136, %129 : vector<16x64xf32>
    %cst_51 = arith.constant -0.284496725 : f32
    %138 = vector.broadcast %cst_51 : f32 to vector<16x64xf32>
    %139 = arith.addf %137, %138 : vector<16x64xf32>
    %140 = arith.mulf %139, %129 : vector<16x64xf32>
    %cst_52 = arith.constant 0.254829586 : f32
    %141 = vector.broadcast %cst_52 : f32 to vector<16x64xf32>
    %142 = arith.addf %140, %141 : vector<16x64xf32>
    %143 = arith.mulf %142, %129 : vector<16x64xf32>
    %cst_53 = arith.constant 0.000000e+00 : f32
    %144 = vector.broadcast %cst_53 : f32 to vector<16x64xf32>
    %145 = arith.subf %144, %124 : vector<16x64xf32>
    %146 = arith.mulf %145, %124 : vector<16x64xf32>
    %147 = math.exp %146 : vector<16x64xf32>
    %148 = arith.mulf %143, %147 : vector<16x64xf32>
    %cst_54 = arith.constant 1.000000e+00 : f32
    %149 = vector.broadcast %cst_54 : f32 to vector<16x64xf32>
    %150 = arith.subf %149, %148 : vector<16x64xf32>
    %cst_55 = arith.constant 0.000000e+00 : f32
    %151 = vector.broadcast %cst_55 : f32 to vector<16x64xf32>
    %152 = arith.cmpf oge, %123, %151 : vector<16x64xf32>
    %cst_56 = arith.constant 0.000000e+00 : f32
    %153 = vector.broadcast %cst_56 : f32 to vector<16x64xf32>
    %154 = arith.subf %153, %150 : vector<16x64xf32>
    %155 = arith.select %152, %150, %154 : vector<16x64xi1>, vector<16x64xf32>
    %cst_57 = arith.constant 1.000000e+00 : f32
    %156 = vector.broadcast %cst_57 : f32 to vector<16x64xf32>
    %157 = arith.addf %156, %155 : vector<16x64xf32>
    %158 = arith.mulf %121, %157 : vector<16x64xf32>
    %c0_58 = arith.constant 0 : index
    %c0_59 = arith.constant 0 : index
    %c0_60 = arith.constant 0 : index
    %159 = vector.load %arg11[%c0_58, %c0_59, %c0_60] : memref<2x64x32xf32, #tpu.memory_space<vmem>>, vector<1x64x32xf32>
    %160 = vector.shape_cast %159 : vector<1x64x32xf32> to vector<64x32xf32>
    %cst_61 = arith.constant dense<0.000000e+00> : vector<16x32xf32>
    %161 = tpu.matmul %158, %160, %cst_61 {dimension_numbers = #tpu.dot_dimension_numbers<[1], [0], [0], [1], [0, 0, 1, 1], [], []>} : vector<16x64xf32>, vector<64x32xf32>, vector<16x32xf32> -> vector<16x32xf32>
    %c0_62 = arith.constant 0 : index
    %c0_63 = arith.constant 0 : index
    %c0_64 = arith.constant 0 : index
    %162 = vector.load %arg12[%c0_62, %c0_63, %c0_64] : memref<2x1x32xf32, #tpu.memory_space<vmem>>, vector<1x1x32xf32>
    %163 = vector.shape_cast %162 : vector<1x1x32xf32> to vector<1x32xf32>
    %164 = vector.broadcast %163 : vector<1x32xf32> to vector<16x32xf32>
    %165 = arith.addf %161, %164 : vector<16x32xf32>
    %166 = arith.addf %86, %165 : vector<16x32xf32>
    %c1 = arith.constant 1 : index
    %c0_65 = arith.constant 0 : index
    %c0_66 = arith.constant 0 : index
    %167 = vector.load %arg2[%c1, %c0_65, %c0_66] : memref<2x1x32xf32, #tpu.memory_space<vmem>>, vector<1x1x32xf32>
    %168 = vector.shape_cast %167 : vector<1x1x32xf32> to vector<1x32xf32>
    %c1_67 = arith.constant 1 : index
    %c0_68 = arith.constant 0 : index
    %c0_69 = arith.constant 0 : index
    %169 = vector.load %arg3[%c1_67, %c0_68, %c0_69] : memref<2x1x32xf32, #tpu.memory_space<vmem>>, vector<1x1x32xf32>
    %170 = vector.shape_cast %169 : vector<1x1x32xf32> to vector<1x32xf32>
    %cst_70 = arith.constant dense<0.000000e+00> : vector<16xf32>
    %171 = vector.multi_reduction <add>, %166, %cst_70 [1] : vector<16x32xf32> to vector<16xf32>
    %172 = vector.shape_cast %171 : vector<16xf32> to vector<16x1xf32>
    %cst_71 = arith.constant 3.200000e+01 : f32
    %173 = vector.broadcast %cst_71 : f32 to vector<16x1xf32>
    %174 = arith.divf %172, %173 : vector<16x1xf32>
    %175 = vector.broadcast %174 : vector<16x1xf32> to vector<16x32xf32>
    %176 = arith.subf %166, %175 : vector<16x32xf32>
    %177 = arith.mulf %176, %176 : vector<16x32xf32>
    %cst_72 = arith.constant dense<0.000000e+00> : vector<16xf32>
    %178 = vector.multi_reduction <add>, %177, %cst_72 [1] : vector<16x32xf32> to vector<16xf32>
    %179 = vector.shape_cast %178 : vector<16xf32> to vector<16x1xf32>
    %cst_73 = arith.constant 3.200000e+01 : f32
    %180 = vector.broadcast %cst_73 : f32 to vector<16x1xf32>
    %181 = arith.divf %179, %180 : vector<16x1xf32>
    %182 = vector.broadcast %174 : vector<16x1xf32> to vector<16x32xf32>
    %183 = arith.subf %166, %182 : vector<16x32xf32>
    %cst_74 = arith.constant 9.99999974E-6 : f32
    %184 = vector.broadcast %cst_74 : f32 to vector<16x1xf32>
    %185 = arith.addf %181, %184 : vector<16x1xf32>
    %186 = math.rsqrt %185 : vector<16x1xf32>
    %187 = vector.broadcast %186 : vector<16x1xf32> to vector<16x32xf32>
    %188 = arith.mulf %183, %187 : vector<16x32xf32>
    %189 = vector.broadcast %168 : vector<1x32xf32> to vector<16x32xf32>
    %190 = arith.mulf %188, %189 : vector<16x32xf32>
    %191 = vector.broadcast %170 : vector<1x32xf32> to vector<16x32xf32>
    %192 = arith.addf %190, %191 : vector<16x32xf32>
    %c1_75 = arith.constant 1 : index
    %c0_76 = arith.constant 0 : index
    %c0_77 = arith.constant 0 : index
    %193 = vector.load %arg4[%c1_75, %c0_76, %c0_77] : memref<2x32x96xf32, #tpu.memory_space<vmem>>, vector<1x32x96xf32>
    %194 = vector.shape_cast %193 : vector<1x32x96xf32> to vector<32x96xf32>
    %cst_78 = arith.constant dense<0.000000e+00> : vector<16x96xf32>
    %195 = tpu.matmul %192, %194, %cst_78 {dimension_numbers = #tpu.dot_dimension_numbers<[1], [0], [0], [1], [0, 0, 1, 1], [], []>} : vector<16x32xf32>, vector<32x96xf32>, vector<16x96xf32> -> vector<16x96xf32>
    %196 = vector.extract_strided_slice %195 {offsets = [0, 0], sizes = [16, 8], strides = [1, 1]} : vector<16x96xf32> to vector<16x8xf32>
    %197 = vector.shape_cast %196 : vector<16x8xf32> to vector<2x8x8xf32>
    %198 = vector.extract_strided_slice %195 {offsets = [0, 8], sizes = [16, 8], strides = [1, 1]} : vector<16x96xf32> to vector<16x8xf32>
    %199 = vector.shape_cast %198 : vector<16x8xf32> to vector<2x8x8xf32>
    %200 = vector.extract_strided_slice %195 {offsets = [0, 16], sizes = [16, 8], strides = [1, 1]} : vector<16x96xf32> to vector<16x8xf32>
    %201 = vector.shape_cast %200 : vector<16x8xf32> to vector<2x8x8xf32>
    %202 = vector.extract_strided_slice %195 {offsets = [0, 24], sizes = [16, 8], strides = [1, 1]} : vector<16x96xf32> to vector<16x8xf32>
    %203 = vector.shape_cast %202 : vector<16x8xf32> to vector<2x8x8xf32>
    %204 = tpu.concatenate %197, %199, %201, %203 in 0 : vector<2x8x8xf32>, vector<2x8x8xf32>, vector<2x8x8xf32>, vector<2x8x8xf32> -> vector<8x8x8xf32>
    %205 = vector.extract_strided_slice %195 {offsets = [0, 32], sizes = [16, 8], strides = [1, 1]} : vector<16x96xf32> to vector<16x8xf32>
    %206 = vector.shape_cast %205 : vector<16x8xf32> to vector<2x8x8xf32>
    %207 = vector.extract_strided_slice %195 {offsets = [0, 40], sizes = [16, 8], strides = [1, 1]} : vector<16x96xf32> to vector<16x8xf32>
    %208 = vector.shape_cast %207 : vector<16x8xf32> to vector<2x8x8xf32>
    %209 = vector.extract_strided_slice %195 {offsets = [0, 48], sizes = [16, 8], strides = [1, 1]} : vector<16x96xf32> to vector<16x8xf32>
    %210 = vector.shape_cast %209 : vector<16x8xf32> to vector<2x8x8xf32>
    %211 = vector.extract_strided_slice %195 {offsets = [0, 56], sizes = [16, 8], strides = [1, 1]} : vector<16x96xf32> to vector<16x8xf32>
    %212 = vector.shape_cast %211 : vector<16x8xf32> to vector<2x8x8xf32>
    %213 = tpu.concatenate %206, %208, %210, %212 in 0 : vector<2x8x8xf32>, vector<2x8x8xf32>, vector<2x8x8xf32>, vector<2x8x8xf32> -> vector<8x8x8xf32>
    %214 = vector.extract_strided_slice %195 {offsets = [0, 64], sizes = [16, 8], strides = [1, 1]} : vector<16x96xf32> to vector<16x8xf32>
    %215 = vector.shape_cast %214 : vector<16x8xf32> to vector<2x8x8xf32>
    %216 = vector.extract_strided_slice %195 {offsets = [0, 72], sizes = [16, 8], strides = [1, 1]} : vector<16x96xf32> to vector<16x8xf32>
    %217 = vector.shape_cast %216 : vector<16x8xf32> to vector<2x8x8xf32>
    %218 = vector.extract_strided_slice %195 {offsets = [0, 80], sizes = [16, 8], strides = [1, 1]} : vector<16x96xf32> to vector<16x8xf32>
    %219 = vector.shape_cast %218 : vector<16x8xf32> to vector<2x8x8xf32>
    %220 = vector.extract_strided_slice %195 {offsets = [0, 88], sizes = [16, 8], strides = [1, 1]} : vector<16x96xf32> to vector<16x8xf32>
    %221 = vector.shape_cast %220 : vector<16x8xf32> to vector<2x8x8xf32>
    %222 = tpu.concatenate %215, %217, %219, %221 in 0 : vector<2x8x8xf32>, vector<2x8x8xf32>, vector<2x8x8xf32>, vector<2x8x8xf32> -> vector<8x8x8xf32>
    "tpu.trace_start"() <{level = 10 : i32, message = "gne,gme->gnm"}> : () -> ()
    %cst_79 = arith.constant dense<0.000000e+00> : vector<8x8x8xf32>
    %223 = tpu.matmul %204, %213, %cst_79 {dimension_numbers = #tpu.dot_dimension_numbers<[2], [2], [1], [1], [0, 0, 0, 1, 1, 1], [0], [0]>} : vector<8x8x8xf32>, vector<8x8x8xf32>, vector<8x8x8xf32> -> vector<8x8x8xf32>
    "tpu.trace_stop"() : () -> ()
    %cst_80 = arith.constant dense<0xFF800000> : vector<8x8xf32>
    %224 = vector.multi_reduction <maximumf>, %223, %cst_80 [2] : vector<8x8x8xf32> to vector<8x8xf32>
    %225 = vector.shape_cast %224 : vector<8x8xf32> to vector<8x8x1xf32>
    %226 = vector.broadcast %225 : vector<8x8x1xf32> to vector<8x8x8xf32>
    %227 = arith.subf %223, %226 : vector<8x8x8xf32>
    %228 = math.exp %227 : vector<8x8x8xf32>
    %cst_81 = arith.constant dense<0.000000e+00> : vector<8x8xf32>
    %229 = vector.multi_reduction <add>, %228, %cst_81 [2] : vector<8x8x8xf32> to vector<8x8xf32>
    %230 = vector.shape_cast %229 : vector<8x8xf32> to vector<8x8x1xf32>
    %231 = tpu.reciprocal %230 {approx = true} : vector<8x8x1xf32> -> vector<8x8x1xf32>
    %232 = vector.broadcast %231 : vector<8x8x1xf32> to vector<8x8x8xf32>
    %233 = arith.mulf %228, %232 : vector<8x8x8xf32>
    "tpu.trace_start"() <{level = 10 : i32, message = "gnm,gme->gne"}> : () -> ()
    %cst_82 = arith.constant dense<0.000000e+00> : vector<8x8x8xf32>
    %234 = tpu.matmul %233, %222, %cst_82 {dimension_numbers = #tpu.dot_dimension_numbers<[2], [1], [1], [2], [0, 0, 0, 1, 1, 2], [0], [0]>} : vector<8x8x8xf32>, vector<8x8x8xf32>, vector<8x8x8xf32> -> vector<8x8x8xf32>
    "tpu.trace_stop"() : () -> ()
    %235 = vector.shape_cast %234 : vector<8x8x8xf32> to vector<4x16x8xf32>
    %236 = vector.extract_strided_slice %235 {offsets = [0, 0, 0], sizes = [1, 16, 8], strides = [1, 1, 1]} : vector<4x16x8xf32> to vector<1x16x8xf32>
    %237 = vector.shape_cast %236 : vector<1x16x8xf32> to vector<16x8xf32>
    %238 = vector.extract_strided_slice %235 {offsets = [1, 0, 0], sizes = [1, 16, 8], strides = [1, 1, 1]} : vector<4x16x8xf32> to vector<1x16x8xf32>
    %239 = vector.shape_cast %238 : vector<1x16x8xf32> to vector<16x8xf32>
    %240 = vector.extract_strided_slice %235 {offsets = [2, 0, 0], sizes = [1, 16, 8], strides = [1, 1, 1]} : vector<4x16x8xf32> to vector<1x16x8xf32>
    %241 = vector.shape_cast %240 : vector<1x16x8xf32> to vector<16x8xf32>
    %242 = vector.extract_strided_slice %235 {offsets = [3, 0, 0], sizes = [1, 16, 8], strides = [1, 1, 1]} : vector<4x16x8xf32> to vector<1x16x8xf32>
    %243 = vector.shape_cast %242 : vector<1x16x8xf32> to vector<16x8xf32>
    %244 = tpu.concatenate %237, %239, %241, %243 in 1 : vector<16x8xf32>, vector<16x8xf32>, vector<16x8xf32>, vector<16x8xf32> -> vector<16x32xf32>
    %c1_83 = arith.constant 1 : index
    %c0_84 = arith.constant 0 : index
    %c0_85 = arith.constant 0 : index
    %245 = vector.load %arg5[%c1_83, %c0_84, %c0_85] : memref<2x32x32xf32, #tpu.memory_space<vmem>>, vector<1x32x32xf32>
    %246 = vector.shape_cast %245 : vector<1x32x32xf32> to vector<32x32xf32>
    %cst_86 = arith.constant dense<0.000000e+00> : vector<16x32xf32>
    %247 = tpu.matmul %244, %246, %cst_86 {dimension_numbers = #tpu.dot_dimension_numbers<[1], [0], [0], [1], [0, 0, 1, 1], [], []>} : vector<16x32xf32>, vector<32x32xf32>, vector<16x32xf32> -> vector<16x32xf32>
    %248 = arith.addf %166, %247 : vector<16x32xf32>
    %c1_87 = arith.constant 1 : index
    %c0_88 = arith.constant 0 : index
    %c0_89 = arith.constant 0 : index
    %249 = vector.load %arg6[%c1_87, %c0_88, %c0_89] : memref<2x1x32xf32, #tpu.memory_space<vmem>>, vector<1x1x32xf32>
    %250 = vector.shape_cast %249 : vector<1x1x32xf32> to vector<1x32xf32>
    %251 = vector.broadcast %250 : vector<1x32xf32> to vector<16x32xf32>
    %252 = arith.addf %248, %251 : vector<16x32xf32>
    %c1_90 = arith.constant 1 : index
    %c0_91 = arith.constant 0 : index
    %c0_92 = arith.constant 0 : index
    %253 = vector.load %arg7[%c1_90, %c0_91, %c0_92] : memref<2x1x32xf32, #tpu.memory_space<vmem>>, vector<1x1x32xf32>
    %254 = vector.shape_cast %253 : vector<1x1x32xf32> to vector<1x32xf32>
    %c1_93 = arith.constant 1 : index
    %c0_94 = arith.constant 0 : index
    %c0_95 = arith.constant 0 : index
    %255 = vector.load %arg8[%c1_93, %c0_94, %c0_95] : memref<2x1x32xf32, #tpu.memory_space<vmem>>, vector<1x1x32xf32>
    %256 = vector.shape_cast %255 : vector<1x1x32xf32> to vector<1x32xf32>
    %cst_96 = arith.constant dense<0.000000e+00> : vector<16xf32>
    %257 = vector.multi_reduction <add>, %252, %cst_96 [1] : vector<16x32xf32> to vector<16xf32>
    %258 = vector.shape_cast %257 : vector<16xf32> to vector<16x1xf32>
    %cst_97 = arith.constant 3.200000e+01 : f32
    %259 = vector.broadcast %cst_97 : f32 to vector<16x1xf32>
    %260 = arith.divf %258, %259 : vector<16x1xf32>
    %261 = vector.broadcast %260 : vector<16x1xf32> to vector<16x32xf32>
    %262 = arith.subf %252, %261 : vector<16x32xf32>
    %263 = arith.mulf %262, %262 : vector<16x32xf32>
    %cst_98 = arith.constant dense<0.000000e+00> : vector<16xf32>
    %264 = vector.multi_reduction <add>, %263, %cst_98 [1] : vector<16x32xf32> to vector<16xf32>
    %265 = vector.shape_cast %264 : vector<16xf32> to vector<16x1xf32>
    %cst_99 = arith.constant 3.200000e+01 : f32
    %266 = vector.broadcast %cst_99 : f32 to vector<16x1xf32>
    %267 = arith.divf %265, %266 : vector<16x1xf32>
    %268 = vector.broadcast %260 : vector<16x1xf32> to vector<16x32xf32>
    %269 = arith.subf %252, %268 : vector<16x32xf32>
    %cst_100 = arith.constant 9.99999974E-6 : f32
    %270 = vector.broadcast %cst_100 : f32 to vector<16x1xf32>
    %271 = arith.addf %267, %270 : vector<16x1xf32>
    %272 = math.rsqrt %271 : vector<16x1xf32>
    %273 = vector.broadcast %272 : vector<16x1xf32> to vector<16x32xf32>
    %274 = arith.mulf %269, %273 : vector<16x32xf32>
    %275 = vector.broadcast %254 : vector<1x32xf32> to vector<16x32xf32>
    %276 = arith.mulf %274, %275 : vector<16x32xf32>
    %277 = vector.broadcast %256 : vector<1x32xf32> to vector<16x32xf32>
    %278 = arith.addf %276, %277 : vector<16x32xf32>
    %c1_101 = arith.constant 1 : index
    %c0_102 = arith.constant 0 : index
    %c0_103 = arith.constant 0 : index
    %279 = vector.load %arg9[%c1_101, %c0_102, %c0_103] : memref<2x32x64xf32, #tpu.memory_space<vmem>>, vector<1x32x64xf32>
    %280 = vector.shape_cast %279 : vector<1x32x64xf32> to vector<32x64xf32>
    %cst_104 = arith.constant dense<0.000000e+00> : vector<16x64xf32>
    %281 = tpu.matmul %278, %280, %cst_104 {dimension_numbers = #tpu.dot_dimension_numbers<[1], [0], [0], [1], [0, 0, 1, 1], [], []>} : vector<16x32xf32>, vector<32x64xf32>, vector<16x64xf32> -> vector<16x64xf32>
    %c1_105 = arith.constant 1 : index
    %c0_106 = arith.constant 0 : index
    %c0_107 = arith.constant 0 : index
    %282 = vector.load %arg10[%c1_105, %c0_106, %c0_107] : memref<2x1x64xf32, #tpu.memory_space<vmem>>, vector<1x1x64xf32>
    %283 = vector.shape_cast %282 : vector<1x1x64xf32> to vector<1x64xf32>
    %284 = vector.broadcast %283 : vector<1x64xf32> to vector<16x64xf32>
    %285 = arith.addf %281, %284 : vector<16x64xf32>
    %cst_108 = arith.constant 5.000000e-01 : f32
    %286 = vector.broadcast %cst_108 : f32 to vector<16x64xf32>
    %287 = arith.mulf %286, %285 : vector<16x64xf32>
    %cst_109 = arith.constant 0.707106769 : f32
    %288 = vector.broadcast %cst_109 : f32 to vector<16x64xf32>
    %289 = arith.mulf %285, %288 : vector<16x64xf32>
    %290 = math.absf %289 : vector<16x64xf32>
    %cst_110 = arith.constant 0.327591091 : f32
    %291 = vector.broadcast %cst_110 : f32 to vector<16x64xf32>
    %292 = arith.mulf %291, %290 : vector<16x64xf32>
    %cst_111 = arith.constant 1.000000e+00 : f32
    %293 = vector.broadcast %cst_111 : f32 to vector<16x64xf32>
    %294 = arith.addf %293, %292 : vector<16x64xf32>
    %295 = tpu.reciprocal %294 {approx = true} : vector<16x64xf32> -> vector<16x64xf32>
    %cst_112 = arith.constant 1.06140542 : f32
    %296 = vector.broadcast %cst_112 : f32 to vector<16x64xf32>
    %297 = arith.mulf %296, %295 : vector<16x64xf32>
    %cst_113 = arith.constant -1.45315206 : f32
    %298 = vector.broadcast %cst_113 : f32 to vector<16x64xf32>
    %299 = arith.addf %297, %298 : vector<16x64xf32>
    %300 = arith.mulf %299, %295 : vector<16x64xf32>
    %cst_114 = arith.constant 1.42141378 : f32
    %301 = vector.broadcast %cst_114 : f32 to vector<16x64xf32>
    %302 = arith.addf %300, %301 : vector<16x64xf32>
    %303 = arith.mulf %302, %295 : vector<16x64xf32>
    %cst_115 = arith.constant -0.284496725 : f32
    %304 = vector.broadcast %cst_115 : f32 to vector<16x64xf32>
    %305 = arith.addf %303, %304 : vector<16x64xf32>
    %306 = arith.mulf %305, %295 : vector<16x64xf32>
    %cst_116 = arith.constant 0.254829586 : f32
    %307 = vector.broadcast %cst_116 : f32 to vector<16x64xf32>
    %308 = arith.addf %306, %307 : vector<16x64xf32>
    %309 = arith.mulf %308, %295 : vector<16x64xf32>
    %cst_117 = arith.constant 0.000000e+00 : f32
    %310 = vector.broadcast %cst_117 : f32 to vector<16x64xf32>
    %311 = arith.subf %310, %290 : vector<16x64xf32>
    %312 = arith.mulf %311, %290 : vector<16x64xf32>
    %313 = math.exp %312 : vector<16x64xf32>
    %314 = arith.mulf %309, %313 : vector<16x64xf32>
    %cst_118 = arith.constant 1.000000e+00 : f32
    %315 = vector.broadcast %cst_118 : f32 to vector<16x64xf32>
    %316 = arith.subf %315, %314 : vector<16x64xf32>
    %cst_119 = arith.constant 0.000000e+00 : f32
    %317 = vector.broadcast %cst_119 : f32 to vector<16x64xf32>
    %318 = arith.cmpf oge, %289, %317 : vector<16x64xf32>
    %cst_120 = arith.constant 0.000000e+00 : f32
    %319 = vector.broadcast %cst_120 : f32 to vector<16x64xf32>
    %320 = arith.subf %319, %316 : vector<16x64xf32>
    %321 = arith.select %318, %316, %320 : vector<16x64xi1>, vector<16x64xf32>
    %cst_121 = arith.constant 1.000000e+00 : f32
    %322 = vector.broadcast %cst_121 : f32 to vector<16x64xf32>
    %323 = arith.addf %322, %321 : vector<16x64xf32>
    %324 = arith.mulf %287, %323 : vector<16x64xf32>
    %c1_122 = arith.constant 1 : index
    %c0_123 = arith.constant 0 : index
    %c0_124 = arith.constant 0 : index
    %325 = vector.load %arg11[%c1_122, %c0_123, %c0_124] : memref<2x64x32xf32, #tpu.memory_space<vmem>>, vector<1x64x32xf32>
    %326 = vector.shape_cast %325 : vector<1x64x32xf32> to vector<64x32xf32>
    %cst_125 = arith.constant dense<0.000000e+00> : vector<16x32xf32>
    %327 = tpu.matmul %324, %326, %cst_125 {dimension_numbers = #tpu.dot_dimension_numbers<[1], [0], [0], [1], [0, 0, 1, 1], [], []>} : vector<16x64xf32>, vector<64x32xf32>, vector<16x32xf32> -> vector<16x32xf32>
    %c1_126 = arith.constant 1 : index
    %c0_127 = arith.constant 0 : index
    %c0_128 = arith.constant 0 : index
    %328 = vector.load %arg12[%c1_126, %c0_127, %c0_128] : memref<2x1x32xf32, #tpu.memory_space<vmem>>, vector<1x1x32xf32>
    %329 = vector.shape_cast %328 : vector<1x1x32xf32> to vector<1x32xf32>
    %330 = vector.broadcast %329 : vector<1x32xf32> to vector<16x32xf32>
    %331 = arith.addf %327, %330 : vector<16x32xf32>
    %332 = arith.addf %252, %331 : vector<16x32xf32>
    %c0_129 = arith.constant 0 : index
    %c0_130 = arith.constant 0 : index
    %333 = vector.load %arg13[%c0_129, %c0_130] : memref<16x32xf32, #tpu.memory_space<vmem>>, vector<16x32xf32>
    tpu.vector_store %arg13[%c0_129, %c0_130], %332 {strides = array<i32>} : memref<16x32xf32, #tpu.memory_space<vmem>>, vector<16x32xf32>,
    return
  }
  func.func @transform_0(%arg0: i32) -> (i32, i32) {
    %c0_i32 = arith.constant 0 : i32
    %c0_i32_0 = arith.constant 0 : i32
    %c0_i32_1 = arith.constant 0 : i32
    return %c0_i32, %c0_i32_0 : i32, i32
  }
  func.func @transform_1(%arg0: i32) -> (i32, i32, i32) {
    %c0_i32 = arith.constant 0 : i32
    %c0_i32_0 = arith.constant 0 : i32
    %c0_i32_1 = arith.constant 0 : i32
    %c0_i32_2 = arith.constant 0 : i32
    return %c0_i32, %c0_i32_0, %c0_i32_1 : i32, i32, i32
  }
  func.func @transform_2(%arg0: i32) -> (i32, i32, i32) {
    %c0_i32 = arith.constant 0 : i32
    %c0_i32_0 = arith.constant 0 : i32
    %c0_i32_1 = arith.constant 0 : i32
    %c0_i32_2 = arith.constant 0 : i32
    return %c0_i32, %c0_i32_0, %c0_i32_1 : i32, i32, i32
  }
  func.func @transform_3(%arg0: i32) -> (i32, i32, i32) {
    %c0_i32 = arith.constant 0 : i32
    %c0_i32_0 = arith.constant 0 : i32
    %c0_i32_1 = arith.constant 0 : i32
    %c0_i32_2 = arith.constant 0 : i32
    return %c0_i32, %c0_i32_0, %c0_i32_1 : i32, i32, i32
  }
  func.func @transform_4(%arg0: i32) -> (i32, i32, i32) {
    %c0_i32 = arith.constant 0 : i32
    %c0_i32_0 = arith.constant 0 : i32
    %c0_i32_1 = arith.constant 0 : i32
    %c0_i32_2 = arith.constant 0 : i32
    return %c0_i32, %c0_i32_0, %c0_i32_1 : i32, i32, i32
  }
  func.func @transform_5(%arg0: i32) -> (i32, i32, i32) {
    %c0_i32 = arith.constant 0 : i32
    %c0_i32_0 = arith.constant 0 : i32
    %c0_i32_1 = arith.constant 0 : i32
    %c0_i32_2 = arith.constant 0 : i32
    return %c0_i32, %c0_i32_0, %c0_i32_1 : i32, i32, i32
  }
  func.func @transform_6(%arg0: i32) -> (i32, i32, i32) {
    %c0_i32 = arith.constant 0 : i32
    %c0_i32_0 = arith.constant 0 : i32
    %c0_i32_1 = arith.constant 0 : i32
    %c0_i32_2 = arith.constant 0 : i32
    return %c0_i32, %c0_i32_0, %c0_i32_1 : i32, i32, i32
  }
  func.func @transform_7(%arg0: i32) -> (i32, i32, i32) {
    %c0_i32 = arith.constant 0 : i32
    %c0_i32_0 = arith.constant 0 : i32
    %c0_i32_1 = arith.constant 0 : i32
    %c0_i32_2 = arith.constant 0 : i32
    return %c0_i32, %c0_i32_0, %c0_i32_1 : i32, i32, i32
  }
  func.func @transform_8(%arg0: i32) -> (i32, i32, i32) {
    %c0_i32 = arith.constant 0 : i32
    %c0_i32_0 = arith.constant 0 : i32
    %c0_i32_1 = arith.constant 0 : i32
    %c0_i32_2 = arith.constant 0 : i32
    return %c0_i32, %c0_i32_0, %c0_i32_1 : i32, i32, i32
  }
  func.func @transform_9(%arg0: i32) -> (i32, i32, i32) {
    %c0_i32 = arith.constant 0 : i32
    %c0_i32_0 = arith.constant 0 : i32
    %c0_i32_1 = arith.constant 0 : i32
    %c0_i32_2 = arith.constant 0 : i32
    return %c0_i32, %c0_i32_0, %c0_i32_1 : i32, i32, i32
  }
  func.func @transform_10(%arg0: i32) -> (i32, i32, i32) {
    %c0_i32 = arith.constant 0 : i32
    %c0_i32_0 = arith.constant 0 : i32
    %c0_i32_1 = arith.constant 0 : i32
    %c0_i32_2 = arith.constant 0 : i32
    return %c0_i32, %c0_i32_0, %c0_i32_1 : i32, i32, i32
  }
  func.func @transform_11(%arg0: i32) -> (i32, i32, i32) {
    %c0_i32 = arith.constant 0 : i32
    %c0_i32_0 = arith.constant 0 : i32
    %c0_i32_1 = arith.constant 0 : i32
    %c0_i32_2 = arith.constant 0 : i32
    return %c0_i32, %c0_i32_0, %c0_i32_1 : i32, i32, i32
  }
  func.func @transform_12(%arg0: i32) -> (i32, i32) {
    %c0_i32 = arith.constant 0 : i32
    %c0_i32_0 = arith.constant 0 : i32
    %c0_i32_1 = arith.constant 0 : i32
    return %c0_i32, %c0_i32_0 : i32, i32
  }
}

</mosaic_0001>

<llo_original>
// kernel: transformer_forward_pallas.1
$region0: #{transformer_forward_pallas.1}
  #allocation0 [shape = 'u32[]', space=smem, size = 0x4, offset = 0x4, fixed_abs, tag = 'smem constant byte address 0x4 - core index']
  #allocation1 [shape = 'u32[144,128]{1,0:T(1,128)}', space=vmem, size = 0x12000, scoped, tag = 'internal scratch']
  %s0 = inlined_call_operand.vmem [shape: f32[16,32], index: 0, kind: input, shape index: {}, may-alias: {0,12}]
  %s1 = inlined_call_operand.vmem [shape: f32[2,1,32], index: 1, kind: input, shape index: {}]
  %s2 = inlined_call_operand.vmem [shape: f32[2,1,32], index: 2, kind: input, shape index: {}]
  %s3 = inlined_call_operand.vmem [shape: f32[2,32,96], index: 3, kind: input, shape index: {}]
  %s4 = inlined_call_operand.vmem [shape: f32[2,32,32], index: 4, kind: input, shape index: {}]
  %s5 = inlined_call_operand.vmem [shape: f32[2,1,32], index: 5, kind: input, shape index: {}]
  %s6 = inlined_call_operand.vmem [shape: f32[2,1,32], index: 6, kind: input, shape index: {}]
  %s7 = inlined_call_operand.vmem [shape: f32[2,1,32], index: 7, kind: input, shape index: {}]
  %s8 = inlined_call_operand.hbm [shape: f32[2,32,64], index: 8, kind: input, shape index: {}]
  %s9 = inlined_call_operand.vmem [shape: f32[2,1,64], index: 9, kind: input, shape index: {}]
  %s10 = inlined_call_operand.vmem [shape: f32[2,64,32], index: 10, kind: input, shape index: {}]
  %s11 = inlined_call_operand.vmem [shape: f32[2,1,32], index: 11, kind: input, shape index: {}]
  %s12 = inlined_call_operand.vmem [shape: f32[16,32], index: 12, kind: output, shape index: {}, may-alias: {0,12}]
  %s13 = sld [smem:[#allocation0]]
  $region62: #{transformer_forward_pallas.1} parent=0
    _
  %s15 = ssub.s32 1, %s13
  %s16 = scalar_select 0, %s15, %s13
  $region1: #{transformer_forward_pallas.1} parent=0
    #allocation2 [shape = 'u8[32768]{0}', space=vmem, size = 0x8000, scoped, tag = 'input window, operand 8, single buffered']
    #allocation3 [shape = 's32[1]{0}', space=sflag, size = 0x4, scoped, tag = 'scoped memory for transformer_forward_pallas.1']
    %17 = vsyncpa [#allocation3], 0
    // Predicated region
    $region2: #{transformer_forward_pallas.1} parent=1 // pred_check
      _
    $region3: #{transformer_forward_pallas.1} parent=1 // pred_check_branch
      %19 = sbr.rel (0) target = $region5
    $region4: #{transformer_forward_pallas.1} parent=1 // pred_region
      _
    $region5: #{transformer_forward_pallas.1} parent=1 // pred_fallthru
      _
    // Predicated region
    $region6: #{transformer_forward_pallas.1} parent=1 // pred_check
      _
    $region7: #{transformer_forward_pallas.1} parent=1 // pred_check_branch
      %21 = sbr.rel (0) target = $region9
    $region8: #{transformer_forward_pallas.1} parent=1 // pred_region
      _
    $region9: #{transformer_forward_pallas.1} parent=1 // pred_fallthru
      _
    // Predicated region
    $region10: #{transformer_forward_pallas.1} parent=1 // pred_check
      _
    $region11: #{transformer_forward_pallas.1} parent=1 // pred_check_branch
      %23 = sbr.rel (0) target = $region13
    $region12: #{transformer_forward_pallas.1} parent=1 // pred_region
      _
    $region13: #{transformer_forward_pallas.1} parent=1 // pred_fallthru
      _
    // Predicated region
    $region14: #{transformer_forward_pallas.1} parent=1 // pred_check
      _
    $region15: #{transformer_forward_pallas.1} parent=1 // pred_check_branch
      %25 = sbr.rel (0) target = $region17
    $region16: #{transformer_forward_pallas.1} parent=1 // pred_region
      _
    $region17: #{transformer_forward_pallas.1} parent=1 // pred_fallthru
      _
    // Predicated region
    $region18: #{transformer_forward_pallas.1} parent=1 // pred_check
      _
    $region19: #{transformer_forward_pallas.1} parent=1 // pred_check_branch
      %27 = sbr.rel (0) target = $region21
    $region20: #{transformer_forward_pallas.1} parent=1 // pred_region
      _
    $region21: #{transformer_forward_pallas.1} parent=1 // pred_fallthru
      _
    // Predicated region
    $region22: #{transformer_forward_pallas.1} parent=1 // pred_check
      _
    $region23: #{transformer_forward_pallas.1} parent=1 // pred_check_branch
      %29 = sbr.rel (0) target = $region25
    $region24: #{transformer_forward_pallas.1} parent=1 // pred_region
      _
    $region25: #{transformer_forward_pallas.1} parent=1 // pred_fallthru
      _
    // Predicated region
    $region26: #{transformer_forward_pallas.1} parent=1 // pred_check
      _
    $region27: #{transformer_forward_pallas.1} parent=1 // pred_check_branch
      %31 = sbr.rel (0) target = $region29
    $region28: #{transformer_forward_pallas.1} parent=1 // pred_region
      _
    $region29: #{transformer_forward_pallas.1} parent=1 // pred_fallthru
      _
    // Predicated region
    $region30: #{transformer_forward_pallas.1} parent=1 // pred_check
      _
    $region31: #{transformer_forward_pallas.1} parent=1 // pred_check_branch
      %33 = sbr.rel (0) target = $region33
    $region32: #{transformer_forward_pallas.1} parent=1 // pred_region
      _
    $region33: #{transformer_forward_pallas.1} parent=1 // pred_fallthru
      _
    // Predicated region
    $region34: #{transformer_forward_pallas.1} parent=1 // pred_check
      _
    $region35: #{transformer_forward_pallas.1} parent=1 // pred_check_branch
      %35 = sbr.rel (0) target = $region37
    $region36: #{transformer_forward_pallas.1} parent=1 // pred_region
      %s37 = ssub.s32 1024, 1024
      %38 = vsyncadd [#allocation3], %s37
      %s39 = sshll.u32 [#allocation2], 4
      %s40 = int_to_ptr.vmem [resolvable:$true] %s39
      %45 = dma.hbm_to_vmem [thread:$0]  %s8, 1024, %s40, [#allocation3], 128, 128, 8
    $region37: #{transformer_forward_pallas.1} parent=1 // pred_fallthru
      _
    // Predicated region
    $region38: #{transformer_forward_pallas.1} parent=1 // pred_check
      _
    $region39: #{transformer_forward_pallas.1} parent=1 // pred_check_branch
      %47 = sbr.rel (0) target = $region41
    $region40: #{transformer_forward_pallas.1} parent=1 // pred_region
      _
    $region41: #{transformer_forward_pallas.1} parent=1 // pred_fallthru
      _
    // Predicated region
    $region42: #{transformer_forward_pallas.1} parent=1 // pred_check
      _
    $region43: #{transformer_forward_pallas.1} parent=1 // pred_check_branch
      %49 = sbr.rel (0) target = $region45
    $region44: #{transformer_forward_pallas.1} parent=1 // pred_region
      _
    $region45: #{transformer_forward_pallas.1} parent=1 // pred_fallthru
      _
    // Predicated region
    $region46: #{transformer_forward_pallas.1} parent=1 // pred_check
      _
    $region47: #{transformer_forward_pallas.1} parent=1 // pred_check_branch
      %51 = sbr.rel (0) target = $region49
    $region48: #{transformer_forward_pallas.1} parent=1 // pred_region
      _
    $region49: #{transformer_forward_pallas.1} parent=1 // pred_fallthru
      _
    // Predicated region
    $region50: #{transformer_forward_pallas.1} parent=1 // pred_check
      _
    $region51: #{transformer_forward_pallas.1} parent=1 // pred_check_branch
      %53 = sbr.rel (0) target = $region53
    $region52: #{transformer_forward_pallas.1} parent=1 // pred_region
      %54 = dma.done [#allocation3], 1024
    $region53: #{transformer_forward_pallas.1} parent=1 // pred_fallthru
      _
    %v55 = vld [vmem:[%s0] sm:$0xff]
    %v56 = vld [vmem:[%s0 + $0x8] sm:$0xff]
    %v57 = vld [vmem:[%s1] sm:$0x1]
    %v58 = vld [vmem:[%s2] sm:$0x1]
    %vm59 = vcmask 261120
    %v60 = vsel %vm59, %v55, 0.0
    %61 = vadd.xlane.f32.xlu0 %v60
    %v62 = vpop.xlane.xlu0 %61
    %v63 = vsel %vm59, %v56, 0.0
    %64 = vadd.xlane.f32.xlu0 %v63
    %v65 = vpop.xlane.xlu0 %64
    %v66 = vrcp.pop 32.0
    %v67 = vmul.f32 %v62, %v66
    %v68 = vmul.f32 %v65, %v66
    %v69 = vsub.f32 %v55, %v67
    %v70 = vsub.f32 %v56, %v68
    %v71 = vmul.f32 %v69, %v69
    %v72 = vmul.f32 %v70, %v70
    %v73 = vsel %vm59, %v71, 0.0
    %74 = vadd.xlane.f32.xlu0 %v73
    %v75 = vpop.xlane.xlu0 %74
    %v76 = vsel %vm59, %v72, 0.0
    %77 = vadd.xlane.f32.xlu0 %v76
    %v78 = vpop.xlane.xlu0 %77
    %v79 = vmul.f32 %v75, %v66
    %v80 = vmul.f32 %v78, %v66
    %v81 = vadd.f32 %v79, 1e-05
    %v82 = vadd.f32 %v80, 1e-05
    %v83 = vrsqrt.pop %v81
    %v84 = vrsqrt.pop %v82
    %v85 = vmul.f32 %v69, %v83
    %v86 = vmul.f32 %v70, %v84
    %v88 = vlaneseq
    %v89 = vshrl.u32 %v88, 7
    %v90 = vsub.s32 0, %v89
    %v91 = vrot.slane %v57, %v90
    %v93 = vmul.f32 %v85, %v91
    %v94 = vmul.f32 %v86, %v91
    %v96 = vlaneseq
    %v97 = vshrl.u32 %v96, 7
    %v98 = vsub.s32 0, %v97
    %v99 = vrot.slane %v58, %v98
    %v101 = vadd.f32 %v93, %v99
    %v102 = vadd.f32 %v94, %v99
    %v103 = vld [vmem:[%s3] sm:$0xff]
    %v104 = vld [vmem:[%s3 + $0x8] sm:$0xff]
    %v105 = vld [vmem:[%s3 + $0x10] sm:$0xff]
    %v106 = vld [vmem:[%s3 + $0x18] sm:$0xff]
    %v108 = vsel %vm59, %v101, 0
    %v111 = vsel %vm59, %v102, 0
    %113 = vmatprep.subr.mxu0 0.0
    %114 = vmatpush1.msra.mxu0 %v103
    %115 = vmatprep.subr.mxu0 0.0
    %116 = vmatpush1.msra.mxu0 %v104
    %117 = vmatprep.subr.mxu0 0.0
    %118 = vmatpush1.msra.mxu0 %v105
    %119 = vmatprep.subr.mxu0 0.0
    %120 = vmatpush1.msra.mxu0 %v106
    %121 = vmatprep.subr.mxu0 0.0
    %122 = vmatpush1.msra.mxu0 0.0
    %123 = vmatprep.subr.mxu0 0.0
    %124 = vmatpush1.msra.mxu0 0.0
    %125 = vmatprep.subr.mxu0 0.0
    %126 = vmatpush1.msra.mxu0 0.0
    %127 = vmatprep.subr.mxu0 0.0
    %128 = vmatpush1.msra.mxu0 0.0
    %129 = vmatprep.subr.mxu0 0.0
    %130 = vmatpush1.msra.mxu0 0.0
    %131 = vmatprep.subr.mxu0 0.0
    %132 = vmatpush1.msra.mxu0 0.0
    %133 = vmatprep.subr.mxu0 0.0
    %134 = vmatpush1.msra.mxu0 0.0
    %135 = vmatprep.subr.mxu0 0.0
    %136 = vmatpush1.msra.mxu0 0.0
    %137 = vmatprep.subr.mxu0 0.0
    %138 = vmatpush1.msra.mxu0 0.0
    %139 = vmatprep.subr.mxu0 0.0
    %140 = vmatpush1.msra.mxu0 0.0
    %141 = vmatprep.subr.mxu0 0.0
    %142 = vmatpush1.msra.mxu0 0.0
    %143 = vmatprep.subr.mxu0 0.0
    %144 = vmatpush1.msra.mxu0 0.0
    %145 = vmatprep.subr.mxu0 0.0
    %146 = vmatpush1.msra.mxu0 0.0
    %147 = vmatprep.subr.mxu0 0.0
    %148 = vmatpush1.msra.mxu0 0.0
    %149 = vmatprep.subr.mxu0 0.0
    %150 = vmatpush1.msra.mxu0 0.0
    %151 = vmatprep.subr.mxu0 0.0
    %152 = vmatpush1.msra.mxu0 0.0
    %153 = vmatprep.subr.mxu0 0.0
    %154 = vmatpush1.msra.mxu0 0.0
    %155 = vmatprep.subr.mxu0 0.0
    %156 = vmatpush1.msra.mxu0 0.0
    %157 = vmatprep.subr.mxu0 0.0
    %158 = vmatpush1.msra.mxu0 0.0
    %159 = vmatprep.subr.mxu0 0.0
    %160 = vmatpush1.msra.mxu0 0.0
    %161 = vmatprep.subr.mxu0 0.0
    %162 = vmatpush1.msra.mxu0 0.0
    %163 = vmatprep.subr.mxu0 0.0
    %164 = vmatpush1.msra.mxu0 0.0
    %165 = vmatprep.subr.mxu0 0.0
    %166 = vmatpush1.msra.mxu0 0.0
    %167 = vmatprep.subr.mxu0 0.0
    %168 = vmatpush1.msra.mxu0 0.0
    %169 = vmatprep.subr.mxu0 0.0
    %170 = vmatpush1.msra.mxu0 0.0
    %171 = vmatprep.subr.mxu0 0.0
    %172 = vmatpush1.msra.mxu0 0.0
    %173 = vmatprep.subr.mxu0 0.0
    %174 = vmatpush1.msra.mxu0 0.0
    %175 = vmatprep.subr.mxu0 0.0
    %176 = vmatpush1.msra.mxu0 0.0
    %177 = vmatprep.mubr.f32.mxu0 0.0
    %178 = vmatmul.mubr.f32.gmra.mrb[0].mxu0 %v108
    %v179 = vpop.f32.mrb[0].mxu0
    %v180 = vadd.f32 0.0, %v179
    %v181 = vpop.f32.mrb[0].mxu0
    %182 = vmatprep.mubr.f32.mxu0 0.0
    %183 = vmatmul.mubr.f32.gmra.mrb[0].mxu0 %v111
    %v184 = vpop.f32.mrb[0].mxu0
    %v185 = vadd.f32 0.0, %v184
    %v186 = vpop.f32.mrb[0].mxu0
    %187 = vdwg.mxu0
    %190 = vrot.lane.b32.xlu0 %v180, 120
    %v191 = vpop.permute.xlu0 %190
    %192 = vrot.lane.b32.xlu0 %v185, 120
    %v193 = vpop.permute.xlu0 %192
    %194 = vrot.lane.b32.xlu0 %v180, 112
    %v195 = vpop.permute.xlu0 %194
    %196 = vrot.lane.b32.xlu0 %v185, 112
    %v197 = vpop.permute.xlu0 %196
    %198 = vrot.lane.b32.xlu0 %v180, 104
    %v199 = vpop.permute.xlu0 %198
    %200 = vrot.lane.b32.xlu0 %v185, 104
    %v201 = vpop.permute.xlu0 %200
    %202 = vrot.lane.b32.xlu0 %v180, 96
    %v203 = vpop.permute.xlu0 %202
    %vm204 = vcmask 64512
    %v205 = vsel %vm204, %v180, 0
    %v207 = vsel %vm204, %v203, 0
    %209 = vmatprep.subr.mxu0 0.0
    %210 = vmatpush1.xpose.msra.mxu0 %v207
    %211 = vmatprep.subr.mxu0 0.0
    %212 = vmatpush1.xpose.msra.mxu0 0.0
    %213 = vmatprep.subr.mxu0 0.0
    %214 = vmatpush1.xpose.msra.mxu0 0.0
    %215 = vmatprep.subr.mxu0 0.0
    %216 = vmatpush1.xpose.msra.mxu0 0.0
    %217 = vmatprep.subr.mxu0 0.0
    %218 = vmatpush1.xpose.msra.mxu0 0.0
    %219 = vmatprep.subr.mxu0 0.0
    %220 = vmatpush1.xpose.msra.mxu0 0.0
    %221 = vmatprep.subr.mxu0 0.0
    %222 = vmatpush1.xpose.msra.mxu0 0.0
    %223 = vmatprep.subr.mxu0 0.0
    %224 = vmatpush1.xpose.msra.mxu0 0.0
    %225 = vmatprep.subr.mxu0 0.0
    %226 = vmatpush1.xpose.msra.mxu0 0.0
    %227 = vmatprep.subr.mxu0 0.0
    %228 = vmatpush1.xpose.msra.mxu0 0.0
    %229 = vmatprep.subr.mxu0 0.0
    %230 = vmatpush1.xpose.msra.mxu0 0.0
    %231 = vmatprep.subr.mxu0 0.0
    %232 = vmatpush1.xpose.msra.mxu0 0.0
    %233 = vmatprep.subr.mxu0 0.0
    %234 = vmatpush1.xpose.msra.mxu0 0.0
    %235 = vmatprep.subr.mxu0 0.0
    %236 = vmatpush1.xpose.msra.mxu0 0.0
    %237 = vmatprep.subr.mxu0 0.0
    %238 = vmatpush1.xpose.msra.mxu0 0.0
    %239 = vmatprep.subr.mxu0 0.0
    %240 = vmatpush1.xpose.msra.mxu0 0.0
    %241 = vmatprep.subr.mxu0 0.0
    %242 = vmatpush1.xpose.msra.mxu0 0.0
    %243 = vmatprep.subr.mxu0 0.0
    %244 = vmatpush1.xpose.msra.mxu0 0.0
    %245 = vmatprep.subr.mxu0 0.0
    %246 = vmatpush1.xpose.msra.mxu0 0.0
    %247 = vmatprep.subr.mxu0 0.0
    %248 = vmatpush1.xpose.msra.mxu0 0.0
    %249 = vmatprep.subr.mxu0 0.0
    %250 = vmatpush1.xpose.msra.mxu0 0.0
    %251 = vmatprep.subr.mxu0 0.0
    %252 = vmatpush1.xpose.msra.mxu0 0.0
    %253 = vmatprep.subr.mxu0 0.0
    %254 = vmatpush1.xpose.msra.mxu0 0.0
    %255 = vmatprep.subr.mxu0 0.0
    %256 = vmatpush1.xpose.msra.mxu0 0.0
    %257 = vmatprep.subr.mxu0 0.0
    %258 = vmatpush1.xpose.msra.mxu0 0.0
    %259 = vmatprep.subr.mxu0 0.0
    %260 = vmatpush1.xpose.msra.mxu0 0.0
    %261 = vmatprep.subr.mxu0 0.0
    %262 = vmatpush1.xpose.msra.mxu0 0.0
    %263 = vmatprep.subr.mxu0 0.0
    %264 = vmatpush1.xpose.msra.mxu0 0.0
    %265 = vmatprep.subr.mxu0 0.0
    %266 = vmatpush1.xpose.msra.mxu0 0.0
    %267 = vmatprep.subr.mxu0 0.0
    %268 = vmatpush1.xpose.msra.mxu0 0.0
    %269 = vmatprep.subr.mxu0 0.0
    %270 = vmatpush1.xpose.msra.mxu0 0.0
    %271 = vmatprep.subr.mxu0 0.0
    %272 = vmatpush1.xpose.msra.mxu0 0.0
    %273 = vmatprep.mubr.f32.mxu0 0.0
    %274 = vmatmul.mubr.f32.gmra.mrb[0].mxu0 %v205
    %v275 = vpop.f32.mrb[0].mxu0
    %v276 = vadd.f32 0.0, %v275
    %v277 = vpop.f32.mrb[0].mxu0
    %278 = vdwg.mxu0
    %279 = vrot.lane.b32.xlu0 %v185, 96
    %v280 = vpop.permute.xlu0 %279
    %v281 = vsel %vm204, %v185, 0
    %v283 = vsel %vm204, %v280, 0
    %285 = vmatprep.subr.mxu0 0.0
    %286 = vmatpush1.xpose.msra.mxu0 %v283
    %287 = vmatprep.subr.mxu0 0.0
    %288 = vmatpush1.xpose.msra.mxu0 0.0
    %289 = vmatprep.subr.mxu0 0.0
    %290 = vmatpush1.xpose.msra.mxu0 0.0
    %291 = vmatprep.subr.mxu0 0.0
    %292 = vmatpush1.xpose.msra.mxu0 0.0
    %293 = vmatprep.subr.mxu0 0.0
    %294 = vmatpush1.xpose.msra.mxu0 0.0
    %295 = vmatprep.subr.mxu0 0.0
    %296 = vmatpush1.xpose.msra.mxu0 0.0
    %297 = vmatprep.subr.mxu0 0.0
    %298 = vmatpush1.xpose.msra.mxu0 0.0
    %299 = vmatprep.subr.mxu0 0.0
    %300 = vmatpush1.xpose.msra.mxu0 0.0
    %301 = vmatprep.subr.mxu0 0.0
    %302 = vmatpush1.xpose.msra.mxu0 0.0
    %303 = vmatprep.subr.mxu0 0.0
    %304 = vmatpush1.xpose.msra.mxu0 0.0
    %305 = vmatprep.subr.mxu0 0.0
    %306 = vmatpush1.xpose.msra.mxu0 0.0
    %307 = vmatprep.subr.mxu0 0.0
    %308 = vmatpush1.xpose.msra.mxu0 0.0
    %309 = vmatprep.subr.mxu0 0.0
    %310 = vmatpush1.xpose.msra.mxu0 0.0
    %311 = vmatprep.subr.mxu0 0.0
    %312 = vmatpush1.xpose.msra.mxu0 0.0
    %313 = vmatprep.subr.mxu0 0.0
    %314 = vmatpush1.xpose.msra.mxu0 0.0
    %315 = vmatprep.subr.mxu0 0.0
    %316 = vmatpush1.xpose.msra.mxu0 0.0
    %317 = vmatprep.subr.mxu0 0.0
    %318 = vmatpush1.xpose.msra.mxu0 0.0
    %319 = vmatprep.subr.mxu0 0.0
    %320 = vmatpush1.xpose.msra.mxu0 0.0
    %321 = vmatprep.subr.mxu0 0.0
    %322 = vmatpush1.xpose.msra.mxu0 0.0
    %323 = vmatprep.subr.mxu0 0.0
    %324 = vmatpush1.xpose.msra.mxu0 0.0
    %325 = vmatprep.subr.mxu0 0.0
    %326 = vmatpush1.xpose.msra.mxu0 0.0
    %327 = vmatprep.subr.mxu0 0.0
    %328 = vmatpush1.xpose.msra.mxu0 0.0
    %329 = vmatprep.subr.mxu0 0.0
    %330 = vmatpush1.xpose.msra.mxu0 0.0
    %331 = vmatprep.subr.mxu0 0.0
    %332 = vmatpush1.xpose.msra.mxu0 0.0
    %333 = vmatprep.subr.mxu0 0.0
    %334 = vmatpush1.xpose.msra.mxu0 0.0
    %335 = vmatprep.subr.mxu0 0.0
    %336 = vmatpush1.xpose.msra.mxu0 0.0
    %337 = vmatprep.subr.mxu0 0.0
    %338 = vmatpush1.xpose.msra.mxu0 0.0
    %339 = vmatprep.subr.mxu0 0.0
    %340 = vmatpush1.xpose.msra.mxu0 0.0
    %341 = vmatprep.subr.mxu0 0.0
    %342 = vmatpush1.xpose.msra.mxu0 0.0
    %343 = vmatprep.subr.mxu0 0.0
    %344 = vmatpush1.xpose.msra.mxu0 0.0
    %345 = vmatprep.subr.mxu0 0.0
    %346 = vmatpush1.xpose.msra.mxu0 0.0
    %347 = vmatprep.subr.mxu0 0.0
    %348 = vmatpush1.xpose.msra.mxu0 0.0
    %349 = vmatprep.mubr.f32.mxu0 0.0
    %350 = vmatmul.mubr.f32.gmra.mrb[0].mxu0 %v281
    %v351 = vpop.f32.mrb[0].mxu0
    %v352 = vadd.f32 0.0, %v351
    %v353 = vpop.f32.mrb[0].mxu0
    %354 = vdwg.mxu0
    %355 = vrot.lane.b32.xlu0 %v191, 96
    %v356 = vpop.permute.xlu0 %355
    %v357 = vsel %vm204, %v191, 0
    %v359 = vsel %vm204, %v356, 0
    %361 = vmatprep.subr.mxu0 0.0
    %362 = vmatpush1.xpose.msra.mxu0 %v359
    %363 = vmatprep.subr.mxu0 0.0
    %364 = vmatpush1.xpose.msra.mxu0 0.0
    %365 = vmatprep.subr.mxu0 0.0
    %366 = vmatpush1.xpose.msra.mxu0 0.0
    %367 = vmatprep.subr.mxu0 0.0
    %368 = vmatpush1.xpose.msra.mxu0 0.0
    %369 = vmatprep.subr.mxu0 0.0
    %370 = vmatpush1.xpose.msra.mxu0 0.0
    %371 = vmatprep.subr.mxu0 0.0
    %372 = vmatpush1.xpose.msra.mxu0 0.0
    %373 = vmatprep.subr.mxu0 0.0
    %374 = vmatpush1.xpose.msra.mxu0 0.0
    %375 = vmatprep.subr.mxu0 0.0
    %376 = vmatpush1.xpose.msra.mxu0 0.0
    %377 = vmatprep.subr.mxu0 0.0
    %378 = vmatpush1.xpose.msra.mxu0 0.0
    %379 = vmatprep.subr.mxu0 0.0
    %380 = vmatpush1.xpose.msra.mxu0 0.0
    %381 = vmatprep.subr.mxu0 0.0
    %382 = vmatpush1.xpose.msra.mxu0 0.0
    %383 = vmatprep.subr.mxu0 0.0
    %384 = vmatpush1.xpose.msra.mxu0 0.0
    %385 = vmatprep.subr.mxu0 0.0
    %386 = vmatpush1.xpose.msra.mxu0 0.0
    %387 = vmatprep.subr.mxu0 0.0
    %388 = vmatpush1.xpose.msra.mxu0 0.0
    %389 = vmatprep.subr.mxu0 0.0
    %390 = vmatpush1.xpose.msra.mxu0 0.0
    %391 = vmatprep.subr.mxu0 0.0
    %392 = vmatpush1.xpose.msra.mxu0 0.0
    %393 = vmatprep.subr.mxu0 0.0
    %394 = vmatpush1.xpose.msra.mxu0 0.0
    %395 = vmatprep.subr.mxu0 0.0
    %396 = vmatpush1.xpose.msra.mxu0 0.0
    %397 = vmatprep.subr.mxu0 0.0
    %398 = vmatpush1.xpose.msra.mxu0 0.0
    %399 = vmatprep.subr.mxu0 0.0
    %400 = vmatpush1.xpose.msra.mxu0 0.0
    %401 = vmatprep.subr.mxu0 0.0
    %402 = vmatpush1.xpose.msra.mxu0 0.0
    %403 = vmatprep.subr.mxu0 0.0
    %404 = vmatpush1.xpose.msra.mxu0 0.0
    %405 = vmatprep.subr.mxu0 0.0
    %406 = vmatpush1.xpose.msra.mxu0 0.0
    %407 = vmatprep.subr.mxu0 0.0
    %408 = vmatpush1.xpose.msra.mxu0 0.0
    %409 = vmatprep.subr.mxu0 0.0
    %410 = vmatpush1.xpose.msra.mxu0 0.0
    %411 = vmatprep.subr.mxu0 0.0
    %412 = vmatpush1.xpose.msra.mxu0 0.0
    %413 = vmatprep.subr.mxu0 0.0
    %414 = vmatpush1.xpose.msra.mxu0 0.0
    %415 = vmatprep.subr.mxu0 0.0
    %416 = vmatpush1.xpose.msra.mxu0 0.0
    %417 = vmatprep.subr.mxu0 0.0
    %418 = vmatpush1.xpose.msra.mxu0 0.0
    %419 = vmatprep.subr.mxu0 0.0
    %420 = vmatpush1.xpose.msra.mxu0 0.0
    %421 = vmatprep.subr.mxu0 0.0
    %422 = vmatpush1.xpose.msra.mxu0 0.0
    %423 = vmatprep.subr.mxu0 0.0
    %424 = vmatpush1.xpose.msra.mxu0 0.0
    %425 = vmatprep.mubr.f32.mxu0 0.0
    %426 = vmatmul.mubr.f32.gmra.mrb[0].mxu0 %v357
    %v427 = vpop.f32.mrb[0].mxu0
    %v428 = vadd.f32 0.0, %v427
    %v429 = vpop.f32.mrb[0].mxu0
    %430 = vdwg.mxu0
    %431 = vrot.lane.b32.xlu0 %v193, 96
    %v432 = vpop.permute.xlu0 %431
    %v433 = vsel %vm204, %v193, 0
    %v435 = vsel %vm204, %v432, 0
    %437 = vmatprep.subr.mxu0 0.0
    %438 = vmatpush1.xpose.msra.mxu0 %v435
    %439 = vmatprep.subr.mxu0 0.0
    %440 = vmatpush1.xpose.msra.mxu0 0.0
    %441 = vmatprep.subr.mxu0 0.0
    %442 = vmatpush1.xpose.msra.mxu0 0.0
    %443 = vmatprep.subr.mxu0 0.0
    %444 = vmatpush1.xpose.msra.mxu0 0.0
    %445 = vmatprep.subr.mxu0 0.0
    %446 = vmatpush1.xpose.msra.mxu0 0.0
    %447 = vmatprep.subr.mxu0 0.0
    %448 = vmatpush1.xpose.msra.mxu0 0.0
    %449 = vmatprep.subr.mxu0 0.0
    %450 = vmatpush1.xpose.msra.mxu0 0.0
    %451 = vmatprep.subr.mxu0 0.0
    %452 = vmatpush1.xpose.msra.mxu0 0.0
    %453 = vmatprep.subr.mxu0 0.0
    %454 = vmatpush1.xpose.msra.mxu0 0.0
    %455 = vmatprep.subr.mxu0 0.0
    %456 = vmatpush1.xpose.msra.mxu0 0.0
    %457 = vmatprep.subr.mxu0 0.0
    %458 = vmatpush1.xpose.msra.mxu0 0.0
    %459 = vmatprep.subr.mxu0 0.0
    %460 = vmatpush1.xpose.msra.mxu0 0.0
    %461 = vmatprep.subr.mxu0 0.0
    %462 = vmatpush1.xpose.msra.mxu0 0.0
    %463 = vmatprep.subr.mxu0 0.0
    %464 = vmatpush1.xpose.msra.mxu0 0.0
    %465 = vmatprep.subr.mxu0 0.0
    %466 = vmatpush1.xpose.msra.mxu0 0.0
    %467 = vmatprep.subr.mxu0 0.0
    %468 = vmatpush1.xpose.msra.mxu0 0.0
    %469 = vmatprep.subr.mxu0 0.0
    %470 = vmatpush1.xpose.msra.mxu0 0.0
    %471 = vmatprep.subr.mxu0 0.0
    %472 = vmatpush1.xpose.msra.mxu0 0.0
    %473 = vmatprep.subr.mxu0 0.0
    %474 = vmatpush1.xpose.msra.mxu0 0.0
    %475 = vmatprep.subr.mxu0 0.0
    %476 = vmatpush1.xpose.msra.mxu0 0.0
    %477 = vmatprep.subr.mxu0 0.0
    %478 = vmatpush1.xpose.msra.mxu0 0.0
    %479 = vmatprep.subr.mxu0 0.0
    %480 = vmatpush1.xpose.msra.mxu0 0.0
    %481 = vmatprep.subr.mxu0 0.0
    %482 = vmatpush1.xpose.msra.mxu0 0.0
    %483 = vmatprep.subr.mxu0 0.0
    %484 = vmatpush1.xpose.msra.mxu0 0.0
    %485 = vmatprep.subr.mxu0 0.0
    %486 = vmatpush1.xpose.msra.mxu0 0.0
    %487 = vmatprep.subr.mxu0 0.0
    %488 = vmatpush1.xpose.msra.mxu0 0.0
    %489 = vmatprep.subr.mxu0 0.0
    %490 = vmatpush1.xpose.msra.mxu0 0.0
    %491 = vmatprep.subr.mxu0 0.0
    %492 = vmatpush1.xpose.msra.mxu0 0.0
    %493 = vmatprep.subr.mxu0 0.0
    %494 = vmatpush1.xpose.msra.mxu0 0.0
    %495 = vmatprep.subr.mxu0 0.0
    %496 = vmatpush1.xpose.msra.mxu0 0.0
    %497 = vmatprep.subr.mxu0 0.0
    %498 = vmatpush1.xpose.msra.mxu0 0.0
    %499 = vmatprep.subr.mxu0 0.0
    %500 = vmatpush1.xpose.msra.mxu0 0.0
    %501 = vmatprep.mubr.f32.mxu0 0.0
    %502 = vmatmul.mubr.f32.gmra.mrb[0].mxu0 %v433
    %v503 = vpop.f32.mrb[0].mxu0
    %v504 = vadd.f32 0.0, %v503
    %v505 = vpop.f32.mrb[0].mxu0
    %506 = vdwg.mxu0
    %507 = vrot.lane.b32.xlu0 %v195, 96
    %v508 = vpop.permute.xlu0 %507
    %v509 = vsel %vm204, %v195, 0
    %v511 = vsel %vm204, %v508, 0
    %513 = vmatprep.subr.mxu0 0.0
    %514 = vmatpush1.xpose.msra.mxu0 %v511
    %515 = vmatprep.subr.mxu0 0.0
    %516 = vmatpush1.xpose.msra.mxu0 0.0
    %517 = vmatprep.subr.mxu0 0.0
    %518 = vmatpush1.xpose.msra.mxu0 0.0
    %519 = vmatprep.subr.mxu0 0.0
    %520 = vmatpush1.xpose.msra.mxu0 0.0
    %521 = vmatprep.subr.mxu0 0.0
    %522 = vmatpush1.xpose.msra.mxu0 0.0
    %523 = vmatprep.subr.mxu0 0.0
    %524 = vmatpush1.xpose.msra.mxu0 0.0
    %525 = vmatprep.subr.mxu0 0.0
    %526 = vmatpush1.xpose.msra.mxu0 0.0
    %527 = vmatprep.subr.mxu0 0.0
    %528 = vmatpush1.xpose.msra.mxu0 0.0
    %529 = vmatprep.subr.mxu0 0.0
    %530 = vmatpush1.xpose.msra.mxu0 0.0
    %531 = vmatprep.subr.mxu0 0.0
    %532 = vmatpush1.xpose.msra.mxu0 0.0
    %533 = vmatprep.subr.mxu0 0.0
    %534 = vmatpush1.xpose.msra.mxu0 0.0
    %535 = vmatprep.subr.mxu0 0.0
    %536 = vmatpush1.xpose.msra.mxu0 0.0
    %537 = vmatprep.subr.mxu0 0.0
    %538 = vmatpush1.xpose.msra.mxu0 0.0
    %539 = vmatprep.subr.mxu0 0.0
    %540 = vmatpush1.xpose.msra.mxu0 0.0
    %541 = vmatprep.subr.mxu0 0.0
    %542 = vmatpush1.xpose.msra.mxu0 0.0
    %543 = vmatprep.subr.mxu0 0.0
    %544 = vmatpush1.xpose.msra.mxu0 0.0
    %545 = vmatprep.subr.mxu0 0.0
    %546 = vmatpush1.xpose.msra.mxu0 0.0
    %547 = vmatprep.subr.mxu0 0.0
    %548 = vmatpush1.xpose.msra.mxu0 0.0
    %549 = vmatprep.subr.mxu0 0.0
    %550 = vmatpush1.xpose.msra.mxu0 0.0
    %551 = vmatprep.subr.mxu0 0.0
    %552 = vmatpush1.xpose.msra.mxu0 0.0
    %553 = vmatprep.subr.mxu0 0.0
    %554 = vmatpush1.xpose.msra.mxu0 0.0
    %555 = vmatprep.subr.mxu0 0.0
    %556 = vmatpush1.xpose.msra.mxu0 0.0
    %557 = vmatprep.subr.mxu0 0.0
    %558 = vmatpush1.xpose.msra.mxu0 0.0
    %559 = vmatprep.subr.mxu0 0.0
    %560 = vmatpush1.xpose.msra.mxu0 0.0
    %561 = vmatprep.subr.mxu0 0.0
    %562 = vmatpush1.xpose.msra.mxu0 0.0
    %563 = vmatprep.subr.mxu0 0.0
    %564 = vmatpush1.xpose.msra.mxu0 0.0
    %565 = vmatprep.subr.mxu0 0.0
    %566 = vmatpush1.xpose.msra.mxu0 0.0
    %567 = vmatprep.subr.mxu0 0.0
    %568 = vmatpush1.xpose.msra.mxu0 0.0
    %569 = vmatprep.subr.mxu0 0.0
    %570 = vmatpush1.xpose.msra.mxu0 0.0
    %571 = vmatprep.subr.mxu0 0.0
    %572 = vmatpush1.xpose.msra.mxu0 0.0
    %573 = vmatprep.subr.mxu0 0.0
    %574 = vmatpush1.xpose.msra.mxu0 0.0
    %575 = vmatprep.subr.mxu0 0.0
    %576 = vmatpush1.xpose.msra.mxu0 0.0
    %577 = vmatprep.mubr.f32.mxu0 0.0
    %578 = vmatmul.mubr.f32.gmra.mrb[0].mxu0 %v509
    %v579 = vpop.f32.mrb[0].mxu0
    %v580 = vadd.f32 0.0, %v579
    %v581 = vpop.f32.mrb[0].mxu0
    %582 = vdwg.mxu0
    %583 = vrot.lane.b32.xlu0 %v197, 96
    %v584 = vpop.permute.xlu0 %583
    %v585 = vsel %vm204, %v197, 0
    %v587 = vsel %vm204, %v584, 0
    %589 = vmatprep.subr.mxu0 0.0
    %590 = vmatpush1.xpose.msra.mxu0 %v587
    %591 = vmatprep.subr.mxu0 0.0
    %592 = vmatpush1.xpose.msra.mxu0 0.0
    %593 = vmatprep.subr.mxu0 0.0
    %594 = vmatpush1.xpose.msra.mxu0 0.0
    %595 = vmatprep.subr.mxu0 0.0
    %596 = vmatpush1.xpose.msra.mxu0 0.0
    %597 = vmatprep.subr.mxu0 0.0
    %598 = vmatpush1.xpose.msra.mxu0 0.0
    %599 = vmatprep.subr.mxu0 0.0
    %600 = vmatpush1.xpose.msra.mxu0 0.0
    %601 = vmatprep.subr.mxu0 0.0
    %602 = vmatpush1.xpose.msra.mxu0 0.0
    %603 = vmatprep.subr.mxu0 0.0
    %604 = vmatpush1.xpose.msra.mxu0 0.0
    %605 = vmatprep.subr.mxu0 0.0
    %606 = vmatpush1.xpose.msra.mxu0 0.0
    %607 = vmatprep.subr.mxu0 0.0
    %608 = vmatpush1.xpose.msra.mxu0 0.0
    %609 = vmatprep.subr.mxu0 0.0
    %610 = vmatpush1.xpose.msra.mxu0 0.0
    %611 = vmatprep.subr.mxu0 0.0
    %612 = vmatpush1.xpose.msra.mxu0 0.0
    %613 = vmatprep.subr.mxu0 0.0
    %614 = vmatpush1.xpose.msra.mxu0 0.0
    %615 = vmatprep.subr.mxu0 0.0
    %616 = vmatpush1.xpose.msra.mxu0 0.0
    %617 = vmatprep.subr.mxu0 0.0
    %618 = vmatpush1.xpose.msra.mxu0 0.0
    %619 = vmatprep.subr.mxu0 0.0
    %620 = vmatpush1.xpose.msra.mxu0 0.0
    %621 = vmatprep.subr.mxu0 0.0
    %622 = vmatpush1.xpose.msra.mxu0 0.0
    %623 = vmatprep.subr.mxu0 0.0
    %624 = vmatpush1.xpose.msra.mxu0 0.0
    %625 = vmatprep.subr.mxu0 0.0
    %626 = vmatpush1.xpose.msra.mxu0 0.0
    %627 = vmatprep.subr.mxu0 0.0
    %628 = vmatpush1.xpose.msra.mxu0 0.0
    %629 = vmatprep.subr.mxu0 0.0
    %630 = vmatpush1.xpose.msra.mxu0 0.0
    %631 = vmatprep.subr.mxu0 0.0
    %632 = vmatpush1.xpose.msra.mxu0 0.0
    %633 = vmatprep.subr.mxu0 0.0
    %634 = vmatpush1.xpose.msra.mxu0 0.0
    %635 = vmatprep.subr.mxu0 0.0
    %636 = vmatpush1.xpose.msra.mxu0 0.0
    %637 = vmatprep.subr.mxu0 0.0
    %638 = vmatpush1.xpose.msra.mxu0 0.0
    %639 = vmatprep.subr.mxu0 0.0
    %640 = vmatpush1.xpose.msra.mxu0 0.0
    %641 = vmatprep.subr.mxu0 0.0
    %642 = vmatpush1.xpose.msra.mxu0 0.0
    %643 = vmatprep.subr.mxu0 0.0
    %644 = vmatpush1.xpose.msra.mxu0 0.0
    %645 = vmatprep.subr.mxu0 0.0
    %646 = vmatpush1.xpose.msra.mxu0 0.0
    %647 = vmatprep.subr.mxu0 0.0
    %648 = vmatpush1.xpose.msra.mxu0 0.0
    %649 = vmatprep.subr.mxu0 0.0
    %650 = vmatpush1.xpose.msra.mxu0 0.0
    %651 = vmatprep.subr.mxu0 0.0
    %652 = vmatpush1.xpose.msra.mxu0 0.0
    %653 = vmatprep.mubr.f32.mxu0 0.0
    %654 = vmatmul.mubr.f32.gmra.mrb[0].mxu0 %v585
    %v655 = vpop.f32.mrb[0].mxu0
    %v656 = vadd.f32 0.0, %v655
    %v657 = vpop.f32.mrb[0].mxu0
    %658 = vdwg.mxu0
    %659 = vrot.lane.b32.xlu0 %v199, 96
    %v660 = vpop.permute.xlu0 %659
    %v661 = vsel %vm204, %v199, 0
    %v663 = vsel %vm204, %v660, 0
    %665 = vmatprep.subr.mxu0 0.0
    %666 = vmatpush1.xpose.msra.mxu0 %v663
    %667 = vmatprep.subr.mxu0 0.0
    %668 = vmatpush1.xpose.msra.mxu0 0.0
    %669 = vmatprep.subr.mxu0 0.0
    %670 = vmatpush1.xpose.msra.mxu0 0.0
    %671 = vmatprep.subr.mxu0 0.0
    %672 = vmatpush1.xpose.msra.mxu0 0.0
    %673 = vmatprep.subr.mxu0 0.0
    %674 = vmatpush1.xpose.msra.mxu0 0.0
    %675 = vmatprep.subr.mxu0 0.0
    %676 = vmatpush1.xpose.msra.mxu0 0.0
    %677 = vmatprep.subr.mxu0 0.0
    %678 = vmatpush1.xpose.msra.mxu0 0.0
    %679 = vmatprep.subr.mxu0 0.0
    %680 = vmatpush1.xpose.msra.mxu0 0.0
    %681 = vmatprep.subr.mxu0 0.0
    %682 = vmatpush1.xpose.msra.mxu0 0.0
    %683 = vmatprep.subr.mxu0 0.0
    %684 = vmatpush1.xpose.msra.mxu0 0.0
    %685 = vmatprep.subr.mxu0 0.0
    %686 = vmatpush1.xpose.msra.mxu0 0.0
    %687 = vmatprep.subr.mxu0 0.0
    %688 = vmatpush1.xpose.msra.mxu0 0.0
    %689 = vmatprep.subr.mxu0 0.0
    %690 = vmatpush1.xpose.msra.mxu0 0.0
    %691 = vmatprep.subr.mxu0 0.0
    %692 = vmatpush1.xpose.msra.mxu0 0.0
    %693 = vmatprep.subr.mxu0 0.0
    %694 = vmatpush1.xpose.msra.mxu0 0.0
    %695 = vmatprep.subr.mxu0 0.0
    %696 = vmatpush1.xpose.msra.mxu0 0.0
    %697 = vmatprep.subr.mxu0 0.0
    %698 = vmatpush1.xpose.msra.mxu0 0.0
    %699 = vmatprep.subr.mxu0 0.0
    %700 = vmatpush1.xpose.msra.mxu0 0.0
    %701 = vmatprep.subr.mxu0 0.0
    %702 = vmatpush1.xpose.msra.mxu0 0.0
    %703 = vmatprep.subr.mxu0 0.0
    %704 = vmatpush1.xpose.msra.mxu0 0.0
    %705 = vmatprep.subr.mxu0 0.0
    %706 = vmatpush1.xpose.msra.mxu0 0.0
    %707 = vmatprep.subr.mxu0 0.0
    %708 = vmatpush1.xpose.msra.mxu0 0.0
    %709 = vmatprep.subr.mxu0 0.0
    %710 = vmatpush1.xpose.msra.mxu0 0.0
    %711 = vmatprep.subr.mxu0 0.0
    %712 = vmatpush1.xpose.msra.mxu0 0.0
    %713 = vmatprep.subr.mxu0 0.0
    %714 = vmatpush1.xpose.msra.mxu0 0.0
    %715 = vmatprep.subr.mxu0 0.0
    %716 = vmatpush1.xpose.msra.mxu0 0.0
    %717 = vmatprep.subr.mxu0 0.0
    %718 = vmatpush1.xpose.msra.mxu0 0.0
    %719 = vmatprep.subr.mxu0 0.0
    %720 = vmatpush1.xpose.msra.mxu0 0.0
    %721 = vmatprep.subr.mxu0 0.0
    %722 = vmatpush1.xpose.msra.mxu0 0.0
    %723 = vmatprep.subr.mxu0 0.0
    %724 = vmatpush1.xpose.msra.mxu0 0.0
    %725 = vmatprep.subr.mxu0 0.0
    %726 = vmatpush1.xpose.msra.mxu0 0.0
    %727 = vmatprep.subr.mxu0 0.0
    %728 = vmatpush1.xpose.msra.mxu0 0.0
    %729 = vmatprep.mubr.f32.mxu0 0.0
    %730 = vmatmul.mubr.f32.gmra.mrb[0].mxu0 %v661
    %v731 = vpop.f32.mrb[0].mxu0
    %v732 = vadd.f32 0.0, %v731
    %v733 = vpop.f32.mrb[0].mxu0
    %734 = vdwg.mxu0
    %735 = vrot.lane.b32.xlu0 %v201, 96
    %v736 = vpop.permute.xlu0 %735
    %v737 = vsel %vm204, %v201, 0
    %v739 = vsel %vm204, %v736, 0
    %741 = vmatprep.subr.mxu0 0.0
    %742 = vmatpush1.xpose.msra.mxu0 %v739
    %743 = vmatprep.subr.mxu0 0.0
    %744 = vmatpush1.xpose.msra.mxu0 0.0
    %745 = vmatprep.subr.mxu0 0.0
    %746 = vmatpush1.xpose.msra.mxu0 0.0
    %747 = vmatprep.subr.mxu0 0.0
    %748 = vmatpush1.xpose.msra.mxu0 0.0
    %749 = vmatprep.subr.mxu0 0.0
    %750 = vmatpush1.xpose.msra.mxu0 0.0
    %751 = vmatprep.subr.mxu0 0.0
    %752 = vmatpush1.xpose.msra.mxu0 0.0
    %753 = vmatprep.subr.mxu0 0.0
    %754 = vmatpush1.xpose.msra.mxu0 0.0
    %755 = vmatprep.subr.mxu0 0.0
    %756 = vmatpush1.xpose.msra.mxu0 0.0
    %757 = vmatprep.subr.mxu0 0.0
    %758 = vmatpush1.xpose.msra.mxu0 0.0
    %759 = vmatprep.subr.mxu0 0.0
    %760 = vmatpush1.xpose.msra.mxu0 0.0
    %761 = vmatprep.subr.mxu0 0.0
    %762 = vmatpush1.xpose.msra.mxu0 0.0
    %763 = vmatprep.subr.mxu0 0.0
    %764 = vmatpush1.xpose.msra.mxu0 0.0
    %765 = vmatprep.subr.mxu0 0.0
    %766 = vmatpush1.xpose.msra.mxu0 0.0
    %767 = vmatprep.subr.mxu0 0.0
    %768 = vmatpush1.xpose.msra.mxu0 0.0
    %769 = vmatprep.subr.mxu0 0.0
    %770 = vmatpush1.xpose.msra.mxu0 0.0
    %771 = vmatprep.subr.mxu0 0.0
    %772 = vmatpush1.xpose.msra.mxu0 0.0
    %773 = vmatprep.subr.mxu0 0.0
    %774 = vmatpush1.xpose.msra.mxu0 0.0
    %775 = vmatprep.subr.mxu0 0.0
    %776 = vmatpush1.xpose.msra.mxu0 0.0
    %777 = vmatprep.subr.mxu0 0.0
    %778 = vmatpush1.xpose.msra.mxu0 0.0
    %779 = vmatprep.subr.mxu0 0.0
    %780 = vmatpush1.xpose.msra.mxu0 0.0
    %781 = vmatprep.subr.mxu0 0.0
    %782 = vmatpush1.xpose.msra.mxu0 0.0
    %783 = vmatprep.subr.mxu0 0.0
    %784 = vmatpush1.xpose.msra.mxu0 0.0
    %785 = vmatprep.subr.mxu0 0.0
    %786 = vmatpush1.xpose.msra.mxu0 0.0
    %787 = vmatprep.subr.mxu0 0.0
    %788 = vmatpush1.xpose.msra.mxu0 0.0
    %789 = vmatprep.subr.mxu0 0.0
    %790 = vmatpush1.xpose.msra.mxu0 0.0
    %791 = vmatprep.subr.mxu0 0.0
    %792 = vmatpush1.xpose.msra.mxu0 0.0
    %793 = vmatprep.subr.mxu0 0.0
    %794 = vmatpush1.xpose.msra.mxu0 0.0
    %795 = vmatprep.subr.mxu0 0.0
    %796 = vmatpush1.xpose.msra.mxu0 0.0
    %797 = vmatprep.subr.mxu0 0.0
    %798 = vmatpush1.xpose.msra.mxu0 0.0
    %799 = vmatprep.subr.mxu0 0.0
    %800 = vmatpush1.xpose.msra.mxu0 0.0
    %801 = vmatprep.subr.mxu0 0.0
    %802 = vmatpush1.xpose.msra.mxu0 0.0
    %803 = vmatprep.subr.mxu0 0.0
    %804 = vmatpush1.xpose.msra.mxu0 0.0
    %805 = vmatprep.mubr.f32.mxu0 0.0
    %806 = vmatmul.mubr.f32.gmra.mrb[0].mxu0 %v737
    %v807 = vpop.f32.mrb[0].mxu0
    %v808 = vadd.f32 0.0, %v807
    %v809 = vpop.f32.mrb[0].mxu0
    %810 = vdwg.mxu0
    %v811 = vsel %vm204, %v276, -inf
    %812 = vmax.xlane.f32.xlu0 %v811
    %v813 = vpop.xlane.xlu0 %812
    %v814 = vsel %vm204, %v352, -inf
    %815 = vmax.xlane.f32.xlu0 %v814
    %v816 = vpop.xlane.xlu0 %815
    %v817 = vsel %vm204, %v428, -inf
    %818 = vmax.xlane.f32.xlu0 %v817
    %v819 = vpop.xlane.xlu0 %818
    %v820 = vsel %vm204, %v504, -inf
    %821 = vmax.xlane.f32.xlu0 %v820
    %v822 = vpop.xlane.xlu0 %821
    %v823 = vsel %vm204, %v580, -inf
    %824 = vmax.xlane.f32.xlu0 %v823
    %v825 = vpop.xlane.xlu0 %824
    %v826 = vsel %vm204, %v656, -inf
    %827 = vmax.xlane.f32.xlu0 %v826
    %v828 = vpop.xlane.xlu0 %827
    %v829 = vsel %vm204, %v732, -inf
    %830 = vmax.xlane.f32.xlu0 %v829
    %v831 = vpop.xlane.xlu0 %830
    %v832 = vsel %vm204, %v808, -inf
    %833 = vmax.xlane.f32.xlu0 %v832
    %v834 = vpop.xlane.xlu0 %833
    %v835 = vsub.f32 %v276, %v813
    %v836 = vsub.f32 %v352, %v816
    %v837 = vsub.f32 %v428, %v819
    %v838 = vsub.f32 %v504, %v822
    %v839 = vsub.f32 %v580, %v825
    %v840 = vsub.f32 %v656, %v828
    %v841 = vsub.f32 %v732, %v831
    %v842 = vsub.f32 %v808, %v834
    %v843 = vmul.f32 %v835, 1.442695
    %v844 = vpow.pop %v843
    %v845 = vmul.f32 %v836, 1.442695
    %v846 = vpow.pop %v845
    %v847 = vmul.f32 %v837, 1.442695
    %v848 = vpow.pop %v847
    %v849 = vmul.f32 %v838, 1.442695
    %v850 = vpow.pop %v849
    %v851 = vmul.f32 %v839, 1.442695
    %v852 = vpow.pop %v851
    %v853 = vmul.f32 %v840, 1.442695
    %v854 = vpow.pop %v853
    %v855 = vmul.f32 %v841, 1.442695
    %v856 = vpow.pop %v855
    %v857 = vmul.f32 %v842, 1.442695
    %v858 = vpow.pop %v857
    %v859 = vsel %vm204, %v844, 0.0
    %860 = vadd.xlane.f32.xlu0 %v859
    %v861 = vpop.xlane.xlu0 %860
    %v862 = vsel %vm204, %v846, 0.0
    %863 = vadd.xlane.f32.xlu0 %v862
    %v864 = vpop.xlane.xlu0 %863
    %v865 = vsel %vm204, %v848, 0.0
    %866 = vadd.xlane.f32.xlu0 %v865
    %v867 = vpop.xlane.xlu0 %866
    %v868 = vsel %vm204, %v850, 0.0
    %869 = vadd.xlane.f32.xlu0 %v868
    %v870 = vpop.xlane.xlu0 %869
    %v871 = vsel %vm204, %v852, 0.0
    %872 = vadd.xlane.f32.xlu0 %v871
    %v873 = vpop.xlane.xlu0 %872
    %v874 = vsel %vm204, %v854, 0.0
    %875 = vadd.xlane.f32.xlu0 %v874
    %v876 = vpop.xlane.xlu0 %875
    %v877 = vsel %vm204, %v856, 0.0
    %878 = vadd.xlane.f32.xlu0 %v877
    %v879 = vpop.xlane.xlu0 %878
    %v880 = vsel %vm204, %v858, 0.0
    %881 = vadd.xlane.f32.xlu0 %v880
    %v882 = vpop.xlane.xlu0 %881
    %v883 = vrcp.pop %v861
    %v884 = vrcp.pop %v864
    %v885 = vrcp.pop %v867
    %v886 = vrcp.pop %v870
    %v887 = vrcp.pop %v873
    %v888 = vrcp.pop %v876
    %v889 = vrcp.pop %v879
    %v890 = vrcp.pop %v882
    %v891 = vmul.f32 %v844, %v883
    %v892 = vmul.f32 %v846, %v884
    %v893 = vmul.f32 %v848, %v885
    %v894 = vmul.f32 %v850, %v886
    %v895 = vmul.f32 %v852, %v887
    %v896 = vmul.f32 %v854, %v888
    %v897 = vmul.f32 %v856, %v889
    %v898 = vmul.f32 %v858, %v890
    %899 = vrot.lane.b32.xlu0 %v180, 64
    %v900 = vpop.permute.xlu0 %899
    %v903 = vsel %vm204, %v891, 0
    %905 = vmatprep.subr.mxu0 0.0
    %906 = vmatpush1.msra.mxu0 %v900
    %907 = vmatprep.subr.mxu0 0.0
    %908 = vmatpush1.msra.mxu0 0.0
    %909 = vmatprep.subr.mxu0 0.0
    %910 = vmatpush1.msra.mxu0 0.0
    %911 = vmatprep.subr.mxu0 0.0
    %912 = vmatpush1.msra.mxu0 0.0
    %913 = vmatprep.subr.mxu0 0.0
    %914 = vmatpush1.msra.mxu0 0.0
    %915 = vmatprep.subr.mxu0 0.0
    %916 = vmatpush1.msra.mxu0 0.0
    %917 = vmatprep.subr.mxu0 0.0
    %918 = vmatpush1.msra.mxu0 0.0
    %919 = vmatprep.subr.mxu0 0.0
    %920 = vmatpush1.msra.mxu0 0.0
    %921 = vmatprep.subr.mxu0 0.0
    %922 = vmatpush1.msra.mxu0 0.0
    %923 = vmatprep.subr.mxu0 0.0
    %924 = vmatpush1.msra.mxu0 0.0
    %925 = vmatprep.subr.mxu0 0.0
    %926 = vmatpush1.msra.mxu0 0.0
    %927 = vmatprep.subr.mxu0 0.0
    %928 = vmatpush1.msra.mxu0 0.0
    %929 = vmatprep.subr.mxu0 0.0
    %930 = vmatpush1.msra.mxu0 0.0
    %931 = vmatprep.subr.mxu0 0.0
    %932 = vmatpush1.msra.mxu0 0.0
    %933 = vmatprep.subr.mxu0 0.0
    %934 = vmatpush1.msra.mxu0 0.0
    %935 = vmatprep.subr.mxu0 0.0
    %936 = vmatpush1.msra.mxu0 0.0
    %937 = vmatprep.subr.mxu0 0.0
    %938 = vmatpush1.msra.mxu0 0.0
    %939 = vmatprep.subr.mxu0 0.0
    %940 = vmatpush1.msra.mxu0 0.0
    %941 = vmatprep.subr.mxu0 0.0
    %942 = vmatpush1.msra.mxu0 0.0
    %943 = vmatprep.subr.mxu0 0.0
    %944 = vmatpush1.msra.mxu0 0.0
    %945 = vmatprep.subr.mxu0 0.0
    %946 = vmatpush1.msra.mxu0 0.0
    %947 = vmatprep.subr.mxu0 0.0
    %948 = vmatpush1.msra.mxu0 0.0
    %949 = vmatprep.subr.mxu0 0.0
    %950 = vmatpush1.msra.mxu0 0.0
    %951 = vmatprep.subr.mxu0 0.0
    %952 = vmatpush1.msra.mxu0 0.0
    %953 = vmatprep.subr.mxu0 0.0
    %954 = vmatpush1.msra.mxu0 0.0
    %955 = vmatprep.subr.mxu0 0.0
    %956 = vmatpush1.msra.mxu0 0.0
    %957 = vmatprep.subr.mxu0 0.0
    %958 = vmatpush1.msra.mxu0 0.0
    %959 = vmatprep.subr.mxu0 0.0
    %960 = vmatpush1.msra.mxu0 0.0
    %961 = vmatprep.subr.mxu0 0.0
    %962 = vmatpush1.msra.mxu0 0.0
    %963 = vmatprep.subr.mxu0 0.0
    %964 = vmatpush1.msra.mxu0 0.0
    %965 = vmatprep.subr.mxu0 0.0
    %966 = vmatpush1.msra.mxu0 0.0
    %967 = vmatprep.subr.mxu0 0.0
    %968 = vmatpush1.msra.mxu0 0.0
    %969 = vmatprep.mubr.f32.mxu0 0.0
    %970 = vmatmul.mubr.f32.gmra.mrb[0].mxu0 %v903
    %v971 = vpop.f32.mrb[0].mxu0
    %v972 = vadd.f32 0.0, %v971
    %v973 = vpop.f32.mrb[0].mxu0
    %974 = vdwg.mxu0
    %975 = vrot.lane.b32.xlu0 %v185, 64
    %v976 = vpop.permute.xlu0 %975
    %v979 = vsel %vm204, %v892, 0
    %981 = vmatprep.subr.mxu0 0.0
    %982 = vmatpush1.msra.mxu0 %v976
    %983 = vmatprep.subr.mxu0 0.0
    %984 = vmatpush1.msra.mxu0 0.0
    %985 = vmatprep.subr.mxu0 0.0
    %986 = vmatpush1.msra.mxu0 0.0
    %987 = vmatprep.subr.mxu0 0.0
    %988 = vmatpush1.msra.mxu0 0.0
    %989 = vmatprep.subr.mxu0 0.0
    %990 = vmatpush1.msra.mxu0 0.0
    %991 = vmatprep.subr.mxu0 0.0
    %992 = vmatpush1.msra.mxu0 0.0
    %993 = vmatprep.subr.mxu0 0.0
    %994 = vmatpush1.msra.mxu0 0.0
    %995 = vmatprep.subr.mxu0 0.0
    %996 = vmatpush1.msra.mxu0 0.0
    %997 = vmatprep.subr.mxu0 0.0
    %998 = vmatpush1.msra.mxu0 0.0
    %999 = vmatprep.subr.mxu0 0.0
    %1000 = vmatpush1.msra.mxu0 0.0
    %1001 = vmatprep.subr.mxu0 0.0
    %1002 = vmatpush1.msra.mxu0 0.0
    %1003 = vmatprep.subr.mxu0 0.0
    %1004 = vmatpush1.msra.mxu0 0.0
    %1005 = vmatprep.subr.mxu0 0.0
    %1006 = vmatpush1.msra.mxu0 0.0
    %1007 = vmatprep.subr.mxu0 0.0
    %1008 = vmatpush1.msra.mxu0 0.0
    %1009 = vmatprep.subr.mxu0 0.0
    %1010 = vmatpush1.msra.mxu0 0.0
    %1011 = vmatprep.subr.mxu0 0.0
    %1012 = vmatpush1.msra.mxu0 0.0
    %1013 = vmatprep.subr.mxu0 0.0
    %1014 = vmatpush1.msra.mxu0 0.0
    %1015 = vmatprep.subr.mxu0 0.0
    %1016 = vmatpush1.msra.mxu0 0.0
    %1017 = vmatprep.subr.mxu0 0.0
    %1018 = vmatpush1.msra.mxu0 0.0
    %1019 = vmatprep.subr.mxu0 0.0
    %1020 = vmatpush1.msra.mxu0 0.0
    %1021 = vmatprep.subr.mxu0 0.0
    %1022 = vmatpush1.msra.mxu0 0.0
    %1023 = vmatprep.subr.mxu0 0.0
    %1024 = vmatpush1.msra.mxu0 0.0
    %1025 = vmatprep.subr.mxu0 0.0
    %1026 = vmatpush1.msra.mxu0 0.0
    %1027 = vmatprep.subr.mxu0 0.0
    %1028 = vmatpush1.msra.mxu0 0.0
    %1029 = vmatprep.subr.mxu0 0.0
    %1030 = vmatpush1.msra.mxu0 0.0
    %1031 = vmatprep.subr.mxu0 0.0
    %1032 = vmatpush1.msra.mxu0 0.0
    %1033 = vmatprep.subr.mxu0 0.0
    %1034 = vmatpush1.msra.mxu0 0.0
    %1035 = vmatprep.subr.mxu0 0.0
    %1036 = vmatpush1.msra.mxu0 0.0
    %1037 = vmatprep.subr.mxu0 0.0
    %1038 = vmatpush1.msra.mxu0 0.0
    %1039 = vmatprep.subr.mxu0 0.0
    %1040 = vmatpush1.msra.mxu0 0.0
    %1041 = vmatprep.subr.mxu0 0.0
    %1042 = vmatpush1.msra.mxu0 0.0
    %1043 = vmatprep.subr.mxu0 0.0
    %1044 = vmatpush1.msra.mxu0 0.0
    %1045 = vmatprep.mubr.f32.mxu0 0.0
    %1046 = vmatmul.mubr.f32.gmra.mrb[0].mxu0 %v979
    %v1047 = vpop.f32.mrb[0].mxu0
    %v1048 = vadd.f32 0.0, %v1047
    %v1049 = vpop.f32.mrb[0].mxu0
    %1050 = vdwg.mxu0
    %1051 = vrot.lane.b32.xlu0 %v191, 64
    %v1052 = vpop.permute.xlu0 %1051
    %v1055 = vsel %vm204, %v893, 0
    %1057 = vmatprep.subr.mxu0 0.0
    %1058 = vmatpush1.msra.mxu0 %v1052
    %1059 = vmatprep.subr.mxu0 0.0
    %1060 = vmatpush1.msra.mxu0 0.0
    %1061 = vmatprep.subr.mxu0 0.0
    %1062 = vmatpush1.msra.mxu0 0.0
    %1063 = vmatprep.subr.mxu0 0.0
    %1064 = vmatpush1.msra.mxu0 0.0
    %1065 = vmatprep.subr.mxu0 0.0
    %1066 = vmatpush1.msra.mxu0 0.0
    %1067 = vmatprep.subr.mxu0 0.0
    %1068 = vmatpush1.msra.mxu0 0.0
    %1069 = vmatprep.subr.mxu0 0.0
    %1070 = vmatpush1.msra.mxu0 0.0
    %1071 = vmatprep.subr.mxu0 0.0
    %1072 = vmatpush1.msra.mxu0 0.0
    %1073 = vmatprep.subr.mxu0 0.0
    %1074 = vmatpush1.msra.mxu0 0.0
    %1075 = vmatprep.subr.mxu0 0.0
    %1076 = vmatpush1.msra.mxu0 0.0
    %1077 = vmatprep.subr.mxu0 0.0
    %1078 = vmatpush1.msra.mxu0 0.0
    %1079 = vmatprep.subr.mxu0 0.0
    %1080 = vmatpush1.msra.mxu0 0.0
    %1081 = vmatprep.subr.mxu0 0.0
    %1082 = vmatpush1.msra.mxu0 0.0
    %1083 = vmatprep.subr.mxu0 0.0
    %1084 = vmatpush1.msra.mxu0 0.0
    %1085 = vmatprep.subr.mxu0 0.0
    %1086 = vmatpush1.msra.mxu0 0.0
    %1087 = vmatprep.subr.mxu0 0.0
    %1088 = vmatpush1.msra.mxu0 0.0
    %1089 = vmatprep.subr.mxu0 0.0
    %1090 = vmatpush1.msra.mxu0 0.0
    %1091 = vmatprep.subr.mxu0 0.0
    %1092 = vmatpush1.msra.mxu0 0.0
    %1093 = vmatprep.subr.mxu0 0.0
    %1094 = vmatpush1.msra.mxu0 0.0
    %1095 = vmatprep.subr.mxu0 0.0
    %1096 = vmatpush1.msra.mxu0 0.0
    %1097 = vmatprep.subr.mxu0 0.0
    %1098 = vmatpush1.msra.mxu0 0.0
    %1099 = vmatprep.subr.mxu0 0.0
    %1100 = vmatpush1.msra.mxu0 0.0
    %1101 = vmatprep.subr.mxu0 0.0
    %1102 = vmatpush1.msra.mxu0 0.0
    %1103 = vmatprep.subr.mxu0 0.0
    %1104 = vmatpush1.msra.mxu0 0.0
    %1105 = vmatprep.subr.mxu0 0.0
    %1106 = vmatpush1.msra.mxu0 0.0
    %1107 = vmatprep.subr.mxu0 0.0
    %1108 = vmatpush1.msra.mxu0 0.0
    %1109 = vmatprep.subr.mxu0 0.0
    %1110 = vmatpush1.msra.mxu0 0.0
    %1111 = vmatprep.subr.mxu0 0.0
    %1112 = vmatpush1.msra.mxu0 0.0
    %1113 = vmatprep.subr.mxu0 0.0
    %1114 = vmatpush1.msra.mxu0 0.0
    %1115 = vmatprep.subr.mxu0 0.0
    %1116 = vmatpush1.msra.mxu0 0.0
    %1117 = vmatprep.subr.mxu0 0.0
    %1118 = vmatpush1.msra.mxu0 0.0
    %1119 = vmatprep.subr.mxu0 0.0
    %1120 = vmatpush1.msra.mxu0 0.0
    %1121 = vmatprep.mubr.f32.mxu0 0.0
    %1122 = vmatmul.mubr.f32.gmra.mrb[0].mxu0 %v1055
    %v1123 = vpop.f32.mrb[0].mxu0
    %v1124 = vadd.f32 0.0, %v1123
    %v1125 = vpop.f32.mrb[0].mxu0
    %1126 = vdwg.mxu0
    %1127 = vrot.lane.b32.xlu0 %v193, 64
    %v1128 = vpop.permute.xlu0 %1127
    %v1131 = vsel %vm204, %v894, 0
    %1133 = vmatprep.subr.mxu0 0.0
    %1134 = vmatpush1.msra.mxu0 %v1128
    %1135 = vmatprep.subr.mxu0 0.0
    %1136 = vmatpush1.msra.mxu0 0.0
    %1137 = vmatprep.subr.mxu0 0.0
    %1138 = vmatpush1.msra.mxu0 0.0
    %1139 = vmatprep.subr.mxu0 0.0
    %1140 = vmatpush1.msra.mxu0 0.0
    %1141 = vmatprep.subr.mxu0 0.0
    %1142 = vmatpush1.msra.mxu0 0.0
    %1143 = vmatprep.subr.mxu0 0.0
    %1144 = vmatpush1.msra.mxu0 0.0
    %1145 = vmatprep.subr.mxu0 0.0
    %1146 = vmatpush1.msra.mxu0 0.0
    %1147 = vmatprep.subr.mxu0 0.0
    %1148 = vmatpush1.msra.mxu0 0.0
    %1149 = vmatprep.subr.mxu0 0.0
    %1150 = vmatpush1.msra.mxu0 0.0
    %1151 = vmatprep.subr.mxu0 0.0
    %1152 = vmatpush1.msra.mxu0 0.0
    %1153 = vmatprep.subr.mxu0 0.0
    %1154 = vmatpush1.msra.mxu0 0.0
    %1155 = vmatprep.subr.mxu0 0.0
    %1156 = vmatpush1.msra.mxu0 0.0
    %1157 = vmatprep.subr.mxu0 0.0
    %1158 = vmatpush1.msra.mxu0 0.0
    %1159 = vmatprep.subr.mxu0 0.0
    %1160 = vmatpush1.msra.mxu0 0.0
    %1161 = vmatprep.subr.mxu0 0.0
    %1162 = vmatpush1.msra.mxu0 0.0
    %1163 = vmatprep.subr.mxu0 0.0
    %1164 = vmatpush1.msra.mxu0 0.0
    %1165 = vmatprep.subr.mxu0 0.0
    %1166 = vmatpush1.msra.mxu0 0.0
    %1167 = vmatprep.subr.mxu0 0.0
    %1168 = vmatpush1.msra.mxu0 0.0
    %1169 = vmatprep.subr.mxu0 0.0
    %1170 = vmatpush1.msra.mxu0 0.0
    %1171 = vmatprep.subr.mxu0 0.0
    %1172 = vmatpush1.msra.mxu0 0.0
    %1173 = vmatprep.subr.mxu0 0.0
    %1174 = vmatpush1.msra.mxu0 0.0
    %1175 = vmatprep.subr.mxu0 0.0
    %1176 = vmatpush1.msra.mxu0 0.0
    %1177 = vmatprep.subr.mxu0 0.0
    %1178 = vmatpush1.msra.mxu0 0.0
    %1179 = vmatprep.subr.mxu0 0.0
    %1180 = vmatpush1.msra.mxu0 0.0
    %1181 = vmatprep.subr.mxu0 0.0
    %1182 = vmatpush1.msra.mxu0 0.0
    %1183 = vmatprep.subr.mxu0 0.0
    %1184 = vmatpush1.msra.mxu0 0.0
    %1185 = vmatprep.subr.mxu0 0.0
    %1186 = vmatpush1.msra.mxu0 0.0
    %1187 = vmatprep.subr.mxu0 0.0
    %1188 = vmatpush1.msra.mxu0 0.0
    %1189 = vmatprep.subr.mxu0 0.0
    %1190 = vmatpush1.msra.mxu0 0.0
    %1191 = vmatprep.subr.mxu0 0.0
    %1192 = vmatpush1.msra.mxu0 0.0
    %1193 = vmatprep.subr.mxu0 0.0
    %1194 = vmatpush1.msra.mxu0 0.0
    %1195 = vmatprep.subr.mxu0 0.0
    %1196 = vmatpush1.msra.mxu0 0.0
    %1197 = vmatprep.mubr.f32.mxu0 0.0
    %1198 = vmatmul.mubr.f32.gmra.mrb[0].mxu0 %v1131
    %v1199 = vpop.f32.mrb[0].mxu0
    %v1200 = vadd.f32 0.0, %v1199
    %v1201 = vpop.f32.mrb[0].mxu0
    %1202 = vdwg.mxu0
    %1203 = vrot.lane.b32.xlu0 %v195, 64
    %v1204 = vpop.permute.xlu0 %1203
    %v1207 = vsel %vm204, %v895, 0
    %1209 = vmatprep.subr.mxu0 0.0
    %1210 = vmatpush1.msra.mxu0 %v1204
    %1211 = vmatprep.subr.mxu0 0.0
    %1212 = vmatpush1.msra.mxu0 0.0
    %1213 = vmatprep.subr.mxu0 0.0
    %1214 = vmatpush1.msra.mxu0 0.0
    %1215 = vmatprep.subr.mxu0 0.0
    %1216 = vmatpush1.msra.mxu0 0.0
    %1217 = vmatprep.subr.mxu0 0.0
    %1218 = vmatpush1.msra.mxu0 0.0
    %1219 = vmatprep.subr.mxu0 0.0
    %1220 = vmatpush1.msra.mxu0 0.0
    %1221 = vmatprep.subr.mxu0 0.0
    %1222 = vmatpush1.msra.mxu0 0.0
    %1223 = vmatprep.subr.mxu0 0.0
    %1224 = vmatpush1.msra.mxu0 0.0
    %1225 = vmatprep.subr.mxu0 0.0
    %1226 = vmatpush1.msra.mxu0 0.0
    %1227 = vmatprep.subr.mxu0 0.0
    %1228 = vmatpush1.msra.mxu0 0.0
    %1229 = vmatprep.subr.mxu0 0.0
    %1230 = vmatpush1.msra.mxu0 0.0
    %1231 = vmatprep.subr.mxu0 0.0
    %1232 = vmatpush1.msra.mxu0 0.0
    %1233 = vmatprep.subr.mxu0 0.0
    %1234 = vmatpush1.msra.mxu0 0.0
    %1235 = vmatprep.subr.mxu0 0.0
    %1236 = vmatpush1.msra.mxu0 0.0
    %1237 = vmatprep.subr.mxu0 0.0
    %1238 = vmatpush1.msra.mxu0 0.0
    %1239 = vmatprep.subr.mxu0 0.0
    %1240 = vmatpush1.msra.mxu0 0.0
    %1241 = vmatprep.subr.mxu0 0.0
    %1242 = vmatpush1.msra.mxu0 0.0
    %1243 = vmatprep.subr.mxu0 0.0
    %1244 = vmatpush1.msra.mxu0 0.0
    %1245 = vmatprep.subr.mxu0 0.0
    %1246 = vmatpush1.msra.mxu0 0.0
    %1247 = vmatprep.subr.mxu0 0.0
    %1248 = vmatpush1.msra.mxu0 0.0
    %1249 = vmatprep.subr.mxu0 0.0
    %1250 = vmatpush1.msra.mxu0 0.0
    %1251 = vmatprep.subr.mxu0 0.0
    %1252 = vmatpush1.msra.mxu0 0.0
    %1253 = vmatprep.subr.mxu0 0.0
    %1254 = vmatpush1.msra.mxu0 0.0
    %1255 = vmatprep.subr.mxu0 0.0
    %1256 = vmatpush1.msra.mxu0 0.0
    %1257 = vmatprep.subr.mxu0 0.0
    %1258 = vmatpush1.msra.mxu0 0.0
    %1259 = vmatprep.subr.mxu0 0.0
    %1260 = vmatpush1.msra.mxu0 0.0
    %1261 = vmatprep.subr.mxu0 0.0
    %1262 = vmatpush1.msra.mxu0 0.0
    %1263 = vmatprep.subr.mxu0 0.0
    %1264 = vmatpush1.msra.mxu0 0.0
    %1265 = vmatprep.subr.mxu0 0.0
    %1266 = vmatpush1.msra.mxu0 0.0
    %1267 = vmatprep.subr.mxu0 0.0
    %1268 = vmatpush1.msra.mxu0 0.0
    %1269 = vmatprep.subr.mxu0 0.0
    %1270 = vmatpush1.msra.mxu0 0.0
    %1271 = vmatprep.subr.mxu0 0.0
    %1272 = vmatpush1.msra.mxu0 0.0
    %1273 = vmatprep.mubr.f32.mxu0 0.0
    %1274 = vmatmul.mubr.f32.gmra.mrb[0].mxu0 %v1207
    %v1275 = vpop.f32.mrb[0].mxu0
    %v1276 = vadd.f32 0.0, %v1275
    %v1277 = vpop.f32.mrb[0].mxu0
    %1278 = vdwg.mxu0
    %1279 = vrot.lane.b32.xlu0 %v197, 64
    %v1280 = vpop.permute.xlu0 %1279
    %v1283 = vsel %vm204, %v896, 0
    %1285 = vmatprep.subr.mxu0 0.0
    %1286 = vmatpush1.msra.mxu0 %v1280
    %1287 = vmatprep.subr.mxu0 0.0
    %1288 = vmatpush1.msra.mxu0 0.0
    %1289 = vmatprep.subr.mxu0 0.0
    %1290 = vmatpush1.msra.mxu0 0.0
    %1291 = vmatprep.subr.mxu0 0.0
    %1292 = vmatpush1.msra.mxu0 0.0
    %1293 = vmatprep.subr.mxu0 0.0
    %1294 = vmatpush1.msra.mxu0 0.0
    %1295 = vmatprep.subr.mxu0 0.0
    %1296 = vmatpush1.msra.mxu0 0.0
    %1297 = vmatprep.subr.mxu0 0.0
    %1298 = vmatpush1.msra.mxu0 0.0
    %1299 = vmatprep.subr.mxu0 0.0
    %1300 = vmatpush1.msra.mxu0 0.0
    %1301 = vmatprep.subr.mxu0 0.0
    %1302 = vmatpush1.msra.mxu0 0.0
    %1303 = vmatprep.subr.mxu0 0.0
    %1304 = vmatpush1.msra.mxu0 0.0
    %1305 = vmatprep.subr.mxu0 0.0
    %1306 = vmatpush1.msra.mxu0 0.0
    %1307 = vmatprep.subr.mxu0 0.0
    %1308 = vmatpush1.msra.mxu0 0.0
    %1309 = vmatprep.subr.mxu0 0.0
    %1310 = vmatpush1.msra.mxu0 0.0
    %1311 = vmatprep.subr.mxu0 0.0
    %1312 = vmatpush1.msra.mxu0 0.0
    %1313 = vmatprep.subr.mxu0 0.0
    %1314 = vmatpush1.msra.mxu0 0.0
    %1315 = vmatprep.subr.mxu0 0.0
    %1316 = vmatpush1.msra.mxu0 0.0
    %1317 = vmatprep.subr.mxu0 0.0
    %1318 = vmatpush1.msra.mxu0 0.0
    %1319 = vmatprep.subr.mxu0 0.0
    %1320 = vmatpush1.msra.mxu0 0.0
    %1321 = vmatprep.subr.mxu0 0.0
    %1322 = vmatpush1.msra.mxu0 0.0
    %1323 = vmatprep.subr.mxu0 0.0
    %1324 = vmatpush1.msra.mxu0 0.0
    %1325 = vmatprep.subr.mxu0 0.0
    %1326 = vmatpush1.msra.mxu0 0.0
    %1327 = vmatprep.subr.mxu0 0.0
    %1328 = vmatpush1.msra.mxu0 0.0
    %1329 = vmatprep.subr.mxu0 0.0
    %1330 = vmatpush1.msra.mxu0 0.0
    %1331 = vmatprep.subr.mxu0 0.0
    %1332 = vmatpush1.msra.mxu0 0.0
    %1333 = vmatprep.subr.mxu0 0.0
    %1334 = vmatpush1.msra.mxu0 0.0
    %1335 = vmatprep.subr.mxu0 0.0
    %1336 = vmatpush1.msra.mxu0 0.0
    %1337 = vmatprep.subr.mxu0 0.0
    %1338 = vmatpush1.msra.mxu0 0.0
    %1339 = vmatprep.subr.mxu0 0.0
    %1340 = vmatpush1.msra.mxu0 0.0
    %1341 = vmatprep.subr.mxu0 0.0
    %1342 = vmatpush1.msra.mxu0 0.0
    %1343 = vmatprep.subr.mxu0 0.0
    %1344 = vmatpush1.msra.mxu0 0.0
    %1345 = vmatprep.subr.mxu0 0.0
    %1346 = vmatpush1.msra.mxu0 0.0
    %1347 = vmatprep.subr.mxu0 0.0
    %1348 = vmatpush1.msra.mxu0 0.0
    %1349 = vmatprep.mubr.f32.mxu0 0.0
    %1350 = vmatmul.mubr.f32.gmra.mrb[0].mxu0 %v1283
    %v1351 = vpop.f32.mrb[0].mxu0
    %v1352 = vadd.f32 0.0, %v1351
    %v1353 = vpop.f32.mrb[0].mxu0
    %1354 = vdwg.mxu0
    %1355 = vrot.lane.b32.xlu0 %v199, 64
    %v1356 = vpop.permute.xlu0 %1355
    %v1359 = vsel %vm204, %v897, 0
    %1361 = vmatprep.subr.mxu0 0.0
    %1362 = vmatpush1.msra.mxu0 %v1356
    %1363 = vmatprep.subr.mxu0 0.0
    %1364 = vmatpush1.msra.mxu0 0.0
    %1365 = vmatprep.subr.mxu0 0.0
    %1366 = vmatpush1.msra.mxu0 0.0
    %1367 = vmatprep.subr.mxu0 0.0
    %1368 = vmatpush1.msra.mxu0 0.0
    %1369 = vmatprep.subr.mxu0 0.0
    %1370 = vmatpush1.msra.mxu0 0.0
    %1371 = vmatprep.subr.mxu0 0.0
    %1372 = vmatpush1.msra.mxu0 0.0
    %1373 = vmatprep.subr.mxu0 0.0
    %1374 = vmatpush1.msra.mxu0 0.0
    %1375 = vmatprep.subr.mxu0 0.0
    %1376 = vmatpush1.msra.mxu0 0.0
    %1377 = vmatprep.subr.mxu0 0.0
    %1378 = vmatpush1.msra.mxu0 0.0
    %1379 = vmatprep.subr.mxu0 0.0
    %1380 = vmatpush1.msra.mxu0 0.0
    %1381 = vmatprep.subr.mxu0 0.0
    %1382 = vmatpush1.msra.mxu0 0.0
    %1383 = vmatprep.subr.mxu0 0.0
    %1384 = vmatpush1.msra.mxu0 0.0
    %1385 = vmatprep.subr.mxu0 0.0
    %1386 = vmatpush1.msra.mxu0 0.0
    %1387 = vmatprep.subr.mxu0 0.0
    %1388 = vmatpush1.msra.mxu0 0.0
    %1389 = vmatprep.subr.mxu0 0.0
    %1390 = vmatpush1.msra.mxu0 0.0
    %1391 = vmatprep.subr.mxu0 0.0
    %1392 = vmatpush1.msra.mxu0 0.0
    %1393 = vmatprep.subr.mxu0 0.0
    %1394 = vmatpush1.msra.mxu0 0.0
    %1395 = vmatprep.subr.mxu0 0.0
    %1396 = vmatpush1.msra.mxu0 0.0
    %1397 = vmatprep.subr.mxu0 0.0
    %1398 = vmatpush1.msra.mxu0 0.0
    %1399 = vmatprep.subr.mxu0 0.0
    %1400 = vmatpush1.msra.mxu0 0.0
    %1401 = vmatprep.subr.mxu0 0.0
    %1402 = vmatpush1.msra.mxu0 0.0
    %1403 = vmatprep.subr.mxu0 0.0
    %1404 = vmatpush1.msra.mxu0 0.0
    %1405 = vmatprep.subr.mxu0 0.0
    %1406 = vmatpush1.msra.mxu0 0.0
    %1407 = vmatprep.subr.mxu0 0.0
    %1408 = vmatpush1.msra.mxu0 0.0
    %1409 = vmatprep.subr.mxu0 0.0
    %1410 = vmatpush1.msra.mxu0 0.0
    %1411 = vmatprep.subr.mxu0 0.0
    %1412 = vmatpush1.msra.mxu0 0.0
    %1413 = vmatprep.subr.mxu0 0.0
    %1414 = vmatpush1.msra.mxu0 0.0
    %1415 = vmatprep.subr.mxu0 0.0
    %1416 = vmatpush1.msra.mxu0 0.0
    %1417 = vmatprep.subr.mxu0 0.0
    %1418 = vmatpush1.msra.mxu0 0.0
    %1419 = vmatprep.subr.mxu0 0.0
    %1420 = vmatpush1.msra.mxu0 0.0
    %1421 = vmatprep.subr.mxu0 0.0
    %1422 = vmatpush1.msra.mxu0 0.0
    %1423 = vmatprep.subr.mxu0 0.0
    %1424 = vmatpush1.msra.mxu0 0.0
    %1425 = vmatprep.mubr.f32.mxu0 0.0
    %1426 = vmatmul.mubr.f32.gmra.mrb[0].mxu0 %v1359
    %v1427 = vpop.f32.mrb[0].mxu0
    %v1428 = vadd.f32 0.0, %v1427
    %v1429 = vpop.f32.mrb[0].mxu0
    %1430 = vdwg.mxu0
    %1431 = vrot.lane.b32.xlu0 %v201, 64
    %v1432 = vpop.permute.xlu0 %1431
    %v1435 = vsel %vm204, %v898, 0
    %1437 = vmatprep.subr.mxu0 0.0
    %1438 = vmatpush1.msra.mxu0 %v1432
    %1439 = vmatprep.subr.mxu0 0.0
    %1440 = vmatpush1.msra.mxu0 0.0
    %1441 = vmatprep.subr.mxu0 0.0
    %1442 = vmatpush1.msra.mxu0 0.0
    %1443 = vmatprep.subr.mxu0 0.0
    %1444 = vmatpush1.msra.mxu0 0.0
    %1445 = vmatprep.subr.mxu0 0.0
    %1446 = vmatpush1.msra.mxu0 0.0
    %1447 = vmatprep.subr.mxu0 0.0
    %1448 = vmatpush1.msra.mxu0 0.0
    %1449 = vmatprep.subr.mxu0 0.0
    %1450 = vmatpush1.msra.mxu0 0.0
    %1451 = vmatprep.subr.mxu0 0.0
    %1452 = vmatpush1.msra.mxu0 0.0
    %1453 = vmatprep.subr.mxu0 0.0
    %1454 = vmatpush1.msra.mxu0 0.0
    %1455 = vmatprep.subr.mxu0 0.0
    %1456 = vmatpush1.msra.mxu0 0.0
    %1457 = vmatprep.subr.mxu0 0.0
    %1458 = vmatpush1.msra.mxu0 0.0
    %1459 = vmatprep.subr.mxu0 0.0
    %1460 = vmatpush1.msra.mxu0 0.0
    %1461 = vmatprep.subr.mxu0 0.0
    %1462 = vmatpush1.msra.mxu0 0.0
    %1463 = vmatprep.subr.mxu0 0.0
    %1464 = vmatpush1.msra.mxu0 0.0
    %1465 = vmatprep.subr.mxu0 0.0
    %1466 = vmatpush1.msra.mxu0 0.0
    %1467 = vmatprep.subr.mxu0 0.0
    %1468 = vmatpush1.msra.mxu0 0.0
    %1469 = vmatprep.subr.mxu0 0.0
    %1470 = vmatpush1.msra.mxu0 0.0
    %1471 = vmatprep.subr.mxu0 0.0
    %1472 = vmatpush1.msra.mxu0 0.0
    %1473 = vmatprep.subr.mxu0 0.0
    %1474 = vmatpush1.msra.mxu0 0.0
    %1475 = vmatprep.subr.mxu0 0.0
    %1476 = vmatpush1.msra.mxu0 0.0
    %1477 = vmatprep.subr.mxu0 0.0
    %1478 = vmatpush1.msra.mxu0 0.0
    %1479 = vmatprep.subr.mxu0 0.0
    %1480 = vmatpush1.msra.mxu0 0.0
    %1481 = vmatprep.subr.mxu0 0.0
    %1482 = vmatpush1.msra.mxu0 0.0
    %1483 = vmatprep.subr.mxu0 0.0
    %1484 = vmatpush1.msra.mxu0 0.0
    %1485 = vmatprep.subr.mxu0 0.0
    %1486 = vmatpush1.msra.mxu0 0.0
    %1487 = vmatprep.subr.mxu0 0.0
    %1488 = vmatpush1.msra.mxu0 0.0
    %1489 = vmatprep.subr.mxu0 0.0
    %1490 = vmatpush1.msra.mxu0 0.0
    %1491 = vmatprep.subr.mxu0 0.0
    %1492 = vmatpush1.msra.mxu0 0.0
    %1493 = vmatprep.subr.mxu0 0.0
    %1494 = vmatpush1.msra.mxu0 0.0
    %1495 = vmatprep.subr.mxu0 0.0
    %1496 = vmatpush1.msra.mxu0 0.0
    %1497 = vmatprep.subr.mxu0 0.0
    %1498 = vmatpush1.msra.mxu0 0.0
    %1499 = vmatprep.subr.mxu0 0.0
    %1500 = vmatpush1.msra.mxu0 0.0
    %1501 = vmatprep.mubr.f32.mxu0 0.0
    %1502 = vmatmul.mubr.f32.gmra.mrb[0].mxu0 %v1435
    %v1503 = vpop.f32.mrb[0].mxu0
    %v1504 = vadd.f32 0.0, %v1503
    %v1505 = vpop.f32.mrb[0].mxu0
    %1506 = vdwg.mxu0
    %1509 = vrot.lane.b32.xlu0 %v1124, 8
    %v1510 = vpop.permute.xlu0 %1509
    %1511 = vrot.lane.b32.xlu0 %v1200, 8
    %v1512 = vpop.permute.xlu0 %1511
    %1517 = vrot.lane.b32.xlu0 %v1276, 16
    %v1518 = vpop.permute.xlu0 %1517
    %1519 = vrot.lane.b32.xlu0 %v1352, 16
    %v1520 = vpop.permute.xlu0 %1519
    %1525 = vrot.lane.b32.xlu0 %v1428, 24
    %v1526 = vpop.permute.xlu0 %1525
    %1527 = vrot.lane.b32.xlu0 %v1504, 24
    %v1528 = vpop.permute.xlu0 %1527
    %v1531 = vsel %vm204, %v972, %v1510
    %v1532 = vsel %vm204, %v1048, %v1512
    %vm1533 = vcmask 130048
    %v1534 = vsel %vm1533, %v1531, %v1518
    %v1535 = vsel %vm1533, %v1532, %v1520
    %vm1536 = vcmask 195584
    %v1537 = vsel %vm1536, %v1534, %v1526
    %v1538 = vsel %vm1536, %v1535, %v1528
    %v1539 = vld [vmem:[%s4] sm:$0xff]
    %v1540 = vld [vmem:[%s4 + $0x8] sm:$0xff]
    %v1541 = vld [vmem:[%s4 + $0x10] sm:$0xff]
    %v1542 = vld [vmem:[%s4 + $0x18] sm:$0xff]
    %v1544 = vsel %vm59, %v1537, 0
    %v1547 = vsel %vm59, %v1538, 0
    %1549 = vmatprep.subr.mxu0 0.0
    %1550 = vmatpush1.msra.mxu0 %v1539
    %1551 = vmatprep.subr.mxu0 0.0
    %1552 = vmatpush1.msra.mxu0 %v1540
    %1553 = vmatprep.subr.mxu0 0.0
    %1554 = vmatpush1.msra.mxu0 %v1541
    %1555 = vmatprep.subr.mxu0 0.0
    %1556 = vmatpush1.msra.mxu0 %v1542
    %1557 = vmatprep.subr.mxu0 0.0
    %1558 = vmatpush1.msra.mxu0 0.0
    %1559 = vmatprep.subr.mxu0 0.0
    %1560 = vmatpush1.msra.mxu0 0.0
    %1561 = vmatprep.subr.mxu0 0.0
    %1562 = vmatpush1.msra.mxu0 0.0
    %1563 = vmatprep.subr.mxu0 0.0
    %1564 = vmatpush1.msra.mxu0 0.0
    %1565 = vmatprep.subr.mxu0 0.0
    %1566 = vmatpush1.msra.mxu0 0.0
    %1567 = vmatprep.subr.mxu0 0.0
    %1568 = vmatpush1.msra.mxu0 0.0
    %1569 = vmatprep.subr.mxu0 0.0
    %1570 = vmatpush1.msra.mxu0 0.0
    %1571 = vmatprep.subr.mxu0 0.0
    %1572 = vmatpush1.msra.mxu0 0.0
    %1573 = vmatprep.subr.mxu0 0.0
    %1574 = vmatpush1.msra.mxu0 0.0
    %1575 = vmatprep.subr.mxu0 0.0
    %1576 = vmatpush1.msra.mxu0 0.0
    %1577 = vmatprep.subr.mxu0 0.0
    %1578 = vmatpush1.msra.mxu0 0.0
    %1579 = vmatprep.subr.mxu0 0.0
    %1580 = vmatpush1.msra.mxu0 0.0
    %1581 = vmatprep.subr.mxu0 0.0
    %1582 = vmatpush1.msra.mxu0 0.0
    %1583 = vmatprep.subr.mxu0 0.0
    %1584 = vmatpush1.msra.mxu0 0.0
    %1585 = vmatprep.subr.mxu0 0.0
    %1586 = vmatpush1.msra.mxu0 0.0
    %1587 = vmatprep.subr.mxu0 0.0
    %1588 = vmatpush1.msra.mxu0 0.0
    %1589 = vmatprep.subr.mxu0 0.0
    %1590 = vmatpush1.msra.mxu0 0.0
    %1591 = vmatprep.subr.mxu0 0.0
    %1592 = vmatpush1.msra.mxu0 0.0
    %1593 = vmatprep.subr.mxu0 0.0
    %1594 = vmatpush1.msra.mxu0 0.0
    %1595 = vmatprep.subr.mxu0 0.0
    %1596 = vmatpush1.msra.mxu0 0.0
    %1597 = vmatprep.subr.mxu0 0.0
    %1598 = vmatpush1.msra.mxu0 0.0
    %1599 = vmatprep.subr.mxu0 0.0
    %1600 = vmatpush1.msra.mxu0 0.0
    %1601 = vmatprep.subr.mxu0 0.0
    %1602 = vmatpush1.msra.mxu0 0.0
    %1603 = vmatprep.subr.mxu0 0.0
    %1604 = vmatpush1.msra.mxu0 0.0
    %1605 = vmatprep.subr.mxu0 0.0
    %1606 = vmatpush1.msra.mxu0 0.0
    %1607 = vmatprep.subr.mxu0 0.0
    %1608 = vmatpush1.msra.mxu0 0.0
    %1609 = vmatprep.subr.mxu0 0.0
    %1610 = vmatpush1.msra.mxu0 0.0
    %1611 = vmatprep.subr.mxu0 0.0
    %1612 = vmatpush1.msra.mxu0 0.0
    %1613 = vmatprep.mubr.f32.mxu0 0.0
    %1614 = vmatmul.mubr.f32.gmra.mrb[0].mxu0 %v1544
    %v1615 = vpop.f32.mrb[0].mxu0
    %v1616 = vadd.f32 0.0, %v1615
    %v1617 = vpop.f32.mrb[0].mxu0
    %1618 = vmatprep.mubr.f32.mxu0 0.0
    %1619 = vmatmul.mubr.f32.gmra.mrb[0].mxu0 %v1547
    %v1620 = vpop.f32.mrb[0].mxu0
    %v1621 = vadd.f32 0.0, %v1620
    %v1622 = vpop.f32.mrb[0].mxu0
    %1623 = vdwg.mxu0
    %v1624 = vadd.f32 %v55, %v1616
    %v1625 = vadd.f32 %v56, %v1621
    %v1626 = vld [vmem:[%s5] sm:$0x1]
    %v1628 = vlaneseq
    %v1629 = vshrl.u32 %v1628, 7
    %v1630 = vsub.s32 0, %v1629
    %v1631 = vrot.slane %v1626, %v1630
    %v1633 = vadd.f32 %v1624, %v1631
    %v1634 = vadd.f32 %v1625, %v1631
    %v1635 = vld [vmem:[%s6] sm:$0x1]
    %v1636 = vld [vmem:[%s7] sm:$0x1]
    %v1637 = vsel %vm59, %v1633, 0.0
    %1638 = vadd.xlane.f32.xlu0 %v1637
    %v1639 = vpop.xlane.xlu0 %1638
    %v1640 = vsel %vm59, %v1634, 0.0
    %1641 = vadd.xlane.f32.xlu0 %v1640
    %v1642 = vpop.xlane.xlu0 %1641
    %v1643 = vmul.f32 %v1639, %v66
    %v1644 = vmul.f32 %v1642, %v66
    %v1645 = vsub.f32 %v1633, %v1643
    %v1646 = vsub.f32 %v1634, %v1644
    %v1647 = vmul.f32 %v1645, %v1645
    %v1648 = vmul.f32 %v1646, %v1646
    %v1649 = vsel %vm59, %v1647, 0.0
    %1650 = vadd.xlane.f32.xlu0 %v1649
    %v1651 = vpop.xlane.xlu0 %1650
    %v1652 = vsel %vm59, %v1648, 0.0
    %1653 = vadd.xlane.f32.xlu0 %v1652
    %v1654 = vpop.xlane.xlu0 %1653
    %v1655 = vmul.f32 %v1651, %v66
    %v1656 = vmul.f32 %v1654, %v66
    %v1657 = vadd.f32 %v1655, 1e-05
    %v1658 = vadd.f32 %v1656, 1e-05
    %v1659 = vrsqrt.pop %v1657
    %v1660 = vrsqrt.pop %v1658
    %v1661 = vmul.f32 %v1645, %v1659
    %v1662 = vmul.f32 %v1646, %v1660
    %v1664 = vlaneseq
    %v1665 = vshrl.u32 %v1664, 7
    %v1666 = vsub.s32 0, %v1665
    %v1667 = vrot.slane %v1635, %v1666
    %v1669 = vmul.f32 %v1661, %v1667
    %v1670 = vmul.f32 %v1662, %v1667
    %v1672 = vlaneseq
    %v1673 = vshrl.u32 %v1672, 7
    %v1674 = vsub.s32 0, %v1673
    %v1675 = vrot.slane %v1636, %v1674
    %v1677 = vadd.f32 %v1669, %v1675
    %v1678 = vadd.f32 %v1670, %v1675
    %v1679 = vld [vmem:[#allocation2] sm:$0xff]
    %v1680 = vld [vmem:[#allocation2 + $0x8] sm:$0xff]
    %v1681 = vld [vmem:[#allocation2 + $0x10] sm:$0xff]
    %v1682 = vld [vmem:[#allocation2 + $0x18] sm:$0xff]
    %v1683 = vld [vmem:[%s9] sm:$0x1]
    %v1685 = vlaneseq
    %v1686 = vshrl.u32 %v1685, 7
    %v1687 = vsub.s32 0, %v1686
    %v1688 = vrot.slane %v1683, %v1687
    %v1691 = vsel %vm59, %v1677, 0
    %v1694 = vsel %vm59, %v1678, 0
    %1696 = vmatprep.subr.mxu0 0.0
    %1697 = vmatpush1.msra.mxu0 %v1679
    %1698 = vmatprep.subr.mxu0 0.0
    %1699 = vmatpush1.msra.mxu0 %v1680
    %1700 = vmatprep.subr.mxu0 0.0
    %1701 = vmatpush1.msra.mxu0 %v1681
    %1702 = vmatprep.subr.mxu0 0.0
    %1703 = vmatpush1.msra.mxu0 %v1682
    %1704 = vmatprep.subr.mxu0 0.0
    %1705 = vmatpush1.msra.mxu0 0.0
    %1706 = vmatprep.subr.mxu0 0.0
    %1707 = vmatpush1.msra.mxu0 0.0
    %1708 = vmatprep.subr.mxu0 0.0
    %1709 = vmatpush1.msra.mxu0 0.0
    %1710 = vmatprep.subr.mxu0 0.0
    %1711 = vmatpush1.msra.mxu0 0.0
    %1712 = vmatprep.subr.mxu0 0.0
    %1713 = vmatpush1.msra.mxu0 0.0
    %1714 = vmatprep.subr.mxu0 0.0
    %1715 = vmatpush1.msra.mxu0 0.0
    %1716 = vmatprep.subr.mxu0 0.0
    %1717 = vmatpush1.msra.mxu0 0.0
    %1718 = vmatprep.subr.mxu0 0.0
    %1719 = vmatpush1.msra.mxu0 0.0
    %1720 = vmatprep.subr.mxu0 0.0
    %1721 = vmatpush1.msra.mxu0 0.0
    %1722 = vmatprep.subr.mxu0 0.0
    %1723 = vmatpush1.msra.mxu0 0.0
    %1724 = vmatprep.subr.mxu0 0.0
    %1725 = vmatpush1.msra.mxu0 0.0
    %1726 = vmatprep.subr.mxu0 0.0
    %1727 = vmatpush1.msra.mxu0 0.0
    %1728 = vmatprep.subr.mxu0 0.0
    %1729 = vmatpush1.msra.mxu0 0.0
    %1730 = vmatprep.subr.mxu0 0.0
    %1731 = vmatpush1.msra.mxu0 0.0
    %1732 = vmatprep.subr.mxu0 0.0
    %1733 = vmatpush1.msra.mxu0 0.0
    %1734 = vmatprep.subr.mxu0 0.0
    %1735 = vmatpush1.msra.mxu0 0.0
    %1736 = vmatprep.subr.mxu0 0.0
    %1737 = vmatpush1.msra.mxu0 0.0
    %1738 = vmatprep.subr.mxu0 0.0
    %1739 = vmatpush1.msra.mxu0 0.0
    %1740 = vmatprep.subr.mxu0 0.0
    %1741 = vmatpush1.msra.mxu0 0.0
    %1742 = vmatprep.subr.mxu0 0.0
    %1743 = vmatpush1.msra.mxu0 0.0
    %1744 = vmatprep.subr.mxu0 0.0
    %1745 = vmatpush1.msra.mxu0 0.0
    %1746 = vmatprep.subr.mxu0 0.0
    %1747 = vmatpush1.msra.mxu0 0.0
    %1748 = vmatprep.subr.mxu0 0.0
    %1749 = vmatpush1.msra.mxu0 0.0
    %1750 = vmatprep.subr.mxu0 0.0
    %1751 = vmatpush1.msra.mxu0 0.0
    %1752 = vmatprep.subr.mxu0 0.0
    %1753 = vmatpush1.msra.mxu0 0.0
    %1754 = vmatprep.subr.mxu0 0.0
    %1755 = vmatpush1.msra.mxu0 0.0
    %1756 = vmatprep.subr.mxu0 0.0
    %1757 = vmatpush1.msra.mxu0 0.0
    %1758 = vmatprep.subr.mxu0 0.0
    %1759 = vmatpush1.msra.mxu0 0.0
    %1760 = vmatprep.mubr.f32.mxu0 0.0
    %1761 = vmatmul.mubr.f32.gmra.mrb[0].mxu0 %v1691
    %v1762 = vpop.f32.mrb[0].mxu0
    %v1763 = vadd.f32 %v1688, %v1762
    %v1764 = vpop.f32.mrb[0].mxu0
    %1765 = vmatprep.mubr.f32.mxu0 0.0
    %1766 = vmatmul.mubr.f32.gmra.mrb[0].mxu0 %v1694
    %v1767 = vpop.f32.mrb[0].mxu0
    %v1768 = vadd.f32 %v1688, %v1767
    %v1769 = vpop.f32.mrb[0].mxu0
    %1770 = vdwg.mxu0
    %v1771 = vmul.f32 %v1763, 0.5
    %v1772 = vmul.f32 %v1768, 0.5
    %v1773 = vmul.f32 %v1763, 0.70710677
    %v1774 = vmul.f32 %v1768, 0.70710677
    %v1775 = vand.u32 2147483647, %v1773
    %v1776 = vand.u32 2147483647, %v1774
    %v1777 = vmul.f32 %v1775, 0.3275911
    %v1778 = vmul.f32 %v1776, 0.3275911
    %v1779 = vadd.f32 %v1777, 1.0
    %v1780 = vadd.f32 %v1778, 1.0
    %v1781 = vrcp.pop %v1779
    %v1782 = vrcp.pop %v1780
    %v1783 = vmul.f32 %v1781, 1.0614054
    %v1784 = vmul.f32 %v1782, 1.0614054
    %v1785 = vadd.f32 %v1783, -1.4531521
    %v1786 = vadd.f32 %v1784, -1.4531521
    %v1787 = vmul.f32 %v1785, %v1781
    %v1788 = vmul.f32 %v1786, %v1782
    %v1789 = vadd.f32 %v1787, 1.4214138
    %v1790 = vadd.f32 %v1788, 1.4214138
    %v1791 = vmul.f32 %v1789, %v1781
    %v1792 = vmul.f32 %v1790, %v1782
    %v1793 = vadd.f32 %v1791, -0.28449672
    %v1794 = vadd.f32 %v1792, -0.28449672
    %v1795 = vmul.f32 %v1793, %v1781
    %v1796 = vmul.f32 %v1794, %v1782
    %v1797 = vadd.f32 %v1795, 0.2548296
    %v1798 = vadd.f32 %v1796, 0.2548296
    %v1799 = vmul.f32 %v1797, %v1781
    %v1800 = vmul.f32 %v1798, %v1782
    %v1801 = vsub.f32 0.0, %v1775
    %v1802 = vsub.f32 0.0, %v1776
    %v1803 = vmul.f32 %v1801, %v1775
    %v1804 = vmul.f32 %v1802, %v1776
    %v1805 = vmul.f32 %v1803, 1.442695
    %v1806 = vpow.pop %v1805
    %v1807 = vmul.f32 %v1804, 1.442695
    %v1808 = vpow.pop %v1807
    %v1809 = vmul.f32 %v1799, %v1806
    %v1810 = vmul.f32 %v1800, %v1808
    %v1811 = vsub.f32 1.0, %v1809
    %v1812 = vsub.f32 1.0, %v1810
    %vm1813 = vcmp.ge.f32.partialorder %v1773, 0.0
    %vm1814 = vcmp.ge.f32.partialorder %v1774, 0.0
    %v1815 = vsub.f32 0.0, %v1811
    %v1816 = vsub.f32 0.0, %v1812
    %v1817 = vsel %vm1813, %v1811, %v1815
    %v1818 = vsel %vm1814, %v1812, %v1816
    %v1819 = vadd.f32 %v1817, 1.0
    %v1820 = vadd.f32 %v1818, 1.0
    %v1821 = vmul.f32 %v1771, %v1819
    %v1822 = vmul.f32 %v1772, %v1820
    %v1823 = vld [vmem:[%s10] sm:$0xff]
    %v1824 = vld [vmem:[%s10 + $0x8] sm:$0xff]
    %v1825 = vld [vmem:[%s10 + $0x10] sm:$0xff]
    %v1826 = vld [vmem:[%s10 + $0x18] sm:$0xff]
    %v1827 = vld [vmem:[%s10 + $0x20] sm:$0xff]
    %v1828 = vld [vmem:[%s10 + $0x28] sm:$0xff]
    %v1829 = vld [vmem:[%s10 + $0x30] sm:$0xff]
    %v1830 = vld [vmem:[%s10 + $0x38] sm:$0xff]
    %v1831 = vld [vmem:[%s11] sm:$0x1]
    %v1833 = vlaneseq
    %v1834 = vshrl.u32 %v1833, 7
    %v1835 = vsub.s32 0, %v1834
    %v1836 = vrot.slane %v1831, %v1835
    %vm1838 = vcmask 523264
    %v1840 = vsel %vm1838, %v1821, 0
    %v1843 = vsel %vm1838, %v1822, 0
    %1845 = vmatprep.subr.mxu0 0.0
    %1846 = vmatpush1.msra.mxu0 %v1823
    %1847 = vmatprep.subr.mxu0 0.0
    %1848 = vmatpush1.msra.mxu0 %v1824
    %1849 = vmatprep.subr.mxu0 0.0
    %1850 = vmatpush1.msra.mxu0 %v1825
    %1851 = vmatprep.subr.mxu0 0.0
    %1852 = vmatpush1.msra.mxu0 %v1826
    %1853 = vmatprep.subr.mxu0 0.0
    %1854 = vmatpush1.msra.mxu0 %v1827
    %1855 = vmatprep.subr.mxu0 0.0
    %1856 = vmatpush1.msra.mxu0 %v1828
    %1857 = vmatprep.subr.mxu0 0.0
    %1858 = vmatpush1.msra.mxu0 %v1829
    %1859 = vmatprep.subr.mxu0 0.0
    %1860 = vmatpush1.msra.mxu0 %v1830
    %1861 = vmatprep.subr.mxu0 0.0
    %1862 = vmatpush1.msra.mxu0 0.0
    %1863 = vmatprep.subr.mxu0 0.0
    %1864 = vmatpush1.msra.mxu0 0.0
    %1865 = vmatprep.subr.mxu0 0.0
    %1866 = vmatpush1.msra.mxu0 0.0
    %1867 = vmatprep.subr.mxu0 0.0
    %1868 = vmatpush1.msra.mxu0 0.0
    %1869 = vmatprep.subr.mxu0 0.0
    %1870 = vmatpush1.msra.mxu0 0.0
    %1871 = vmatprep.subr.mxu0 0.0
    %1872 = vmatpush1.msra.mxu0 0.0
    %1873 = vmatprep.subr.mxu0 0.0
    %1874 = vmatpush1.msra.mxu0 0.0
    %1875 = vmatprep.subr.mxu0 0.0
    %1876 = vmatpush1.msra.mxu0 0.0
    %1877 = vmatprep.subr.mxu0 0.0
    %1878 = vmatpush1.msra.mxu0 0.0
    %1879 = vmatprep.subr.mxu0 0.0
    %1880 = vmatpush1.msra.mxu0 0.0
    %1881 = vmatprep.subr.mxu0 0.0
    %1882 = vmatpush1.msra.mxu0 0.0
    %1883 = vmatprep.subr.mxu0 0.0
    %1884 = vmatpush1.msra.mxu0 0.0
    %1885 = vmatprep.subr.mxu0 0.0
    %1886 = vmatpush1.msra.mxu0 0.0
    %1887 = vmatprep.subr.mxu0 0.0
    %1888 = vmatpush1.msra.mxu0 0.0
    %1889 = vmatprep.subr.mxu0 0.0
    %1890 = vmatpush1.msra.mxu0 0.0
    %1891 = vmatprep.subr.mxu0 0.0
    %1892 = vmatpush1.msra.mxu0 0.0
    %1893 = vmatprep.subr.mxu0 0.0
    %1894 = vmatpush1.msra.mxu0 0.0
    %1895 = vmatprep.subr.mxu0 0.0
    %1896 = vmatpush1.msra.mxu0 0.0
    %1897 = vmatprep.subr.mxu0 0.0
    %1898 = vmatpush1.msra.mxu0 0.0
    %1899 = vmatprep.subr.mxu0 0.0
    %1900 = vmatpush1.msra.mxu0 0.0
    %1901 = vmatprep.subr.mxu0 0.0
    %1902 = vmatpush1.msra.mxu0 0.0
    %1903 = vmatprep.subr.mxu0 0.0
    %1904 = vmatpush1.msra.mxu0 0.0
    %1905 = vmatprep.subr.mxu0 0.0
    %1906 = vmatpush1.msra.mxu0 0.0
    %1907 = vmatprep.subr.mxu0 0.0
    %1908 = vmatpush1.msra.mxu0 0.0
    %1909 = vmatprep.mubr.f32.mxu0 0.0
    %1910 = vmatmul.mubr.f32.gmra.mrb[0].mxu0 %v1840
    %v1911 = vpop.f32.mrb[0].mxu0
    %v1912 = vadd.f32 %v1836, %v1911
    %v1913 = vpop.f32.mrb[0].mxu0
    %1914 = vmatprep.mubr.f32.mxu0 0.0
    %1915 = vmatmul.mubr.f32.gmra.mrb[0].mxu0 %v1843
    %v1916 = vpop.f32.mrb[0].mxu0
    %v1917 = vadd.f32 %v1836, %v1916
    %v1918 = vpop.f32.mrb[0].mxu0
    %1919 = vdwg.mxu0
    %v1920 = vadd.f32 %v1633, %v1912
    %v1921 = vadd.f32 %v1634, %v1917
    %s1922 = scalar_lea.vmem %s1, 1
    %v1923 = vld [vmem:[%s1922] sm:$0x1]
    %s1924 = scalar_lea.vmem %s2, 1
    %v1925 = vld [vmem:[%s1924] sm:$0x1]
    %v1926 = vsel %vm59, %v1920, 0.0
    %1927 = vadd.xlane.f32.xlu0 %v1926
    %v1928 = vpop.xlane.xlu0 %1927
    %v1929 = vsel %vm59, %v1921, 0.0
    %1930 = vadd.xlane.f32.xlu0 %v1929
    %v1931 = vpop.xlane.xlu0 %1930
    %v1932 = vmul.f32 %v1928, %v66
    %v1933 = vmul.f32 %v1931, %v66
    %v1934 = vsub.f32 %v1920, %v1932
    %v1935 = vsub.f32 %v1921, %v1933
    %v1936 = vmul.f32 %v1934, %v1934
    %v1937 = vmul.f32 %v1935, %v1935
    %v1938 = vsel %vm59, %v1936, 0.0
    %1939 = vadd.xlane.f32.xlu0 %v1938
    %v1940 = vpop.xlane.xlu0 %1939
    %v1941 = vsel %vm59, %v1937, 0.0
    %1942 = vadd.xlane.f32.xlu0 %v1941
    %v1943 = vpop.xlane.xlu0 %1942
    %v1944 = vmul.f32 %v1940, %v66
    %v1945 = vmul.f32 %v1943, %v66
    %v1946 = vadd.f32 %v1944, 1e-05
    %v1947 = vadd.f32 %v1945, 1e-05
    %v1948 = vrsqrt.pop %v1946
    %v1949 = vrsqrt.pop %v1947
    %v1950 = vmul.f32 %v1934, %v1948
    %v1951 = vmul.f32 %v1935, %v1949
    %v1953 = vlaneseq
    %v1954 = vshrl.u32 %v1953, 7
    %v1955 = vsub.s32 0, %v1954
    %v1956 = vrot.slane %v1923, %v1955
    %v1958 = vmul.f32 %v1950, %v1956
    %v1959 = vmul.f32 %v1951, %v1956
    %v1961 = vlaneseq
    %v1962 = vshrl.u32 %v1961, 7
    %v1963 = vsub.s32 0, %v1962
    %v1964 = vrot.slane %v1925, %v1963
    %v1966 = vadd.f32 %v1958, %v1964
    %v1967 = vadd.f32 %v1959, %v1964
    %s1968 = scalar_lea.vmem %s3, 32
    %v1969 = vld [vmem:[%s1968] sm:$0xff]
    %v1970 = vld [vmem:[%s1968 + $0x8] sm:$0xff]
    %v1971 = vld [vmem:[%s1968 + $0x10] sm:$0xff]
    %v1972 = vld [vmem:[%s1968 + $0x18] sm:$0xff]
    %v1974 = vsel %vm59, %v1966, 0
    %v1977 = vsel %vm59, %v1967, 0
    %1979 = vmatprep.subr.mxu0 0.0
    %1980 = vmatpush1.msra.mxu0 %v1969
    %1981 = vmatprep.subr.mxu0 0.0
    %1982 = vmatpush1.msra.mxu0 %v1970
    %1983 = vmatprep.subr.mxu0 0.0
    %1984 = vmatpush1.msra.mxu0 %v1971
    %1985 = vmatprep.subr.mxu0 0.0
    %1986 = vmatpush1.msra.mxu0 %v1972
    %1987 = vmatprep.subr.mxu0 0.0
    %1988 = vmatpush1.msra.mxu0 0.0
    %1989 = vmatprep.subr.mxu0 0.0
    %1990 = vmatpush1.msra.mxu0 0.0
    %1991 = vmatprep.subr.mxu0 0.0
    %1992 = vmatpush1.msra.mxu0 0.0
    %1993 = vmatprep.subr.mxu0 0.0
    %1994 = vmatpush1.msra.mxu0 0.0
    %1995 = vmatprep.subr.mxu0 0.0
    %1996 = vmatpush1.msra.mxu0 0.0
    %1997 = vmatprep.subr.mxu0 0.0
    %1998 = vmatpush1.msra.mxu0 0.0
    %1999 = vmatprep.subr.mxu0 0.0
    %2000 = vmatpush1.msra.mxu0 0.0
    %2001 = vmatprep.subr.mxu0 0.0
    %2002 = vmatpush1.msra.mxu0 0.0
    %2003 = vmatprep.subr.mxu0 0.0
    %2004 = vmatpush1.msra.mxu0 0.0
    %2005 = vmatprep.subr.mxu0 0.0
    %2006 = vmatpush1.msra.mxu0 0.0
    %2007 = vmatprep.subr.mxu0 0.0
    %2008 = vmatpush1.msra.mxu0 0.0
    %2009 = vmatprep.subr.mxu0 0.0
    %2010 = vmatpush1.msra.mxu0 0.0
    %2011 = vmatprep.subr.mxu0 0.0
    %2012 = vmatpush1.msra.mxu0 0.0
    %2013 = vmatprep.subr.mxu0 0.0
    %2014 = vmatpush1.msra.mxu0 0.0
    %2015 = vmatprep.subr.mxu0 0.0
    %2016 = vmatpush1.msra.mxu0 0.0
    %2017 = vmatprep.subr.mxu0 0.0
    %2018 = vmatpush1.msra.mxu0 0.0
    %2019 = vmatprep.subr.mxu0 0.0
    %2020 = vmatpush1.msra.mxu0 0.0
    %2021 = vmatprep.subr.mxu0 0.0
    %2022 = vmatpush1.msra.mxu0 0.0
    %2023 = vmatprep.subr.mxu0 0.0
    %2024 = vmatpush1.msra.mxu0 0.0
    %2025 = vmatprep.subr.mxu0 0.0
    %2026 = vmatpush1.msra.mxu0 0.0
    %2027 = vmatprep.subr.mxu0 0.0
    %2028 = vmatpush1.msra.mxu0 0.0
    %2029 = vmatprep.subr.mxu0 0.0
    %2030 = vmatpush1.msra.mxu0 0.0
    %2031 = vmatprep.subr.mxu0 0.0
    %2032 = vmatpush1.msra.mxu0 0.0
    %2033 = vmatprep.subr.mxu0 0.0
    %2034 = vmatpush1.msra.mxu0 0.0
    %2035 = vmatprep.subr.mxu0 0.0
    %2036 = vmatpush1.msra.mxu0 0.0
    %2037 = vmatprep.subr.mxu0 0.0
    %2038 = vmatpush1.msra.mxu0 0.0
    %2039 = vmatprep.subr.mxu0 0.0
    %2040 = vmatpush1.msra.mxu0 0.0
    %2041 = vmatprep.subr.mxu0 0.0
    %2042 = vmatpush1.msra.mxu0 0.0
    %2043 = vmatprep.mubr.f32.mxu0 0.0
    %2044 = vmatmul.mubr.f32.gmra.mrb[0].mxu0 %v1974
    %v2045 = vpop.f32.mrb[0].mxu0
    %v2046 = vadd.f32 0.0, %v2045
    %v2047 = vpop.f32.mrb[0].mxu0
    %2048 = vmatprep.mubr.f32.mxu0 0.0
    %2049 = vmatmul.mubr.f32.gmra.mrb[0].mxu0 %v1977
    %v2050 = vpop.f32.mrb[0].mxu0
    %v2051 = vadd.f32 0.0, %v2050
    %v2052 = vpop.f32.mrb[0].mxu0
    %2053 = vdwg.mxu0
    %2056 = vrot.lane.b32.xlu0 %v2046, 120
    %v2057 = vpop.permute.xlu0 %2056
    %2058 = vrot.lane.b32.xlu0 %v2051, 120
    %v2059 = vpop.permute.xlu0 %2058
    %2060 = vrot.lane.b32.xlu0 %v2046, 112
    %v2061 = vpop.permute.xlu0 %2060
    %2062 = vrot.lane.b32.xlu0 %v2051, 112
    %v2063 = vpop.permute.xlu0 %2062
    %2064 = vrot.lane.b32.xlu0 %v2046, 104
    %v2065 = vpop.permute.xlu0 %2064
    %2066 = vrot.lane.b32.xlu0 %v2051, 104
    %v2067 = vpop.permute.xlu0 %2066
    %2068 = vrot.lane.b32.xlu0 %v2046, 96
    %v2069 = vpop.permute.xlu0 %2068
    %v2070 = vsel %vm204, %v2046, 0
    %v2072 = vsel %vm204, %v2069, 0
    %2074 = vmatprep.subr.mxu0 0.0
    %2075 = vmatpush1.xpose.msra.mxu0 %v2072
    %2076 = vmatprep.subr.mxu0 0.0
    %2077 = vmatpush1.xpose.msra.mxu0 0.0
    %2078 = vmatprep.subr.mxu0 0.0
    %2079 = vmatpush1.xpose.msra.mxu0 0.0
    %2080 = vmatprep.subr.mxu0 0.0
    %2081 = vmatpush1.xpose.msra.mxu0 0.0
    %2082 = vmatprep.subr.mxu0 0.0
    %2083 = vmatpush1.xpose.msra.mxu0 0.0
    %2084 = vmatprep.subr.mxu0 0.0
    %2085 = vmatpush1.xpose.msra.mxu0 0.0
    %2086 = vmatprep.subr.mxu0 0.0
    %2087 = vmatpush1.xpose.msra.mxu0 0.0
    %2088 = vmatprep.subr.mxu0 0.0
    %2089 = vmatpush1.xpose.msra.mxu0 0.0
    %2090 = vmatprep.subr.mxu0 0.0
    %2091 = vmatpush1.xpose.msra.mxu0 0.0
    %2092 = vmatprep.subr.mxu0 0.0
    %2093 = vmatpush1.xpose.msra.mxu0 0.0
    %2094 = vmatprep.subr.mxu0 0.0
    %2095 = vmatpush1.xpose.msra.mxu0 0.0
    %2096 = vmatprep.subr.mxu0 0.0
    %2097 = vmatpush1.xpose.msra.mxu0 0.0
    %2098 = vmatprep.subr.mxu0 0.0
    %2099 = vmatpush1.xpose.msra.mxu0 0.0
    %2100 = vmatprep.subr.mxu0 0.0
    %2101 = vmatpush1.xpose.msra.mxu0 0.0
    %2102 = vmatprep.subr.mxu0 0.0
    %2103 = vmatpush1.xpose.msra.mxu0 0.0
    %2104 = vmatprep.subr.mxu0 0.0
    %2105 = vmatpush1.xpose.msra.mxu0 0.0
    %2106 = vmatprep.subr.mxu0 0.0
    %2107 = vmatpush1.xpose.msra.mxu0 0.0
    %2108 = vmatprep.subr.mxu0 0.0
    %2109 = vmatpush1.xpose.msra.mxu0 0.0
    %2110 = vmatprep.subr.mxu0 0.0
    %2111 = vmatpush1.xpose.msra.mxu0 0.0
    %2112 = vmatprep.subr.mxu0 0.0
    %2113 = vmatpush1.xpose.msra.mxu0 0.0
    %2114 = vmatprep.subr.mxu0 0.0
    %2115 = vmatpush1.xpose.msra.mxu0 0.0
    %2116 = vmatprep.subr.mxu0 0.0
    %2117 = vmatpush1.xpose.msra.mxu0 0.0
    %2118 = vmatprep.subr.mxu0 0.0
    %2119 = vmatpush1.xpose.msra.mxu0 0.0
    %2120 = vmatprep.subr.mxu0 0.0
    %2121 = vmatpush1.xpose.msra.mxu0 0.0
    %2122 = vmatprep.subr.mxu0 0.0
    %2123 = vmatpush1.xpose.msra.mxu0 0.0
    %2124 = vmatprep.subr.mxu0 0.0
    %2125 = vmatpush1.xpose.msra.mxu0 0.0
    %2126 = vmatprep.subr.mxu0 0.0
    %2127 = vmatpush1.xpose.msra.mxu0 0.0
    %2128 = vmatprep.subr.mxu0 0.0
    %2129 = vmatpush1.xpose.msra.mxu0 0.0
    %2130 = vmatprep.subr.mxu0 0.0
    %2131 = vmatpush1.xpose.msra.mxu0 0.0
    %2132 = vmatprep.subr.mxu0 0.0
    %2133 = vmatpush1.xpose.msra.mxu0 0.0
    %2134 = vmatprep.subr.mxu0 0.0
    %2135 = vmatpush1.xpose.msra.mxu0 0.0
    %2136 = vmatprep.subr.mxu0 0.0
    %2137 = vmatpush1.xpose.msra.mxu0 0.0
    %2138 = vmatprep.mubr.f32.mxu0 0.0
    %2139 = vmatmul.mubr.f32.gmra.mrb[0].mxu0 %v2070
    %v2140 = vpop.f32.mrb[0].mxu0
    %v2141 = vadd.f32 0.0, %v2140
    %v2142 = vpop.f32.mrb[0].mxu0
    %2143 = vdwg.mxu0
    %2144 = vrot.lane.b32.xlu0 %v2051, 96
    %v2145 = vpop.permute.xlu0 %2144
    %v2146 = vsel %vm204, %v2051, 0
    %v2148 = vsel %vm204, %v2145, 0
    %2150 = vmatprep.subr.mxu0 0.0
    %2151 = vmatpush1.xpose.msra.mxu0 %v2148
    %2152 = vmatprep.subr.mxu0 0.0
    %2153 = vmatpush1.xpose.msra.mxu0 0.0
    %2154 = vmatprep.subr.mxu0 0.0
    %2155 = vmatpush1.xpose.msra.mxu0 0.0
    %2156 = vmatprep.subr.mxu0 0.0
    %2157 = vmatpush1.xpose.msra.mxu0 0.0
    %2158 = vmatprep.subr.mxu0 0.0
    %2159 = vmatpush1.xpose.msra.mxu0 0.0
    %2160 = vmatprep.subr.mxu0 0.0
    %2161 = vmatpush1.xpose.msra.mxu0 0.0
    %2162 = vmatprep.subr.mxu0 0.0
    %2163 = vmatpush1.xpose.msra.mxu0 0.0
    %2164 = vmatprep.subr.mxu0 0.0
    %2165 = vmatpush1.xpose.msra.mxu0 0.0
    %2166 = vmatprep.subr.mxu0 0.0
    %2167 = vmatpush1.xpose.msra.mxu0 0.0
    %2168 = vmatprep.subr.mxu0 0.0
    %2169 = vmatpush1.xpose.msra.mxu0 0.0
    %2170 = vmatprep.subr.mxu0 0.0
    %2171 = vmatpush1.xpose.msra.mxu0 0.0
    %2172 = vmatprep.subr.mxu0 0.0
    %2173 = vmatpush1.xpose.msra.mxu0 0.0
    %2174 = vmatprep.subr.mxu0 0.0
    %2175 = vmatpush1.xpose.msra.mxu0 0.0
    %2176 = vmatprep.subr.mxu0 0.0
    %2177 = vmatpush1.xpose.msra.mxu0 0.0
    %2178 = vmatprep.subr.mxu0 0.0
    %2179 = vmatpush1.xpose.msra.mxu0 0.0
    %2180 = vmatprep.subr.mxu0 0.0
    %2181 = vmatpush1.xpose.msra.mxu0 0.0
    %2182 = vmatprep.subr.mxu0 0.0
    %2183 = vmatpush1.xpose.msra.mxu0 0.0
    %2184 = vmatprep.subr.mxu0 0.0
    %2185 = vmatpush1.xpose.msra.mxu0 0.0
    %2186 = vmatprep.subr.mxu0 0.0
    %2187 = vmatpush1.xpose.msra.mxu0 0.0
    %2188 = vmatprep.subr.mxu0 0.0
    %2189 = vmatpush1.xpose.msra.mxu0 0.0
    %2190 = vmatprep.subr.mxu0 0.0
    %2191 = vmatpush1.xpose.msra.mxu0 0.0
    %2192 = vmatprep.subr.mxu0 0.0
    %2193 = vmatpush1.xpose.msra.mxu0 0.0
    %2194 = vmatprep.subr.mxu0 0.0
    %2195 = vmatpush1.xpose.msra.mxu0 0.0
    %2196 = vmatprep.subr.mxu0 0.0
    %2197 = vmatpush1.xpose.msra.mxu0 0.0
    %2198 = vmatprep.subr.mxu0 0.0
    %2199 = vmatpush1.xpose.msra.mxu0 0.0
    %2200 = vmatprep.subr.mxu0 0.0
    %2201 = vmatpush1.xpose.msra.mxu0 0.0
    %2202 = vmatprep.subr.mxu0 0.0
    %2203 = vmatpush1.xpose.msra.mxu0 0.0
    %2204 = vmatprep.subr.mxu0 0.0
    %2205 = vmatpush1.xpose.msra.mxu0 0.0
    %2206 = vmatprep.subr.mxu0 0.0
    %2207 = vmatpush1.xpose.msra.mxu0 0.0
    %2208 = vmatprep.subr.mxu0 0.0
    %2209 = vmatpush1.xpose.msra.mxu0 0.0
    %2210 = vmatprep.subr.mxu0 0.0
    %2211 = vmatpush1.xpose.msra.mxu0 0.0
    %2212 = vmatprep.subr.mxu0 0.0
    %2213 = vmatpush1.xpose.msra.mxu0 0.0
    %2214 = vmatprep.mubr.f32.mxu0 0.0
    %2215 = vmatmul.mubr.f32.gmra.mrb[0].mxu0 %v2146
    %v2216 = vpop.f32.mrb[0].mxu0
    %v2217 = vadd.f32 0.0, %v2216
    %v2218 = vpop.f32.mrb[0].mxu0
    %2219 = vdwg.mxu0
    %2220 = vrot.lane.b32.xlu0 %v2057, 96
    %v2221 = vpop.permute.xlu0 %2220
    %v2222 = vsel %vm204, %v2057, 0
    %v2224 = vsel %vm204, %v2221, 0
    %2226 = vmatprep.subr.mxu0 0.0
    %2227 = vmatpush1.xpose.msra.mxu0 %v2224
    %2228 = vmatprep.subr.mxu0 0.0
    %2229 = vmatpush1.xpose.msra.mxu0 0.0
    %2230 = vmatprep.subr.mxu0 0.0
    %2231 = vmatpush1.xpose.msra.mxu0 0.0
    %2232 = vmatprep.subr.mxu0 0.0
    %2233 = vmatpush1.xpose.msra.mxu0 0.0
    %2234 = vmatprep.subr.mxu0 0.0
    %2235 = vmatpush1.xpose.msra.mxu0 0.0
    %2236 = vmatprep.subr.mxu0 0.0
    %2237 = vmatpush1.xpose.msra.mxu0 0.0
    %2238 = vmatprep.subr.mxu0 0.0
    %2239 = vmatpush1.xpose.msra.mxu0 0.0
    %2240 = vmatprep.subr.mxu0 0.0
    %2241 = vmatpush1.xpose.msra.mxu0 0.0
    %2242 = vmatprep.subr.mxu0 0.0
    %2243 = vmatpush1.xpose.msra.mxu0 0.0
    %2244 = vmatprep.subr.mxu0 0.0
    %2245 = vmatpush1.xpose.msra.mxu0 0.0
    %2246 = vmatprep.subr.mxu0 0.0
    %2247 = vmatpush1.xpose.msra.mxu0 0.0
    %2248 = vmatprep.subr.mxu0 0.0
    %2249 = vmatpush1.xpose.msra.mxu0 0.0
    %2250 = vmatprep.subr.mxu0 0.0
    %2251 = vmatpush1.xpose.msra.mxu0 0.0
    %2252 = vmatprep.subr.mxu0 0.0
    %2253 = vmatpush1.xpose.msra.mxu0 0.0
    %2254 = vmatprep.subr.mxu0 0.0
    %2255 = vmatpush1.xpose.msra.mxu0 0.0
    %2256 = vmatprep.subr.mxu0 0.0
    %2257 = vmatpush1.xpose.msra.mxu0 0.0
    %2258 = vmatprep.subr.mxu0 0.0
    %2259 = vmatpush1.xpose.msra.mxu0 0.0
    %2260 = vmatprep.subr.mxu0 0.0
    %2261 = vmatpush1.xpose.msra.mxu0 0.0
    %2262 = vmatprep.subr.mxu0 0.0
    %2263 = vmatpush1.xpose.msra.mxu0 0.0
    %2264 = vmatprep.subr.mxu0 0.0
    %2265 = vmatpush1.xpose.msra.mxu0 0.0
    %2266 = vmatprep.subr.mxu0 0.0
    %2267 = vmatpush1.xpose.msra.mxu0 0.0
    %2268 = vmatprep.subr.mxu0 0.0
    %2269 = vmatpush1.xpose.msra.mxu0 0.0
    %2270 = vmatprep.subr.mxu0 0.0
    %2271 = vmatpush1.xpose.msra.mxu0 0.0
    %2272 = vmatprep.subr.mxu0 0.0
    %2273 = vmatpush1.xpose.msra.mxu0 0.0
    %2274 = vmatprep.subr.mxu0 0.0
    %2275 = vmatpush1.xpose.msra.mxu0 0.0
    %2276 = vmatprep.subr.mxu0 0.0
    %2277 = vmatpush1.xpose.msra.mxu0 0.0
    %2278 = vmatprep.subr.mxu0 0.0
    %2279 = vmatpush1.xpose.msra.mxu0 0.0
    %2280 = vmatprep.subr.mxu0 0.0
    %2281 = vmatpush1.xpose.msra.mxu0 0.0
    %2282 = vmatprep.subr.mxu0 0.0
    %2283 = vmatpush1.xpose.msra.mxu0 0.0
    %2284 = vmatprep.subr.mxu0 0.0
    %2285 = vmatpush1.xpose.msra.mxu0 0.0
    %2286 = vmatprep.subr.mxu0 0.0
    %2287 = vmatpush1.xpose.msra.mxu0 0.0
    %2288 = vmatprep.subr.mxu0 0.0
    %2289 = vmatpush1.xpose.msra.mxu0 0.0
    %2290 = vmatprep.mubr.f32.mxu0 0.0
    %2291 = vmatmul.mubr.f32.gmra.mrb[0].mxu0 %v2222
    %v2292 = vpop.f32.mrb[0].mxu0
    %v2293 = vadd.f32 0.0, %v2292
    %v2294 = vpop.f32.mrb[0].mxu0
    %2295 = vdwg.mxu0
    %2296 = vrot.lane.b32.xlu0 %v2059, 96
    %v2297 = vpop.permute.xlu0 %2296
    %v2298 = vsel %vm204, %v2059, 0
    %v2300 = vsel %vm204, %v2297, 0
    %2302 = vmatprep.subr.mxu0 0.0
    %2303 = vmatpush1.xpose.msra.mxu0 %v2300
    %2304 = vmatprep.subr.mxu0 0.0
    %2305 = vmatpush1.xpose.msra.mxu0 0.0
    %2306 = vmatprep.subr.mxu0 0.0
    %2307 = vmatpush1.xpose.msra.mxu0 0.0
    %2308 = vmatprep.subr.mxu0 0.0
    %2309 = vmatpush1.xpose.msra.mxu0 0.0
    %2310 = vmatprep.subr.mxu0 0.0
    %2311 = vmatpush1.xpose.msra.mxu0 0.0
    %2312 = vmatprep.subr.mxu0 0.0
    %2313 = vmatpush1.xpose.msra.mxu0 0.0
    %2314 = vmatprep.subr.mxu0 0.0
    %2315 = vmatpush1.xpose.msra.mxu0 0.0
    %2316 = vmatprep.subr.mxu0 0.0
    %2317 = vmatpush1.xpose.msra.mxu0 0.0
    %2318 = vmatprep.subr.mxu0 0.0
    %2319 = vmatpush1.xpose.msra.mxu0 0.0
    %2320 = vmatprep.subr.mxu0 0.0
    %2321 = vmatpush1.xpose.msra.mxu0 0.0
    %2322 = vmatprep.subr.mxu0 0.0
    %2323 = vmatpush1.xpose.msra.mxu0 0.0
    %2324 = vmatprep.subr.mxu0 0.0
    %2325 = vmatpush1.xpose.msra.mxu0 0.0
    %2326 = vmatprep.subr.mxu0 0.0
    %2327 = vmatpush1.xpose.msra.mxu0 0.0
    %2328 = vmatprep.subr.mxu0 0.0
    %2329 = vmatpush1.xpose.msra.mxu0 0.0
    %2330 = vmatprep.subr.mxu0 0.0
    %2331 = vmatpush1.xpose.msra.mxu0 0.0
    %2332 = vmatprep.subr.mxu0 0.0
    %2333 = vmatpush1.xpose.msra.mxu0 0.0
    %2334 = vmatprep.subr.mxu0 0.0
    %2335 = vmatpush1.xpose.msra.mxu0 0.0
    %2336 = vmatprep.subr.mxu0 0.0
    %2337 = vmatpush1.xpose.msra.mxu0 0.0
    %2338 = vmatprep.subr.mxu0 0.0
    %2339 = vmatpush1.xpose.msra.mxu0 0.0
    %2340 = vmatprep.subr.mxu0 0.0
    %2341 = vmatpush1.xpose.msra.mxu0 0.0
    %2342 = vmatprep.subr.mxu0 0.0
    %2343 = vmatpush1.xpose.msra.mxu0 0.0
    %2344 = vmatprep.subr.mxu0 0.0
    %2345 = vmatpush1.xpose.msra.mxu0 0.0
    %2346 = vmatprep.subr.mxu0 0.0
    %2347 = vmatpush1.xpose.msra.mxu0 0.0
    %2348 = vmatprep.subr.mxu0 0.0
    %2349 = vmatpush1.xpose.msra.mxu0 0.0
    %2350 = vmatprep.subr.mxu0 0.0
    %2351 = vmatpush1.xpose.msra.mxu0 0.0
    %2352 = vmatprep.subr.mxu0 0.0
    %2353 = vmatpush1.xpose.msra.mxu0 0.0
    %2354 = vmatprep.subr.mxu0 0.0
    %2355 = vmatpush1.xpose.msra.mxu0 0.0
    %2356 = vmatprep.subr.mxu0 0.0
    %2357 = vmatpush1.xpose.msra.mxu0 0.0
    %2358 = vmatprep.subr.mxu0 0.0
    %2359 = vmatpush1.xpose.msra.mxu0 0.0
    %2360 = vmatprep.subr.mxu0 0.0
    %2361 = vmatpush1.xpose.msra.mxu0 0.0
    %2362 = vmatprep.subr.mxu0 0.0
    %2363 = vmatpush1.xpose.msra.mxu0 0.0
    %2364 = vmatprep.subr.mxu0 0.0
    %2365 = vmatpush1.xpose.msra.mxu0 0.0
    %2366 = vmatprep.mubr.f32.mxu0 0.0
    %2367 = vmatmul.mubr.f32.gmra.mrb[0].mxu0 %v2298
    %v2368 = vpop.f32.mrb[0].mxu0
    %v2369 = vadd.f32 0.0, %v2368
    %v2370 = vpop.f32.mrb[0].mxu0
    %2371 = vdwg.mxu0
    %2372 = vrot.lane.b32.xlu0 %v2061, 96
    %v2373 = vpop.permute.xlu0 %2372
    %v2374 = vsel %vm204, %v2061, 0
    %v2376 = vsel %vm204, %v2373, 0
    %2378 = vmatprep.subr.mxu0 0.0
    %2379 = vmatpush1.xpose.msra.mxu0 %v2376
    %2380 = vmatprep.subr.mxu0 0.0
    %2381 = vmatpush1.xpose.msra.mxu0 0.0
    %2382 = vmatprep.subr.mxu0 0.0
    %2383 = vmatpush1.xpose.msra.mxu0 0.0
    %2384 = vmatprep.subr.mxu0 0.0
    %2385 = vmatpush1.xpose.msra.mxu0 0.0
    %2386 = vmatprep.subr.mxu0 0.0
    %2387 = vmatpush1.xpose.msra.mxu0 0.0
    %2388 = vmatprep.subr.mxu0 0.0
    %2389 = vmatpush1.xpose.msra.mxu0 0.0
    %2390 = vmatprep.subr.mxu0 0.0
    %2391 = vmatpush1.xpose.msra.mxu0 0.0
    %2392 = vmatprep.subr.mxu0 0.0
    %2393 = vmatpush1.xpose.msra.mxu0 0.0
    %2394 = vmatprep.subr.mxu0 0.0
    %2395 = vmatpush1.xpose.msra.mxu0 0.0
    %2396 = vmatprep.subr.mxu0 0.0
    %2397 = vmatpush1.xpose.msra.mxu0 0.0
    %2398 = vmatprep.subr.mxu0 0.0
    %2399 = vmatpush1.xpose.msra.mxu0 0.0
    %2400 = vmatprep.subr.mxu0 0.0
    %2401 = vmatpush1.xpose.msra.mxu0 0.0
    %2402 = vmatprep.subr.mxu0 0.0
    %2403 = vmatpush1.xpose.msra.mxu0 0.0
    %2404 = vmatprep.subr.mxu0 0.0
    %2405 = vmatpush1.xpose.msra.mxu0 0.0
    %2406 = vmatprep.subr.mxu0 0.0
    %2407 = vmatpush1.xpose.msra.mxu0 0.0
    %2408 = vmatprep.subr.mxu0 0.0
    %2409 = vmatpush1.xpose.msra.mxu0 0.0
    %2410 = vmatprep.subr.mxu0 0.0
    %2411 = vmatpush1.xpose.msra.mxu0 0.0
    %2412 = vmatprep.subr.mxu0 0.0
    %2413 = vmatpush1.xpose.msra.mxu0 0.0
    %2414 = vmatprep.subr.mxu0 0.0
    %2415 = vmatpush1.xpose.msra.mxu0 0.0
    %2416 = vmatprep.subr.mxu0 0.0
    %2417 = vmatpush1.xpose.msra.mxu0 0.0
    %2418 = vmatprep.subr.mxu0 0.0
    %2419 = vmatpush1.xpose.msra.mxu0 0.0
    %2420 = vmatprep.subr.mxu0 0.0
    %2421 = vmatpush1.xpose.msra.mxu0 0.0
    %2422 = vmatprep.subr.mxu0 0.0
    %2423 = vmatpush1.xpose.msra.mxu0 0.0
    %2424 = vmatprep.subr.mxu0 0.0
    %2425 = vmatpush1.xpose.msra.mxu0 0.0
    %2426 = vmatprep.subr.mxu0 0.0
    %2427 = vmatpush1.xpose.msra.mxu0 0.0
    %2428 = vmatprep.subr.mxu0 0.0
    %2429 = vmatpush1.xpose.msra.mxu0 0.0
    %2430 = vmatprep.subr.mxu0 0.0
    %2431 = vmatpush1.xpose.msra.mxu0 0.0
    %2432 = vmatprep.subr.mxu0 0.0
    %2433 = vmatpush1.xpose.msra.mxu0 0.0
    %2434 = vmatprep.subr.mxu0 0.0
    %2435 = vmatpush1.xpose.msra.mxu0 0.0
    %2436 = vmatprep.subr.mxu0 0.0
    %2437 = vmatpush1.xpose.msra.mxu0 0.0
    %2438 = vmatprep.subr.mxu0 0.0
    %2439 = vmatpush1.xpose.msra.mxu0 0.0
    %2440 = vmatprep.subr.mxu0 0.0
    %2441 = vmatpush1.xpose.msra.mxu0 0.0
    %2442 = vmatprep.mubr.f32.mxu0 0.0
    %2443 = vmatmul.mubr.f32.gmra.mrb[0].mxu0 %v2374
    %v2444 = vpop.f32.mrb[0].mxu0
    %v2445 = vadd.f32 0.0, %v2444
    %v2446 = vpop.f32.mrb[0].mxu0
    %2447 = vdwg.mxu0
    %2448 = vrot.lane.b32.xlu0 %v2063, 96
    %v2449 = vpop.permute.xlu0 %2448
    %v2450 = vsel %vm204, %v2063, 0
    %v2452 = vsel %vm204, %v2449, 0
    %2454 = vmatprep.subr.mxu0 0.0
    %2455 = vmatpush1.xpose.msra.mxu0 %v2452
    %2456 = vmatprep.subr.mxu0 0.0
    %2457 = vmatpush1.xpose.msra.mxu0 0.0
    %2458 = vmatprep.subr.mxu0 0.0
    %2459 = vmatpush1.xpose.msra.mxu0 0.0
    %2460 = vmatprep.subr.mxu0 0.0
    %2461 = vmatpush1.xpose.msra.mxu0 0.0
    %2462 = vmatprep.subr.mxu0 0.0
    %2463 = vmatpush1.xpose.msra.mxu0 0.0
    %2464 = vmatprep.subr.mxu0 0.0
    %2465 = vmatpush1.xpose.msra.mxu0 0.0
    %2466 = vmatprep.subr.mxu0 0.0
    %2467 = vmatpush1.xpose.msra.mxu0 0.0
    %2468 = vmatprep.subr.mxu0 0.0
    %2469 = vmatpush1.xpose.msra.mxu0 0.0
    %2470 = vmatprep.subr.mxu0 0.0
    %2471 = vmatpush1.xpose.msra.mxu0 0.0
    %2472 = vmatprep.subr.mxu0 0.0
    %2473 = vmatpush1.xpose.msra.mxu0 0.0
    %2474 = vmatprep.subr.mxu0 0.0
    %2475 = vmatpush1.xpose.msra.mxu0 0.0
    %2476 = vmatprep.subr.mxu0 0.0
    %2477 = vmatpush1.xpose.msra.mxu0 0.0
    %2478 = vmatprep.subr.mxu0 0.0
    %2479 = vmatpush1.xpose.msra.mxu0 0.0
    %2480 = vmatprep.subr.mxu0 0.0
    %2481 = vmatpush1.xpose.msra.mxu0 0.0
    %2482 = vmatprep.subr.mxu0 0.0
    %2483 = vmatpush1.xpose.msra.mxu0 0.0
    %2484 = vmatprep.subr.mxu0 0.0
    %2485 = vmatpush1.xpose.msra.mxu0 0.0
    %2486 = vmatprep.subr.mxu0 0.0
    %2487 = vmatpush1.xpose.msra.mxu0 0.0
    %2488 = vmatprep.subr.mxu0 0.0
    %2489 = vmatpush1.xpose.msra.mxu0 0.0
    %2490 = vmatprep.subr.mxu0 0.0
    %2491 = vmatpush1.xpose.msra.mxu0 0.0
    %2492 = vmatprep.subr.mxu0 0.0
    %2493 = vmatpush1.xpose.msra.mxu0 0.0
    %2494 = vmatprep.subr.mxu0 0.0
    %2495 = vmatpush1.xpose.msra.mxu0 0.0
    %2496 = vmatprep.subr.mxu0 0.0
    %2497 = vmatpush1.xpose.msra.mxu0 0.0
    %2498 = vmatprep.subr.mxu0 0.0
    %2499 = vmatpush1.xpose.msra.mxu0 0.0
    %2500 = vmatprep.subr.mxu0 0.0
    %2501 = vmatpush1.xpose.msra.mxu0 0.0
    %2502 = vmatprep.subr.mxu0 0.0
    %2503 = vmatpush1.xpose.msra.mxu0 0.0
    %2504 = vmatprep.subr.mxu0 0.0
    %2505 = vmatpush1.xpose.msra.mxu0 0.0
    %2506 = vmatprep.subr.mxu0 0.0
    %2507 = vmatpush1.xpose.msra.mxu0 0.0
    %2508 = vmatprep.subr.mxu0 0.0
    %2509 = vmatpush1.xpose.msra.mxu0 0.0
    %2510 = vmatprep.subr.mxu0 0.0
    %2511 = vmatpush1.xpose.msra.mxu0 0.0
    %2512 = vmatprep.subr.mxu0 0.0
    %2513 = vmatpush1.xpose.msra.mxu0 0.0
    %2514 = vmatprep.subr.mxu0 0.0
    %2515 = vmatpush1.xpose.msra.mxu0 0.0
    %2516 = vmatprep.subr.mxu0 0.0
    %2517 = vmatpush1.xpose.msra.mxu0 0.0
    %2518 = vmatprep.mubr.f32.mxu0 0.0
    %2519 = vmatmul.mubr.f32.gmra.mrb[0].mxu0 %v2450
    %v2520 = vpop.f32.mrb[0].mxu0
    %v2521 = vadd.f32 0.0, %v2520
    %v2522 = vpop.f32.mrb[0].mxu0
    %2523 = vdwg.mxu0
    %2524 = vrot.lane.b32.xlu0 %v2065, 96
    %v2525 = vpop.permute.xlu0 %2524
    %v2526 = vsel %vm204, %v2065, 0
    %v2528 = vsel %vm204, %v2525, 0
    %2530 = vmatprep.subr.mxu0 0.0
    %2531 = vmatpush1.xpose.msra.mxu0 %v2528
    %2532 = vmatprep.subr.mxu0 0.0
    %2533 = vmatpush1.xpose.msra.mxu0 0.0
    %2534 = vmatprep.subr.mxu0 0.0
    %2535 = vmatpush1.xpose.msra.mxu0 0.0
    %2536 = vmatprep.subr.mxu0 0.0
    %2537 = vmatpush1.xpose.msra.mxu0 0.0
    %2538 = vmatprep.subr.mxu0 0.0
    %2539 = vmatpush1.xpose.msra.mxu0 0.0
    %2540 = vmatprep.subr.mxu0 0.0
    %2541 = vmatpush1.xpose.msra.mxu0 0.0
    %2542 = vmatprep.subr.mxu0 0.0
    %2543 = vmatpush1.xpose.msra.mxu0 0.0
    %2544 = vmatprep.subr.mxu0 0.0
    %2545 = vmatpush1.xpose.msra.mxu0 0.0
    %2546 = vmatprep.subr.mxu0 0.0
    %2547 = vmatpush1.xpose.msra.mxu0 0.0
    %2548 = vmatprep.subr.mxu0 0.0
    %2549 = vmatpush1.xpose.msra.mxu0 0.0
    %2550 = vmatprep.subr.mxu0 0.0
    %2551 = vmatpush1.xpose.msra.mxu0 0.0
    %2552 = vmatprep.subr.mxu0 0.0
    %2553 = vmatpush1.xpose.msra.mxu0 0.0
    %2554 = vmatprep.subr.mxu0 0.0
    %2555 = vmatpush1.xpose.msra.mxu0 0.0
    %2556 = vmatprep.subr.mxu0 0.0
    %2557 = vmatpush1.xpose.msra.mxu0 0.0
    %2558 = vmatprep.subr.mxu0 0.0
    %2559 = vmatpush1.xpose.msra.mxu0 0.0
    %2560 = vmatprep.subr.mxu0 0.0
    %2561 = vmatpush1.xpose.msra.mxu0 0.0
    %2562 = vmatprep.subr.mxu0 0.0
    %2563 = vmatpush1.xpose.msra.mxu0 0.0
    %2564 = vmatprep.subr.mxu0 0.0
    %2565 = vmatpush1.xpose.msra.mxu0 0.0
    %2566 = vmatprep.subr.mxu0 0.0
    %2567 = vmatpush1.xpose.msra.mxu0 0.0
    %2568 = vmatprep.subr.mxu0 0.0
    %2569 = vmatpush1.xpose.msra.mxu0 0.0
    %2570 = vmatprep.subr.mxu0 0.0
    %2571 = vmatpush1.xpose.msra.mxu0 0.0
    %2572 = vmatprep.subr.mxu0 0.0
    %2573 = vmatpush1.xpose.msra.mxu0 0.0
    %2574 = vmatprep.subr.mxu0 0.0
    %2575 = vmatpush1.xpose.msra.mxu0 0.0
    %2576 = vmatprep.subr.mxu0 0.0
    %2577 = vmatpush1.xpose.msra.mxu0 0.0
    %2578 = vmatprep.subr.mxu0 0.0
    %2579 = vmatpush1.xpose.msra.mxu0 0.0
    %2580 = vmatprep.subr.mxu0 0.0
    %2581 = vmatpush1.xpose.msra.mxu0 0.0
    %2582 = vmatprep.subr.mxu0 0.0
    %2583 = vmatpush1.xpose.msra.mxu0 0.0
    %2584 = vmatprep.subr.mxu0 0.0
    %2585 = vmatpush1.xpose.msra.mxu0 0.0
    %2586 = vmatprep.subr.mxu0 0.0
    %2587 = vmatpush1.xpose.msra.mxu0 0.0
    %2588 = vmatprep.subr.mxu0 0.0
    %2589 = vmatpush1.xpose.msra.mxu0 0.0
    %2590 = vmatprep.subr.mxu0 0.0
    %2591 = vmatpush1.xpose.msra.mxu0 0.0
    %2592 = vmatprep.subr.mxu0 0.0
    %2593 = vmatpush1.xpose.msra.mxu0 0.0
    %2594 = vmatprep.mubr.f32.mxu0 0.0
    %2595 = vmatmul.mubr.f32.gmra.mrb[0].mxu0 %v2526
    %v2596 = vpop.f32.mrb[0].mxu0
    %v2597 = vadd.f32 0.0, %v2596
    %v2598 = vpop.f32.mrb[0].mxu0
    %2599 = vdwg.mxu0
    %2600 = vrot.lane.b32.xlu0 %v2067, 96
    %v2601 = vpop.permute.xlu0 %2600
    %v2602 = vsel %vm204, %v2067, 0
    %v2604 = vsel %vm204, %v2601, 0
    %2606 = vmatprep.subr.mxu0 0.0
    %2607 = vmatpush1.xpose.msra.mxu0 %v2604
    %2608 = vmatprep.subr.mxu0 0.0
    %2609 = vmatpush1.xpose.msra.mxu0 0.0
    %2610 = vmatprep.subr.mxu0 0.0
    %2611 = vmatpush1.xpose.msra.mxu0 0.0
    %2612 = vmatprep.subr.mxu0 0.0
    %2613 = vmatpush1.xpose.msra.mxu0 0.0
    %2614 = vmatprep.subr.mxu0 0.0
    %2615 = vmatpush1.xpose.msra.mxu0 0.0
    %2616 = vmatprep.subr.mxu0 0.0
    %2617 = vmatpush1.xpose.msra.mxu0 0.0
    %2618 = vmatprep.subr.mxu0 0.0
    %2619 = vmatpush1.xpose.msra.mxu0 0.0
    %2620 = vmatprep.subr.mxu0 0.0
    %2621 = vmatpush1.xpose.msra.mxu0 0.0
    %2622 = vmatprep.subr.mxu0 0.0
    %2623 = vmatpush1.xpose.msra.mxu0 0.0
    %2624 = vmatprep.subr.mxu0 0.0
    %2625 = vmatpush1.xpose.msra.mxu0 0.0
    %2626 = vmatprep.subr.mxu0 0.0
    %2627 = vmatpush1.xpose.msra.mxu0 0.0
    %2628 = vmatprep.subr.mxu0 0.0
    %2629 = vmatpush1.xpose.msra.mxu0 0.0
    %2630 = vmatprep.subr.mxu0 0.0
    %2631 = vmatpush1.xpose.msra.mxu0 0.0
    %2632 = vmatprep.subr.mxu0 0.0
    %2633 = vmatpush1.xpose.msra.mxu0 0.0
    %2634 = vmatprep.subr.mxu0 0.0
    %2635 = vmatpush1.xpose.msra.mxu0 0.0
    %2636 = vmatprep.subr.mxu0 0.0
    %2637 = vmatpush1.xpose.msra.mxu0 0.0
    %2638 = vmatprep.subr.mxu0 0.0
    %2639 = vmatpush1.xpose.msra.mxu0 0.0
    %2640 = vmatprep.subr.mxu0 0.0
    %2641 = vmatpush1.xpose.msra.mxu0 0.0
    %2642 = vmatprep.subr.mxu0 0.0
    %2643 = vmatpush1.xpose.msra.mxu0 0.0
    %2644 = vmatprep.subr.mxu0 0.0
    %2645 = vmatpush1.xpose.msra.mxu0 0.0
    %2646 = vmatprep.subr.mxu0 0.0
    %2647 = vmatpush1.xpose.msra.mxu0 0.0
    %2648 = vmatprep.subr.mxu0 0.0
    %2649 = vmatpush1.xpose.msra.mxu0 0.0
    %2650 = vmatprep.subr.mxu0 0.0
    %2651 = vmatpush1.xpose.msra.mxu0 0.0
    %2652 = vmatprep.subr.mxu0 0.0
    %2653 = vmatpush1.xpose.msra.mxu0 0.0
    %2654 = vmatprep.subr.mxu0 0.0
    %2655 = vmatpush1.xpose.msra.mxu0 0.0
    %2656 = vmatprep.subr.mxu0 0.0
    %2657 = vmatpush1.xpose.msra.mxu0 0.0
    %2658 = vmatprep.subr.mxu0 0.0
    %2659 = vmatpush1.xpose.msra.mxu0 0.0
    %2660 = vmatprep.subr.mxu0 0.0
    %2661 = vmatpush1.xpose.msra.mxu0 0.0
    %2662 = vmatprep.subr.mxu0 0.0
    %2663 = vmatpush1.xpose.msra.mxu0 0.0
    %2664 = vmatprep.subr.mxu0 0.0
    %2665 = vmatpush1.xpose.msra.mxu0 0.0
    %2666 = vmatprep.subr.mxu0 0.0
    %2667 = vmatpush1.xpose.msra.mxu0 0.0
    %2668 = vmatprep.subr.mxu0 0.0
    %2669 = vmatpush1.xpose.msra.mxu0 0.0
    %2670 = vmatprep.mubr.f32.mxu0 0.0
    %2671 = vmatmul.mubr.f32.gmra.mrb[0].mxu0 %v2602
    %v2672 = vpop.f32.mrb[0].mxu0
    %v2673 = vadd.f32 0.0, %v2672
    %v2674 = vpop.f32.mrb[0].mxu0
    %2675 = vdwg.mxu0
    %v2676 = vsel %vm204, %v2141, -inf
    %2677 = vmax.xlane.f32.xlu0 %v2676
    %v2678 = vpop.xlane.xlu0 %2677
    %v2679 = vsel %vm204, %v2217, -inf
    %2680 = vmax.xlane.f32.xlu0 %v2679
    %v2681 = vpop.xlane.xlu0 %2680
    %v2682 = vsel %vm204, %v2293, -inf
    %2683 = vmax.xlane.f32.xlu0 %v2682
    %v2684 = vpop.xlane.xlu0 %2683
    %v2685 = vsel %vm204, %v2369, -inf
    %2686 = vmax.xlane.f32.xlu0 %v2685
    %v2687 = vpop.xlane.xlu0 %2686
    %v2688 = vsel %vm204, %v2445, -inf
    %2689 = vmax.xlane.f32.xlu0 %v2688
    %v2690 = vpop.xlane.xlu0 %2689
    %v2691 = vsel %vm204, %v2521, -inf
    %2692 = vmax.xlane.f32.xlu0 %v2691
    %v2693 = vpop.xlane.xlu0 %2692
    %v2694 = vsel %vm204, %v2597, -inf
    %2695 = vmax.xlane.f32.xlu0 %v2694
    %v2696 = vpop.xlane.xlu0 %2695
    %v2697 = vsel %vm204, %v2673, -inf
    %2698 = vmax.xlane.f32.xlu0 %v2697
    %v2699 = vpop.xlane.xlu0 %2698
    %v2700 = vsub.f32 %v2141, %v2678
    %v2701 = vsub.f32 %v2217, %v2681
    %v2702 = vsub.f32 %v2293, %v2684
    %v2703 = vsub.f32 %v2369, %v2687
    %v2704 = vsub.f32 %v2445, %v2690
    %v2705 = vsub.f32 %v2521, %v2693
    %v2706 = vsub.f32 %v2597, %v2696
    %v2707 = vsub.f32 %v2673, %v2699
    %v2708 = vmul.f32 %v2700, 1.442695
    %v2709 = vpow.pop %v2708
    %v2710 = vmul.f32 %v2701, 1.442695
    %v2711 = vpow.pop %v2710
    %v2712 = vmul.f32 %v2702, 1.442695
    %v2713 = vpow.pop %v2712
    %v2714 = vmul.f32 %v2703, 1.442695
    %v2715 = vpow.pop %v2714
    %v2716 = vmul.f32 %v2704, 1.442695
    %v2717 = vpow.pop %v2716
    %v2718 = vmul.f32 %v2705, 1.442695
    %v2719 = vpow.pop %v2718
    %v2720 = vmul.f32 %v2706, 1.442695
    %v2721 = vpow.pop %v2720
    %v2722 = vmul.f32 %v2707, 1.442695
    %v2723 = vpow.pop %v2722
    %v2724 = vsel %vm204, %v2709, 0.0
    %2725 = vadd.xlane.f32.xlu0 %v2724
    %v2726 = vpop.xlane.xlu0 %2725
    %v2727 = vsel %vm204, %v2711, 0.0
    %2728 = vadd.xlane.f32.xlu0 %v2727
    %v2729 = vpop.xlane.xlu0 %2728
    %v2730 = vsel %vm204, %v2713, 0.0
    %2731 = vadd.xlane.f32.xlu0 %v2730
    %v2732 = vpop.xlane.xlu0 %2731
    %v2733 = vsel %vm204, %v2715, 0.0
    %2734 = vadd.xlane.f32.xlu0 %v2733
    %v2735 = vpop.xlane.xlu0 %2734
    %v2736 = vsel %vm204, %v2717, 0.0
    %2737 = vadd.xlane.f32.xlu0 %v2736
    %v2738 = vpop.xlane.xlu0 %2737
    %v2739 = vsel %vm204, %v2719, 0.0
    %2740 = vadd.xlane.f32.xlu0 %v2739
    %v2741 = vpop.xlane.xlu0 %2740
    %v2742 = vsel %vm204, %v2721, 0.0
    %2743 = vadd.xlane.f32.xlu0 %v2742
    %v2744 = vpop.xlane.xlu0 %2743
    %v2745 = vsel %vm204, %v2723, 0.0
    %2746 = vadd.xlane.f32.xlu0 %v2745
    %v2747 = vpop.xlane.xlu0 %2746
    %v2748 = vrcp.pop %v2726
    %v2749 = vrcp.pop %v2729
    %v2750 = vrcp.pop %v2732
    %v2751 = vrcp.pop %v2735
    %v2752 = vrcp.pop %v2738
    %v2753 = vrcp.pop %v2741
    %v2754 = vrcp.pop %v2744
    %v2755 = vrcp.pop %v2747
    %v2756 = vmul.f32 %v2709, %v2748
    %v2757 = vmul.f32 %v2711, %v2749
    %v2758 = vmul.f32 %v2713, %v2750
    %v2759 = vmul.f32 %v2715, %v2751
    %v2760 = vmul.f32 %v2717, %v2752
    %v2761 = vmul.f32 %v2719, %v2753
    %v2762 = vmul.f32 %v2721, %v2754
    %v2763 = vmul.f32 %v2723, %v2755
    %2764 = vrot.lane.b32.xlu0 %v2046, 64
    %v2765 = vpop.permute.xlu0 %2764
    %v2768 = vsel %vm204, %v2756, 0
    %2770 = vmatprep.subr.mxu0 0.0
    %2771 = vmatpush1.msra.mxu0 %v2765
    %2772 = vmatprep.subr.mxu0 0.0
    %2773 = vmatpush1.msra.mxu0 0.0
    %2774 = vmatprep.subr.mxu0 0.0
    %2775 = vmatpush1.msra.mxu0 0.0
    %2776 = vmatprep.subr.mxu0 0.0
    %2777 = vmatpush1.msra.mxu0 0.0
    %2778 = vmatprep.subr.mxu0 0.0
    %2779 = vmatpush1.msra.mxu0 0.0
    %2780 = vmatprep.subr.mxu0 0.0
    %2781 = vmatpush1.msra.mxu0 0.0
    %2782 = vmatprep.subr.mxu0 0.0
    %2783 = vmatpush1.msra.mxu0 0.0
    %2784 = vmatprep.subr.mxu0 0.0
    %2785 = vmatpush1.msra.mxu0 0.0
    %2786 = vmatprep.subr.mxu0 0.0
    %2787 = vmatpush1.msra.mxu0 0.0
    %2788 = vmatprep.subr.mxu0 0.0
    %2789 = vmatpush1.msra.mxu0 0.0
    %2790 = vmatprep.subr.mxu0 0.0
    %2791 = vmatpush1.msra.mxu0 0.0
    %2792 = vmatprep.subr.mxu0 0.0
    %2793 = vmatpush1.msra.mxu0 0.0
    %2794 = vmatprep.subr.mxu0 0.0
    %2795 = vmatpush1.msra.mxu0 0.0
    %2796 = vmatprep.subr.mxu0 0.0
    %2797 = vmatpush1.msra.mxu0 0.0
    %2798 = vmatprep.subr.mxu0 0.0
    %2799 = vmatpush1.msra.mxu0 0.0
    %2800 = vmatprep.subr.mxu0 0.0
    %2801 = vmatpush1.msra.mxu0 0.0
    %2802 = vmatprep.subr.mxu0 0.0
    %2803 = vmatpush1.msra.mxu0 0.0
    %2804 = vmatprep.subr.mxu0 0.0
    %2805 = vmatpush1.msra.mxu0 0.0
    %2806 = vmatprep.subr.mxu0 0.0
    %2807 = vmatpush1.msra.mxu0 0.0
    %2808 = vmatprep.subr.mxu0 0.0
    %2809 = vmatpush1.msra.mxu0 0.0
    %2810 = vmatprep.subr.mxu0 0.0
    %2811 = vmatpush1.msra.mxu0 0.0
    %2812 = vmatprep.subr.mxu0 0.0
    %2813 = vmatpush1.msra.mxu0 0.0
    %2814 = vmatprep.subr.mxu0 0.0
    %2815 = vmatpush1.msra.mxu0 0.0
    %2816 = vmatprep.subr.mxu0 0.0
    %2817 = vmatpush1.msra.mxu0 0.0
    %2818 = vmatprep.subr.mxu0 0.0
    %2819 = vmatpush1.msra.mxu0 0.0
    %2820 = vmatprep.subr.mxu0 0.0
    %2821 = vmatpush1.msra.mxu0 0.0
    %2822 = vmatprep.subr.mxu0 0.0
    %2823 = vmatpush1.msra.mxu0 0.0
    %2824 = vmatprep.subr.mxu0 0.0
    %2825 = vmatpush1.msra.mxu0 0.0
    %2826 = vmatprep.subr.mxu0 0.0
    %2827 = vmatpush1.msra.mxu0 0.0
    %2828 = vmatprep.subr.mxu0 0.0
    %2829 = vmatpush1.msra.mxu0 0.0
    %2830 = vmatprep.subr.mxu0 0.0
    %2831 = vmatpush1.msra.mxu0 0.0
    %2832 = vmatprep.subr.mxu0 0.0
    %2833 = vmatpush1.msra.mxu0 0.0
    %2834 = vmatprep.mubr.f32.mxu0 0.0
    %2835 = vmatmul.mubr.f32.gmra.mrb[0].mxu0 %v2768
    %v2836 = vpop.f32.mrb[0].mxu0
    %v2837 = vadd.f32 0.0, %v2836
    %v2838 = vpop.f32.mrb[0].mxu0
    %2839 = vdwg.mxu0
    %2840 = vrot.lane.b32.xlu0 %v2051, 64
    %v2841 = vpop.permute.xlu0 %2840
    %v2844 = vsel %vm204, %v2757, 0
    %2846 = vmatprep.subr.mxu0 0.0
    %2847 = vmatpush1.msra.mxu0 %v2841
    %2848 = vmatprep.subr.mxu0 0.0
    %2849 = vmatpush1.msra.mxu0 0.0
    %2850 = vmatprep.subr.mxu0 0.0
    %2851 = vmatpush1.msra.mxu0 0.0
    %2852 = vmatprep.subr.mxu0 0.0
    %2853 = vmatpush1.msra.mxu0 0.0
    %2854 = vmatprep.subr.mxu0 0.0
    %2855 = vmatpush1.msra.mxu0 0.0
    %2856 = vmatprep.subr.mxu0 0.0
    %2857 = vmatpush1.msra.mxu0 0.0
    %2858 = vmatprep.subr.mxu0 0.0
    %2859 = vmatpush1.msra.mxu0 0.0
    %2860 = vmatprep.subr.mxu0 0.0
    %2861 = vmatpush1.msra.mxu0 0.0
    %2862 = vmatprep.subr.mxu0 0.0
    %2863 = vmatpush1.msra.mxu0 0.0
    %2864 = vmatprep.subr.mxu0 0.0
    %2865 = vmatpush1.msra.mxu0 0.0
    %2866 = vmatprep.subr.mxu0 0.0
    %2867 = vmatpush1.msra.mxu0 0.0
    %2868 = vmatprep.subr.mxu0 0.0
    %2869 = vmatpush1.msra.mxu0 0.0
    %2870 = vmatprep.subr.mxu0 0.0
    %2871 = vmatpush1.msra.mxu0 0.0
    %2872 = vmatprep.subr.mxu0 0.0
    %2873 = vmatpush1.msra.mxu0 0.0
    %2874 = vmatprep.subr.mxu0 0.0
    %2875 = vmatpush1.msra.mxu0 0.0
    %2876 = vmatprep.subr.mxu0 0.0
    %2877 = vmatpush1.msra.mxu0 0.0
    %2878 = vmatprep.subr.mxu0 0.0
    %2879 = vmatpush1.msra.mxu0 0.0
    %2880 = vmatprep.subr.mxu0 0.0
    %2881 = vmatpush1.msra.mxu0 0.0
    %2882 = vmatprep.subr.mxu0 0.0
    %2883 = vmatpush1.msra.mxu0 0.0
    %2884 = vmatprep.subr.mxu0 0.0
    %2885 = vmatpush1.msra.mxu0 0.0
    %2886 = vmatprep.subr.mxu0 0.0
    %2887 = vmatpush1.msra.mxu0 0.0
    %2888 = vmatprep.subr.mxu0 0.0
    %2889 = vmatpush1.msra.mxu0 0.0
    %2890 = vmatprep.subr.mxu0 0.0
    %2891 = vmatpush1.msra.mxu0 0.0
    %2892 = vmatprep.subr.mxu0 0.0
    %2893 = vmatpush1.msra.mxu0 0.0
    %2894 = vmatprep.subr.mxu0 0.0
    %2895 = vmatpush1.msra.mxu0 0.0
    %2896 = vmatprep.subr.mxu0 0.0
    %2897 = vmatpush1.msra.mxu0 0.0
    %2898 = vmatprep.subr.mxu0 0.0
    %2899 = vmatpush1.msra.mxu0 0.0
    %2900 = vmatprep.subr.mxu0 0.0
    %2901 = vmatpush1.msra.mxu0 0.0
    %2902 = vmatprep.subr.mxu0 0.0
    %2903 = vmatpush1.msra.mxu0 0.0
    %2904 = vmatprep.subr.mxu0 0.0
    %2905 = vmatpush1.msra.mxu0 0.0
    %2906 = vmatprep.subr.mxu0 0.0
    %2907 = vmatpush1.msra.mxu0 0.0
    %2908 = vmatprep.subr.mxu0 0.0
    %2909 = vmatpush1.msra.mxu0 0.0
    %2910 = vmatprep.mubr.f32.mxu0 0.0
    %2911 = vmatmul.mubr.f32.gmra.mrb[0].mxu0 %v2844
    %v2912 = vpop.f32.mrb[0].mxu0
    %v2913 = vadd.f32 0.0, %v2912
    %v2914 = vpop.f32.mrb[0].mxu0
    %2915 = vdwg.mxu0
    %2916 = vrot.lane.b32.xlu0 %v2057, 64
    %v2917 = vpop.permute.xlu0 %2916
    %v2920 = vsel %vm204, %v2758, 0
    %2922 = vmatprep.subr.mxu0 0.0
    %2923 = vmatpush1.msra.mxu0 %v2917
    %2924 = vmatprep.subr.mxu0 0.0
    %2925 = vmatpush1.msra.mxu0 0.0
    %2926 = vmatprep.subr.mxu0 0.0
    %2927 = vmatpush1.msra.mxu0 0.0
    %2928 = vmatprep.subr.mxu0 0.0
    %2929 = vmatpush1.msra.mxu0 0.0
    %2930 = vmatprep.subr.mxu0 0.0
    %2931 = vmatpush1.msra.mxu0 0.0
    %2932 = vmatprep.subr.mxu0 0.0
    %2933 = vmatpush1.msra.mxu0 0.0
    %2934 = vmatprep.subr.mxu0 0.0
    %2935 = vmatpush1.msra.mxu0 0.0
    %2936 = vmatprep.subr.mxu0 0.0
    %2937 = vmatpush1.msra.mxu0 0.0
    %2938 = vmatprep.subr.mxu0 0.0
    %2939 = vmatpush1.msra.mxu0 0.0
    %2940 = vmatprep.subr.mxu0 0.0
    %2941 = vmatpush1.msra.mxu0 0.0
    %2942 = vmatprep.subr.mxu0 0.0
    %2943 = vmatpush1.msra.mxu0 0.0
    %2944 = vmatprep.subr.mxu0 0.0
    %2945 = vmatpush1.msra.mxu0 0.0
    %2946 = vmatprep.subr.mxu0 0.0
    %2947 = vmatpush1.msra.mxu0 0.0
    %2948 = vmatprep.subr.mxu0 0.0
    %2949 = vmatpush1.msra.mxu0 0.0
    %2950 = vmatprep.subr.mxu0 0.0
    %2951 = vmatpush1.msra.mxu0 0.0
    %2952 = vmatprep.subr.mxu0 0.0
    %2953 = vmatpush1.msra.mxu0 0.0
    %2954 = vmatprep.subr.mxu0 0.0
    %2955 = vmatpush1.msra.mxu0 0.0
    %2956 = vmatprep.subr.mxu0 0.0
    %2957 = vmatpush1.msra.mxu0 0.0
    %2958 = vmatprep.subr.mxu0 0.0
    %2959 = vmatpush1.msra.mxu0 0.0
    %2960 = vmatprep.subr.mxu0 0.0
    %2961 = vmatpush1.msra.mxu0 0.0
    %2962 = vmatprep.subr.mxu0 0.0
    %2963 = vmatpush1.msra.mxu0 0.0
    %2964 = vmatprep.subr.mxu0 0.0
    %2965 = vmatpush1.msra.mxu0 0.0
    %2966 = vmatprep.subr.mxu0 0.0
    %2967 = vmatpush1.msra.mxu0 0.0
    %2968 = vmatprep.subr.mxu0 0.0
    %2969 = vmatpush1.msra.mxu0 0.0
    %2970 = vmatprep.subr.mxu0 0.0
    %2971 = vmatpush1.msra.mxu0 0.0
    %2972 = vmatprep.subr.mxu0 0.0
    %2973 = vmatpush1.msra.mxu0 0.0
    %2974 = vmatprep.subr.mxu0 0.0
    %2975 = vmatpush1.msra.mxu0 0.0
    %2976 = vmatprep.subr.mxu0 0.0
    %2977 = vmatpush1.msra.mxu0 0.0
    %2978 = vmatprep.subr.mxu0 0.0
    %2979 = vmatpush1.msra.mxu0 0.0
    %2980 = vmatprep.subr.mxu0 0.0
    %2981 = vmatpush1.msra.mxu0 0.0
    %2982 = vmatprep.subr.mxu0 0.0
    %2983 = vmatpush1.msra.mxu0 0.0
    %2984 = vmatprep.subr.mxu0 0.0
    %2985 = vmatpush1.msra.mxu0 0.0
    %2986 = vmatprep.mubr.f32.mxu0 0.0
    %2987 = vmatmul.mubr.f32.gmra.mrb[0].mxu0 %v2920
    %v2988 = vpop.f32.mrb[0].mxu0
    %v2989 = vadd.f32 0.0, %v2988
    %v2990 = vpop.f32.mrb[0].mxu0
    %2991 = vdwg.mxu0
    %2992 = vrot.lane.b32.xlu0 %v2059, 64
    %v2993 = vpop.permute.xlu0 %2992
    %v2996 = vsel %vm204, %v2759, 0
    %2998 = vmatprep.subr.mxu0 0.0
    %2999 = vmatpush1.msra.mxu0 %v2993
    %3000 = vmatprep.subr.mxu0 0.0
    %3001 = vmatpush1.msra.mxu0 0.0
    %3002 = vmatprep.subr.mxu0 0.0
    %3003 = vmatpush1.msra.mxu0 0.0
    %3004 = vmatprep.subr.mxu0 0.0
    %3005 = vmatpush1.msra.mxu0 0.0
    %3006 = vmatprep.subr.mxu0 0.0
    %3007 = vmatpush1.msra.mxu0 0.0
    %3008 = vmatprep.subr.mxu0 0.0
    %3009 = vmatpush1.msra.mxu0 0.0
    %3010 = vmatprep.subr.mxu0 0.0
    %3011 = vmatpush1.msra.mxu0 0.0
    %3012 = vmatprep.subr.mxu0 0.0
    %3013 = vmatpush1.msra.mxu0 0.0
    %3014 = vmatprep.subr.mxu0 0.0
    %3015 = vmatpush1.msra.mxu0 0.0
    %3016 = vmatprep.subr.mxu0 0.0
    %3017 = vmatpush1.msra.mxu0 0.0
    %3018 = vmatprep.subr.mxu0 0.0
    %3019 = vmatpush1.msra.mxu0 0.0
    %3020 = vmatprep.subr.mxu0 0.0
    %3021 = vmatpush1.msra.mxu0 0.0
    %3022 = vmatprep.subr.mxu0 0.0
    %3023 = vmatpush1.msra.mxu0 0.0
    %3024 = vmatprep.subr.mxu0 0.0
    %3025 = vmatpush1.msra.mxu0 0.0
    %3026 = vmatprep.subr.mxu0 0.0
    %3027 = vmatpush1.msra.mxu0 0.0
    %3028 = vmatprep.subr.mxu0 0.0
    %3029 = vmatpush1.msra.mxu0 0.0
    %3030 = vmatprep.subr.mxu0 0.0
    %3031 = vmatpush1.msra.mxu0 0.0
    %3032 = vmatprep.subr.mxu0 0.0
    %3033 = vmatpush1.msra.mxu0 0.0
    %3034 = vmatprep.subr.mxu0 0.0
    %3035 = vmatpush1.msra.mxu0 0.0
    %3036 = vmatprep.subr.mxu0 0.0
    %3037 = vmatpush1.msra.mxu0 0.0
    %3038 = vmatprep.subr.mxu0 0.0
    %3039 = vmatpush1.msra.mxu0 0.0
    %3040 = vmatprep.subr.mxu0 0.0
    %3041 = vmatpush1.msra.mxu0 0.0
    %3042 = vmatprep.subr.mxu0 0.0
    %3043 = vmatpush1.msra.mxu0 0.0
    %3044 = vmatprep.subr.mxu0 0.0
    %3045 = vmatpush1.msra.mxu0 0.0
    %3046 = vmatprep.subr.mxu0 0.0
    %3047 = vmatpush1.msra.mxu0 0.0
    %3048 = vmatprep.subr.mxu0 0.0
    %3049 = vmatpush1.msra.mxu0 0.0
    %3050 = vmatprep.subr.mxu0 0.0
    %3051 = vmatpush1.msra.mxu0 0.0
    %3052 = vmatprep.subr.mxu0 0.0
    %3053 = vmatpush1.msra.mxu0 0.0
    %3054 = vmatprep.subr.mxu0 0.0
    %3055 = vmatpush1.msra.mxu0 0.0
    %3056 = vmatprep.subr.mxu0 0.0
    %3057 = vmatpush1.msra.mxu0 0.0
    %3058 = vmatprep.subr.mxu0 0.0
    %3059 = vmatpush1.msra.mxu0 0.0
    %3060 = vmatprep.subr.mxu0 0.0
    %3061 = vmatpush1.msra.mxu0 0.0
    %3062 = vmatprep.mubr.f32.mxu0 0.0
    %3063 = vmatmul.mubr.f32.gmra.mrb[0].mxu0 %v2996
    %v3064 = vpop.f32.mrb[0].mxu0
    %v3065 = vadd.f32 0.0, %v3064
    %v3066 = vpop.f32.mrb[0].mxu0
    %3067 = vdwg.mxu0
    %3068 = vrot.lane.b32.xlu0 %v2061, 64
    %v3069 = vpop.permute.xlu0 %3068
    %v3072 = vsel %vm204, %v2760, 0
    %3074 = vmatprep.subr.mxu0 0.0
    %3075 = vmatpush1.msra.mxu0 %v3069
    %3076 = vmatprep.subr.mxu0 0.0
    %3077 = vmatpush1.msra.mxu0 0.0
    %3078 = vmatprep.subr.mxu0 0.0
    %3079 = vmatpush1.msra.mxu0 0.0
    %3080 = vmatprep.subr.mxu0 0.0
    %3081 = vmatpush1.msra.mxu0 0.0
    %3082 = vmatprep.subr.mxu0 0.0
    %3083 = vmatpush1.msra.mxu0 0.0
    %3084 = vmatprep.subr.mxu0 0.0
    %3085 = vmatpush1.msra.mxu0 0.0
    %3086 = vmatprep.subr.mxu0 0.0
    %3087 = vmatpush1.msra.mxu0 0.0
    %3088 = vmatprep.subr.mxu0 0.0
    %3089 = vmatpush1.msra.mxu0 0.0
    %3090 = vmatprep.subr.mxu0 0.0
    %3091 = vmatpush1.msra.mxu0 0.0
    %3092 = vmatprep.subr.mxu0 0.0
    %3093 = vmatpush1.msra.mxu0 0.0
    %3094 = vmatprep.subr.mxu0 0.0
    %3095 = vmatpush1.msra.mxu0 0.0
    %3096 = vmatprep.subr.mxu0 0.0
    %3097 = vmatpush1.msra.mxu0 0.0
    %3098 = vmatprep.subr.mxu0 0.0
    %3099 = vmatpush1.msra.mxu0 0.0
    %3100 = vmatprep.subr.mxu0 0.0
    %3101 = vmatpush1.msra.mxu0 0.0
    %3102 = vmatprep.subr.mxu0 0.0
    %3103 = vmatpush1.msra.mxu0 0.0
    %3104 = vmatprep.subr.mxu0 0.0
    %3105 = vmatpush1.msra.mxu0 0.0
    %3106 = vmatprep.subr.mxu0 0.0
    %3107 = vmatpush1.msra.mxu0 0.0
    %3108 = vmatprep.subr.mxu0 0.0
    %3109 = vmatpush1.msra.mxu0 0.0
    %3110 = vmatprep.subr.mxu0 0.0
    %3111 = vmatpush1.msra.mxu0 0.0
    %3112 = vmatprep.subr.mxu0 0.0
    %3113 = vmatpush1.msra.mxu0 0.0
    %3114 = vmatprep.subr.mxu0 0.0
    %3115 = vmatpush1.msra.mxu0 0.0
    %3116 = vmatprep.subr.mxu0 0.0
    %3117 = vmatpush1.msra.mxu0 0.0
    %3118 = vmatprep.subr.mxu0 0.0
    %3119 = vmatpush1.msra.mxu0 0.0
    %3120 = vmatprep.subr.mxu0 0.0
    %3121 = vmatpush1.msra.mxu0 0.0
    %3122 = vmatprep.subr.mxu0 0.0
    %3123 = vmatpush1.msra.mxu0 0.0
    %3124 = vmatprep.subr.mxu0 0.0
    %3125 = vmatpush1.msra.mxu0 0.0
    %3126 = vmatprep.subr.mxu0 0.0
    %3127 = vmatpush1.msra.mxu0 0.0
    %3128 = vmatprep.subr.mxu0 0.0
    %3129 = vmatpush1.msra.mxu0 0.0
    %3130 = vmatprep.subr.mxu0 0.0
    %3131 = vmatpush1.msra.mxu0 0.0
    %3132 = vmatprep.subr.mxu0 0.0
    %3133 = vmatpush1.msra.mxu0 0.0
    %3134 = vmatprep.subr.mxu0 0.0
    %3135 = vmatpush1.msra.mxu0 0.0
    %3136 = vmatprep.subr.mxu0 0.0
    %3137 = vmatpush1.msra.mxu0 0.0
    %3138 = vmatprep.mubr.f32.mxu0 0.0
    %3139 = vmatmul.mubr.f32.gmra.mrb[0].mxu0 %v3072
    %v3140 = vpop.f32.mrb[0].mxu0
    %v3141 = vadd.f32 0.0, %v3140
    %v3142 = vpop.f32.mrb[0].mxu0
    %3143 = vdwg.mxu0
    %3144 = vrot.lane.b32.xlu0 %v2063, 64
    %v3145 = vpop.permute.xlu0 %3144
    %v3148 = vsel %vm204, %v2761, 0
    %3150 = vmatprep.subr.mxu0 0.0
    %3151 = vmatpush1.msra.mxu0 %v3145
    %3152 = vmatprep.subr.mxu0 0.0
    %3153 = vmatpush1.msra.mxu0 0.0
    %3154 = vmatprep.subr.mxu0 0.0
    %3155 = vmatpush1.msra.mxu0 0.0
    %3156 = vmatprep.subr.mxu0 0.0
    %3157 = vmatpush1.msra.mxu0 0.0
    %3158 = vmatprep.subr.mxu0 0.0
    %3159 = vmatpush1.msra.mxu0 0.0
    %3160 = vmatprep.subr.mxu0 0.0
    %3161 = vmatpush1.msra.mxu0 0.0
    %3162 = vmatprep.subr.mxu0 0.0
    %3163 = vmatpush1.msra.mxu0 0.0
    %3164 = vmatprep.subr.mxu0 0.0
    %3165 = vmatpush1.msra.mxu0 0.0
    %3166 = vmatprep.subr.mxu0 0.0
    %3167 = vmatpush1.msra.mxu0 0.0
    %3168 = vmatprep.subr.mxu0 0.0
    %3169 = vmatpush1.msra.mxu0 0.0
    %3170 = vmatprep.subr.mxu0 0.0
    %3171 = vmatpush1.msra.mxu0 0.0
    %3172 = vmatprep.subr.mxu0 0.0
    %3173 = vmatpush1.msra.mxu0 0.0
    %3174 = vmatprep.subr.mxu0 0.0
    %3175 = vmatpush1.msra.mxu0 0.0
    %3176 = vmatprep.subr.mxu0 0.0
    %3177 = vmatpush1.msra.mxu0 0.0
    %3178 = vmatprep.subr.mxu0 0.0
    %3179 = vmatpush1.msra.mxu0 0.0
    %3180 = vmatprep.subr.mxu0 0.0
    %3181 = vmatpush1.msra.mxu0 0.0
    %3182 = vmatprep.subr.mxu0 0.0
    %3183 = vmatpush1.msra.mxu0 0.0
    %3184 = vmatprep.subr.mxu0 0.0
    %3185 = vmatpush1.msra.mxu0 0.0
    %3186 = vmatprep.subr.mxu0 0.0
    %3187 = vmatpush1.msra.mxu0 0.0
    %3188 = vmatprep.subr.mxu0 0.0
    %3189 = vmatpush1.msra.mxu0 0.0
    %3190 = vmatprep.subr.mxu0 0.0
    %3191 = vmatpush1.msra.mxu0 0.0
    %3192 = vmatprep.subr.mxu0 0.0
    %3193 = vmatpush1.msra.mxu0 0.0
    %3194 = vmatprep.subr.mxu0 0.0
    %3195 = vmatpush1.msra.mxu0 0.0
    %3196 = vmatprep.subr.mxu0 0.0
    %3197 = vmatpush1.msra.mxu0 0.0
    %3198 = vmatprep.subr.mxu0 0.0
    %3199 = vmatpush1.msra.mxu0 0.0
    %3200 = vmatprep.subr.mxu0 0.0
    %3201 = vmatpush1.msra.mxu0 0.0
    %3202 = vmatprep.subr.mxu0 0.0
    %3203 = vmatpush1.msra.mxu0 0.0
    %3204 = vmatprep.subr.mxu0 0.0
    %3205 = vmatpush1.msra.mxu0 0.0
    %3206 = vmatprep.subr.mxu0 0.0
    %3207 = vmatpush1.msra.mxu0 0.0
    %3208 = vmatprep.subr.mxu0 0.0
    %3209 = vmatpush1.msra.mxu0 0.0
    %3210 = vmatprep.subr.mxu0 0.0
    %3211 = vmatpush1.msra.mxu0 0.0
    %3212 = vmatprep.subr.mxu0 0.0
    %3213 = vmatpush1.msra.mxu0 0.0
    %3214 = vmatprep.mubr.f32.mxu0 0.0
    %3215 = vmatmul.mubr.f32.gmra.mrb[0].mxu0 %v3148
    %v3216 = vpop.f32.mrb[0].mxu0
    %v3217 = vadd.f32 0.0, %v3216
    %v3218 = vpop.f32.mrb[0].mxu0
    %3219 = vdwg.mxu0
    %3220 = vrot.lane.b32.xlu0 %v2065, 64
    %v3221 = vpop.permute.xlu0 %3220
    %v3224 = vsel %vm204, %v2762, 0
    %3226 = vmatprep.subr.mxu0 0.0
    %3227 = vmatpush1.msra.mxu0 %v3221
    %3228 = vmatprep.subr.mxu0 0.0
    %3229 = vmatpush1.msra.mxu0 0.0
    %3230 = vmatprep.subr.mxu0 0.0
    %3231 = vmatpush1.msra.mxu0 0.0
    %3232 = vmatprep.subr.mxu0 0.0
    %3233 = vmatpush1.msra.mxu0 0.0
    %3234 = vmatprep.subr.mxu0 0.0
    %3235 = vmatpush1.msra.mxu0 0.0
    %3236 = vmatprep.subr.mxu0 0.0
    %3237 = vmatpush1.msra.mxu0 0.0
    %3238 = vmatprep.subr.mxu0 0.0
    %3239 = vmatpush1.msra.mxu0 0.0
    %3240 = vmatprep.subr.mxu0 0.0
    %3241 = vmatpush1.msra.mxu0 0.0
    %3242 = vmatprep.subr.mxu0 0.0
    %3243 = vmatpush1.msra.mxu0 0.0
    %3244 = vmatprep.subr.mxu0 0.0
    %3245 = vmatpush1.msra.mxu0 0.0
    %3246 = vmatprep.subr.mxu0 0.0
    %3247 = vmatpush1.msra.mxu0 0.0
    %3248 = vmatprep.subr.mxu0 0.0
    %3249 = vmatpush1.msra.mxu0 0.0
    %3250 = vmatprep.subr.mxu0 0.0
    %3251 = vmatpush1.msra.mxu0 0.0
    %3252 = vmatprep.subr.mxu0 0.0
    %3253 = vmatpush1.msra.mxu0 0.0
    %3254 = vmatprep.subr.mxu0 0.0
    %3255 = vmatpush1.msra.mxu0 0.0
    %3256 = vmatprep.subr.mxu0 0.0
    %3257 = vmatpush1.msra.mxu0 0.0
    %3258 = vmatprep.subr.mxu0 0.0
    %3259 = vmatpush1.msra.mxu0 0.0
    %3260 = vmatprep.subr.mxu0 0.0
    %3261 = vmatpush1.msra.mxu0 0.0
    %3262 = vmatprep.subr.mxu0 0.0
    %3263 = vmatpush1.msra.mxu0 0.0
    %3264 = vmatprep.subr.mxu0 0.0
    %3265 = vmatpush1.msra.mxu0 0.0
    %3266 = vmatprep.subr.mxu0 0.0
    %3267 = vmatpush1.msra.mxu0 0.0
    %3268 = vmatprep.subr.mxu0 0.0
    %3269 = vmatpush1.msra.mxu0 0.0
    %3270 = vmatprep.subr.mxu0 0.0
    %3271 = vmatpush1.msra.mxu0 0.0
    %3272 = vmatprep.subr.mxu0 0.0
    %3273 = vmatpush1.msra.mxu0 0.0
    %3274 = vmatprep.subr.mxu0 0.0
    %3275 = vmatpush1.msra.mxu0 0.0
    %3276 = vmatprep.subr.mxu0 0.0
    %3277 = vmatpush1.msra.mxu0 0.0
    %3278 = vmatprep.subr.mxu0 0.0
    %3279 = vmatpush1.msra.mxu0 0.0
    %3280 = vmatprep.subr.mxu0 0.0
    %3281 = vmatpush1.msra.mxu0 0.0
    %3282 = vmatprep.subr.mxu0 0.0
    %3283 = vmatpush1.msra.mxu0 0.0
    %3284 = vmatprep.subr.mxu0 0.0
    %3285 = vmatpush1.msra.mxu0 0.0
    %3286 = vmatprep.subr.mxu0 0.0
    %3287 = vmatpush1.msra.mxu0 0.0
    %3288 = vmatprep.subr.mxu0 0.0
    %3289 = vmatpush1.msra.mxu0 0.0
    %3290 = vmatprep.mubr.f32.mxu0 0.0
    %3291 = vmatmul.mubr.f32.gmra.mrb[0].mxu0 %v3224
    %v3292 = vpop.f32.mrb[0].mxu0
    %v3293 = vadd.f32 0.0, %v3292
    %v3294 = vpop.f32.mrb[0].mxu0
    %3295 = vdwg.mxu0
    %3296 = vrot.lane.b32.xlu0 %v2067, 64
    %v3297 = vpop.permute.xlu0 %3296
    %v3300 = vsel %vm204, %v2763, 0
    %3302 = vmatprep.subr.mxu0 0.0
    %3303 = vmatpush1.msra.mxu0 %v3297
    %3304 = vmatprep.subr.mxu0 0.0
    %3305 = vmatpush1.msra.mxu0 0.0
    %3306 = vmatprep.subr.mxu0 0.0
    %3307 = vmatpush1.msra.mxu0 0.0
    %3308 = vmatprep.subr.mxu0 0.0
    %3309 = vmatpush1.msra.mxu0 0.0
    %3310 = vmatprep.subr.mxu0 0.0
    %3311 = vmatpush1.msra.mxu0 0.0
    %3312 = vmatprep.subr.mxu0 0.0
    %3313 = vmatpush1.msra.mxu0 0.0
    %3314 = vmatprep.subr.mxu0 0.0
    %3315 = vmatpush1.msra.mxu0 0.0
    %3316 = vmatprep.subr.mxu0 0.0
    %3317 = vmatpush1.msra.mxu0 0.0
    %3318 = vmatprep.subr.mxu0 0.0
    %3319 = vmatpush1.msra.mxu0 0.0
    %3320 = vmatprep.subr.mxu0 0.0
    %3321 = vmatpush1.msra.mxu0 0.0
    %3322 = vmatprep.subr.mxu0 0.0
    %3323 = vmatpush1.msra.mxu0 0.0
    %3324 = vmatprep.subr.mxu0 0.0
    %3325 = vmatpush1.msra.mxu0 0.0
    %3326 = vmatprep.subr.mxu0 0.0
    %3327 = vmatpush1.msra.mxu0 0.0
    %3328 = vmatprep.subr.mxu0 0.0
    %3329 = vmatpush1.msra.mxu0 0.0
    %3330 = vmatprep.subr.mxu0 0.0
    %3331 = vmatpush1.msra.mxu0 0.0
    %3332 = vmatprep.subr.mxu0 0.0
    %3333 = vmatpush1.msra.mxu0 0.0
    %3334 = vmatprep.subr.mxu0 0.0
    %3335 = vmatpush1.msra.mxu0 0.0
    %3336 = vmatprep.subr.mxu0 0.0
    %3337 = vmatpush1.msra.mxu0 0.0
    %3338 = vmatprep.subr.mxu0 0.0
    %3339 = vmatpush1.msra.mxu0 0.0
    %3340 = vmatprep.subr.mxu0 0.0
    %3341 = vmatpush1.msra.mxu0 0.0
    %3342 = vmatprep.subr.mxu0 0.0
    %3343 = vmatpush1.msra.mxu0 0.0
    %3344 = vmatprep.subr.mxu0 0.0
    %3345 = vmatpush1.msra.mxu0 0.0
    %3346 = vmatprep.subr.mxu0 0.0
    %3347 = vmatpush1.msra.mxu0 0.0
    %3348 = vmatprep.subr.mxu0 0.0
    %3349 = vmatpush1.msra.mxu0 0.0
    %3350 = vmatprep.subr.mxu0 0.0
    %3351 = vmatpush1.msra.mxu0 0.0
    %3352 = vmatprep.subr.mxu0 0.0
    %3353 = vmatpush1.msra.mxu0 0.0
    %3354 = vmatprep.subr.mxu0 0.0
    %3355 = vmatpush1.msra.mxu0 0.0
    %3356 = vmatprep.subr.mxu0 0.0
    %3357 = vmatpush1.msra.mxu0 0.0
    %3358 = vmatprep.subr.mxu0 0.0
    %3359 = vmatpush1.msra.mxu0 0.0
    %3360 = vmatprep.subr.mxu0 0.0
    %3361 = vmatpush1.msra.mxu0 0.0
    %3362 = vmatprep.subr.mxu0 0.0
    %3363 = vmatpush1.msra.mxu0 0.0
    %3364 = vmatprep.subr.mxu0 0.0
    %3365 = vmatpush1.msra.mxu0 0.0
    %3366 = vmatprep.mubr.f32.mxu0 0.0
    %3367 = vmatmul.mubr.f32.gmra.mrb[0].mxu0 %v3300
    %v3368 = vpop.f32.mrb[0].mxu0
    %v3369 = vadd.f32 0.0, %v3368
    %v3370 = vpop.f32.mrb[0].mxu0
    %3371 = vdwg.mxu0
    %3374 = vrot.lane.b32.xlu0 %v2989, 8
    %v3375 = vpop.permute.xlu0 %3374
    %3376 = vrot.lane.b32.xlu0 %v3065, 8
    %v3377 = vpop.permute.xlu0 %3376
    %3382 = vrot.lane.b32.xlu0 %v3141, 16
    %v3383 = vpop.permute.xlu0 %3382
    %3384 = vrot.lane.b32.xlu0 %v3217, 16
    %v3385 = vpop.permute.xlu0 %3384
    %3390 = vrot.lane.b32.xlu0 %v3293, 24
    %v3391 = vpop.permute.xlu0 %3390
    %3392 = vrot.lane.b32.xlu0 %v3369, 24
    %v3393 = vpop.permute.xlu0 %3392
    %v3396 = vsel %vm204, %v2837, %v3375
    %v3397 = vsel %vm204, %v2913, %v3377
    %v3398 = vsel %vm1533, %v3396, %v3383
    %v3399 = vsel %vm1533, %v3397, %v3385
    %v3400 = vsel %vm1536, %v3398, %v3391
    %v3401 = vsel %vm1536, %v3399, %v3393
    %s3402 = scalar_lea.vmem %s4, 32
    %v3403 = vld [vmem:[%s3402] sm:$0xff]
    %v3404 = vld [vmem:[%s3402 + $0x8] sm:$0xff]
    %v3405 = vld [vmem:[%s3402 + $0x10] sm:$0xff]
    %v3406 = vld [vmem:[%s3402 + $0x18] sm:$0xff]
    %v3408 = vsel %vm59, %v3400, 0
    %v3411 = vsel %vm59, %v3401, 0
    %3413 = vmatprep.subr.mxu0 0.0
    %3414 = vmatpush1.msra.mxu0 %v3403
    %3415 = vmatprep.subr.mxu0 0.0
    %3416 = vmatpush1.msra.mxu0 %v3404
    %3417 = vmatprep.subr.mxu0 0.0
    %3418 = vmatpush1.msra.mxu0 %v3405
    %3419 = vmatprep.subr.mxu0 0.0
    %3420 = vmatpush1.msra.mxu0 %v3406
    %3421 = vmatprep.subr.mxu0 0.0
    %3422 = vmatpush1.msra.mxu0 0.0
    %3423 = vmatprep.subr.mxu0 0.0
    %3424 = vmatpush1.msra.mxu0 0.0
    %3425 = vmatprep.subr.mxu0 0.0
    %3426 = vmatpush1.msra.mxu0 0.0
    %3427 = vmatprep.subr.mxu0 0.0
    %3428 = vmatpush1.msra.mxu0 0.0
    %3429 = vmatprep.subr.mxu0 0.0
    %3430 = vmatpush1.msra.mxu0 0.0
    %3431 = vmatprep.subr.mxu0 0.0
    %3432 = vmatpush1.msra.mxu0 0.0
    %3433 = vmatprep.subr.mxu0 0.0
    %3434 = vmatpush1.msra.mxu0 0.0
    %3435 = vmatprep.subr.mxu0 0.0
    %3436 = vmatpush1.msra.mxu0 0.0
    %3437 = vmatprep.subr.mxu0 0.0
    %3438 = vmatpush1.msra.mxu0 0.0
    %3439 = vmatprep.subr.mxu0 0.0
    %3440 = vmatpush1.msra.mxu0 0.0
    %3441 = vmatprep.subr.mxu0 0.0
    %3442 = vmatpush1.msra.mxu0 0.0
    %3443 = vmatprep.subr.mxu0 0.0
    %3444 = vmatpush1.msra.mxu0 0.0
    %3445 = vmatprep.subr.mxu0 0.0
    %3446 = vmatpush1.msra.mxu0 0.0
    %3447 = vmatprep.subr.mxu0 0.0
    %3448 = vmatpush1.msra.mxu0 0.0
    %3449 = vmatprep.subr.mxu0 0.0
    %3450 = vmatpush1.msra.mxu0 0.0
    %3451 = vmatprep.subr.mxu0 0.0
    %3452 = vmatpush1.msra.mxu0 0.0
    %3453 = vmatprep.subr.mxu0 0.0
    %3454 = vmatpush1.msra.mxu0 0.0
    %3455 = vmatprep.subr.mxu0 0.0
    %3456 = vmatpush1.msra.mxu0 0.0
    %3457 = vmatprep.subr.mxu0 0.0
    %3458 = vmatpush1.msra.mxu0 0.0
    %3459 = vmatprep.subr.mxu0 0.0
    %3460 = vmatpush1.msra.mxu0 0.0
    %3461 = vmatprep.subr.mxu0 0.0
    %3462 = vmatpush1.msra.mxu0 0.0
    %3463 = vmatprep.subr.mxu0 0.0
    %3464 = vmatpush1.msra.mxu0 0.0
    %3465 = vmatprep.subr.mxu0 0.0
    %3466 = vmatpush1.msra.mxu0 0.0
    %3467 = vmatprep.subr.mxu0 0.0
    %3468 = vmatpush1.msra.mxu0 0.0
    %3469 = vmatprep.subr.mxu0 0.0
    %3470 = vmatpush1.msra.mxu0 0.0
    %3471 = vmatprep.subr.mxu0 0.0
    %3472 = vmatpush1.msra.mxu0 0.0
    %3473 = vmatprep.subr.mxu0 0.0
    %3474 = vmatpush1.msra.mxu0 0.0
    %3475 = vmatprep.subr.mxu0 0.0
    %3476 = vmatpush1.msra.mxu0 0.0
    %3477 = vmatprep.mubr.f32.mxu0 0.0
    %3478 = vmatmul.mubr.f32.gmra.mrb[0].mxu0 %v3408
    %v3479 = vpop.f32.mrb[0].mxu0
    %v3480 = vadd.f32 0.0, %v3479
    %v3481 = vpop.f32.mrb[0].mxu0
    %3482 = vmatprep.mubr.f32.mxu0 0.0
    %3483 = vmatmul.mubr.f32.gmra.mrb[0].mxu0 %v3411
    %v3484 = vpop.f32.mrb[0].mxu0
    %v3485 = vadd.f32 0.0, %v3484
    %v3486 = vpop.f32.mrb[0].mxu0
    %3487 = vdwg.mxu0
    %v3488 = vadd.f32 %v1920, %v3480
    %v3489 = vadd.f32 %v1921, %v3485
    %s3490 = scalar_lea.vmem %s5, 1
    %v3491 = vld [vmem:[%s3490] sm:$0x1]
    %v3493 = vlaneseq
    %v3494 = vshrl.u32 %v3493, 7
    %v3495 = vsub.s32 0, %v3494
    %v3496 = vrot.slane %v3491, %v3495
    %v3498 = vadd.f32 %v3488, %v3496
    %v3499 = vadd.f32 %v3489, %v3496
    %s3500 = scalar_lea.vmem %s6, 1
    %v3501 = vld [vmem:[%s3500] sm:$0x1]
    %s3502 = scalar_lea.vmem %s7, 1
    %v3503 = vld [vmem:[%s3502] sm:$0x1]
    %v3504 = vsel %vm59, %v3498, 0.0
    %3505 = vadd.xlane.f32.xlu0 %v3504
    %v3506 = vpop.xlane.xlu0 %3505
    %v3507 = vsel %vm59, %v3499, 0.0
    %3508 = vadd.xlane.f32.xlu0 %v3507
    %v3509 = vpop.xlane.xlu0 %3508
    %v3510 = vmul.f32 %v3506, %v66
    %v3511 = vmul.f32 %v3509, %v66
    %v3512 = vsub.f32 %v3498, %v3510
    %v3513 = vsub.f32 %v3499, %v3511
    %v3514 = vmul.f32 %v3512, %v3512
    %v3515 = vmul.f32 %v3513, %v3513
    %v3516 = vsel %vm59, %v3514, 0.0
    %3517 = vadd.xlane.f32.xlu0 %v3516
    %v3518 = vpop.xlane.xlu0 %3517
    %v3519 = vsel %vm59, %v3515, 0.0
    %3520 = vadd.xlane.f32.xlu0 %v3519
    %v3521 = vpop.xlane.xlu0 %3520
    %v3522 = vmul.f32 %v3518, %v66
    %v3523 = vmul.f32 %v3521, %v66
    %v3524 = vadd.f32 %v3522, 1e-05
    %v3525 = vadd.f32 %v3523, 1e-05
    %v3526 = vrsqrt.pop %v3524
    %v3527 = vrsqrt.pop %v3525
    %v3528 = vmul.f32 %v3512, %v3526
    %v3529 = vmul.f32 %v3513, %v3527
    %v3531 = vlaneseq
    %v3532 = vshrl.u32 %v3531, 7
    %v3533 = vsub.s32 0, %v3532
    %v3534 = vrot.slane %v3501, %v3533
    %v3536 = vmul.f32 %v3528, %v3534
    %v3537 = vmul.f32 %v3529, %v3534
    %v3539 = vlaneseq
    %v3540 = vshrl.u32 %v3539, 7
    %v3541 = vsub.s32 0, %v3540
    %v3542 = vrot.slane %v3503, %v3541
    %v3544 = vadd.f32 %v3536, %v3542
    %v3545 = vadd.f32 %v3537, %v3542
    %s3546 = scalar_lea.vmem [#allocation2], 32
    %v3547 = vld [vmem:[%s3546] sm:$0xff]
    %v3548 = vld [vmem:[%s3546 + $0x8] sm:$0xff]
    %v3549 = vld [vmem:[%s3546 + $0x10] sm:$0xff]
    %v3550 = vld [vmem:[%s3546 + $0x18] sm:$0xff]
    %s3551 = scalar_lea.vmem %s9, 1
    %v3552 = vld [vmem:[%s3551] sm:$0x1]
    %v3554 = vlaneseq
    %v3555 = vshrl.u32 %v3554, 7
    %v3556 = vsub.s32 0, %v3555
    %v3557 = vrot.slane %v3552, %v3556
    %v3560 = vsel %vm59, %v3544, 0
    %v3563 = vsel %vm59, %v3545, 0
    %3565 = vmatprep.subr.mxu0 0.0
    %3566 = vmatpush1.msra.mxu0 %v3547
    %3567 = vmatprep.subr.mxu0 0.0
    %3568 = vmatpush1.msra.mxu0 %v3548
    %3569 = vmatprep.subr.mxu0 0.0
    %3570 = vmatpush1.msra.mxu0 %v3549
    %3571 = vmatprep.subr.mxu0 0.0
    %3572 = vmatpush1.msra.mxu0 %v3550
    %3573 = vmatprep.subr.mxu0 0.0
    %3574 = vmatpush1.msra.mxu0 0.0
    %3575 = vmatprep.subr.mxu0 0.0
    %3576 = vmatpush1.msra.mxu0 0.0
    %3577 = vmatprep.subr.mxu0 0.0
    %3578 = vmatpush1.msra.mxu0 0.0
    %3579 = vmatprep.subr.mxu0 0.0
    %3580 = vmatpush1.msra.mxu0 0.0
    %3581 = vmatprep.subr.mxu0 0.0
    %3582 = vmatpush1.msra.mxu0 0.0
    %3583 = vmatprep.subr.mxu0 0.0
    %3584 = vmatpush1.msra.mxu0 0.0
    %3585 = vmatprep.subr.mxu0 0.0
    %3586 = vmatpush1.msra.mxu0 0.0
    %3587 = vmatprep.subr.mxu0 0.0
    %3588 = vmatpush1.msra.mxu0 0.0
    %3589 = vmatprep.subr.mxu0 0.0
    %3590 = vmatpush1.msra.mxu0 0.0
    %3591 = vmatprep.subr.mxu0 0.0
    %3592 = vmatpush1.msra.mxu0 0.0
    %3593 = vmatprep.subr.mxu0 0.0
    %3594 = vmatpush1.msra.mxu0 0.0
    %3595 = vmatprep.subr.mxu0 0.0
    %3596 = vmatpush1.msra.mxu0 0.0
    %3597 = vmatprep.subr.mxu0 0.0
    %3598 = vmatpush1.msra.mxu0 0.0
    %3599 = vmatprep.subr.mxu0 0.0
    %3600 = vmatpush1.msra.mxu0 0.0
    %3601 = vmatprep.subr.mxu0 0.0
    %3602 = vmatpush1.msra.mxu0 0.0
    %3603 = vmatprep.subr.mxu0 0.0
    %3604 = vmatpush1.msra.mxu0 0.0
    %3605 = vmatprep.subr.mxu0 0.0
    %3606 = vmatpush1.msra.mxu0 0.0
    %3607 = vmatprep.subr.mxu0 0.0
    %3608 = vmatpush1.msra.mxu0 0.0
    %3609 = vmatprep.subr.mxu0 0.0
    %3610 = vmatpush1.msra.mxu0 0.0
    %3611 = vmatprep.subr.mxu0 0.0
    %3612 = vmatpush1.msra.mxu0 0.0
    %3613 = vmatprep.subr.mxu0 0.0
    %3614 = vmatpush1.msra.mxu0 0.0
    %3615 = vmatprep.subr.mxu0 0.0
    %3616 = vmatpush1.msra.mxu0 0.0
    %3617 = vmatprep.subr.mxu0 0.0
    %3618 = vmatpush1.msra.mxu0 0.0
    %3619 = vmatprep.subr.mxu0 0.0
    %3620 = vmatpush1.msra.mxu0 0.0
    %3621 = vmatprep.subr.mxu0 0.0
    %3622 = vmatpush1.msra.mxu0 0.0
    %3623 = vmatprep.subr.mxu0 0.0
    %3624 = vmatpush1.msra.mxu0 0.0
    %3625 = vmatprep.subr.mxu0 0.0
    %3626 = vmatpush1.msra.mxu0 0.0
    %3627 = vmatprep.subr.mxu0 0.0
    %3628 = vmatpush1.msra.mxu0 0.0
    %3629 = vmatprep.mubr.f32.mxu0 0.0
    %3630 = vmatmul.mubr.f32.gmra.mrb[0].mxu0 %v3560
    %v3631 = vpop.f32.mrb[0].mxu0
    %v3632 = vadd.f32 %v3557, %v3631
    %v3633 = vpop.f32.mrb[0].mxu0
    %3634 = vmatprep.mubr.f32.mxu0 0.0
    %3635 = vmatmul.mubr.f32.gmra.mrb[0].mxu0 %v3563
    %v3636 = vpop.f32.mrb[0].mxu0
    %v3637 = vadd.f32 %v3557, %v3636
    %v3638 = vpop.f32.mrb[0].mxu0
    %3639 = vdwg.mxu0
    %v3640 = vmul.f32 %v3632, 0.5
    %v3641 = vmul.f32 %v3637, 0.5
    %v3642 = vmul.f32 %v3632, 0.70710677
    %v3643 = vmul.f32 %v3637, 0.70710677
    %v3644 = vand.u32 2147483647, %v3642
    %v3645 = vand.u32 2147483647, %v3643
    %v3646 = vmul.f32 %v3644, 0.3275911
    %v3647 = vmul.f32 %v3645, 0.3275911
    %v3648 = vadd.f32 %v3646, 1.0
    %v3649 = vadd.f32 %v3647, 1.0
    %v3650 = vrcp.pop %v3648
    %v3651 = vrcp.pop %v3649
    %v3652 = vmul.f32 %v3650, 1.0614054
    %v3653 = vmul.f32 %v3651, 1.0614054
    %v3654 = vadd.f32 %v3652, -1.4531521
    %v3655 = vadd.f32 %v3653, -1.4531521
    %v3656 = vmul.f32 %v3654, %v3650
    %v3657 = vmul.f32 %v3655, %v3651
    %v3658 = vadd.f32 %v3656, 1.4214138
    %v3659 = vadd.f32 %v3657, 1.4214138
    %v3660 = vmul.f32 %v3658, %v3650
    %v3661 = vmul.f32 %v3659, %v3651
    %v3662 = vadd.f32 %v3660, -0.28449672
    %v3663 = vadd.f32 %v3661, -0.28449672
    %v3664 = vmul.f32 %v3662, %v3650
    %v3665 = vmul.f32 %v3663, %v3651
    %v3666 = vadd.f32 %v3664, 0.2548296
    %v3667 = vadd.f32 %v3665, 0.2548296
    %v3668 = vmul.f32 %v3666, %v3650
    %v3669 = vmul.f32 %v3667, %v3651
    %v3670 = vsub.f32 0.0, %v3644
    %v3671 = vsub.f32 0.0, %v3645
    %v3672 = vmul.f32 %v3670, %v3644
    %v3673 = vmul.f32 %v3671, %v3645
    %v3674 = vmul.f32 %v3672, 1.442695
    %v3675 = vpow.pop %v3674
    %v3676 = vmul.f32 %v3673, 1.442695
    %v3677 = vpow.pop %v3676
    %v3678 = vmul.f32 %v3668, %v3675
    %v3679 = vmul.f32 %v3669, %v3677
    %v3680 = vsub.f32 1.0, %v3678
    %v3681 = vsub.f32 1.0, %v3679
    %vm3682 = vcmp.ge.f32.partialorder %v3642, 0.0
    %vm3683 = vcmp.ge.f32.partialorder %v3643, 0.0
    %v3684 = vsub.f32 0.0, %v3680
    %v3685 = vsub.f32 0.0, %v3681
    %v3686 = vsel %vm3682, %v3680, %v3684
    %v3687 = vsel %vm3683, %v3681, %v3685
    %v3688 = vadd.f32 %v3686, 1.0
    %v3689 = vadd.f32 %v3687, 1.0
    %v3690 = vmul.f32 %v3640, %v3688
    %v3691 = vmul.f32 %v3641, %v3689
    %s3692 = scalar_lea.vmem %s10, 64
    %v3693 = vld [vmem:[%s3692] sm:$0xff]
    %v3694 = vld [vmem:[%s3692 + $0x8] sm:$0xff]
    %v3695 = vld [vmem:[%s3692 + $0x10] sm:$0xff]
    %v3696 = vld [vmem:[%s3692 + $0x18] sm:$0xff]
    %v3697 = vld [vmem:[%s3692 + $0x20] sm:$0xff]
    %v3698 = vld [vmem:[%s3692 + $0x28] sm:$0xff]
    %v3699 = vld [vmem:[%s3692 + $0x30] sm:$0xff]
    %v3700 = vld [vmem:[%s3692 + $0x38] sm:$0xff]
    %s3701 = scalar_lea.vmem %s11, 1
    %v3702 = vld [vmem:[%s3701] sm:$0x1]
    %v3704 = vlaneseq
    %v3705 = vshrl.u32 %v3704, 7
    %v3706 = vsub.s32 0, %v3705
    %v3707 = vrot.slane %v3702, %v3706
    %v3710 = vsel %vm1838, %v3690, 0
    %v3713 = vsel %vm1838, %v3691, 0
    %3715 = vmatprep.subr.mxu0 0.0
    %3716 = vmatpush1.msra.mxu0 %v3693
    %3717 = vmatprep.subr.mxu0 0.0
    %3718 = vmatpush1.msra.mxu0 %v3694
    %3719 = vmatprep.subr.mxu0 0.0
    %3720 = vmatpush1.msra.mxu0 %v3695
    %3721 = vmatprep.subr.mxu0 0.0
    %3722 = vmatpush1.msra.mxu0 %v3696
    %3723 = vmatprep.subr.mxu0 0.0
    %3724 = vmatpush1.msra.mxu0 %v3697
    %3725 = vmatprep.subr.mxu0 0.0
    %3726 = vmatpush1.msra.mxu0 %v3698
    %3727 = vmatprep.subr.mxu0 0.0
    %3728 = vmatpush1.msra.mxu0 %v3699
    %3729 = vmatprep.subr.mxu0 0.0
    %3730 = vmatpush1.msra.mxu0 %v3700
    %3731 = vmatprep.subr.mxu0 0.0
    %3732 = vmatpush1.msra.mxu0 0.0
    %3733 = vmatprep.subr.mxu0 0.0
    %3734 = vmatpush1.msra.mxu0 0.0
    %3735 = vmatprep.subr.mxu0 0.0
    %3736 = vmatpush1.msra.mxu0 0.0
    %3737 = vmatprep.subr.mxu0 0.0
    %3738 = vmatpush1.msra.mxu0 0.0
    %3739 = vmatprep.subr.mxu0 0.0
    %3740 = vmatpush1.msra.mxu0 0.0
    %3741 = vmatprep.subr.mxu0 0.0
    %3742 = vmatpush1.msra.mxu0 0.0
    %3743 = vmatprep.subr.mxu0 0.0
    %3744 = vmatpush1.msra.mxu0 0.0
    %3745 = vmatprep.subr.mxu0 0.0
    %3746 = vmatpush1.msra.mxu0 0.0
    %3747 = vmatprep.subr.mxu0 0.0
    %3748 = vmatpush1.msra.mxu0 0.0
    %3749 = vmatprep.subr.mxu0 0.0
    %3750 = vmatpush1.msra.mxu0 0.0
    %3751 = vmatprep.subr.mxu0 0.0
    %3752 = vmatpush1.msra.mxu0 0.0
    %3753 = vmatprep.subr.mxu0 0.0
    %3754 = vmatpush1.msra.mxu0 0.0
    %3755 = vmatprep.subr.mxu0 0.0
    %3756 = vmatpush1.msra.mxu0 0.0
    %3757 = vmatprep.subr.mxu0 0.0
    %3758 = vmatpush1.msra.mxu0 0.0
    %3759 = vmatprep.subr.mxu0 0.0
    %3760 = vmatpush1.msra.mxu0 0.0
    %3761 = vmatprep.subr.mxu0 0.0
    %3762 = vmatpush1.msra.mxu0 0.0
    %3763 = vmatprep.subr.mxu0 0.0
    %3764 = vmatpush1.msra.mxu0 0.0
    %3765 = vmatprep.subr.mxu0 0.0
    %3766 = vmatpush1.msra.mxu0 0.0
    %3767 = vmatprep.subr.mxu0 0.0
    %3768 = vmatpush1.msra.mxu0 0.0
    %3769 = vmatprep.subr.mxu0 0.0
    %3770 = vmatpush1.msra.mxu0 0.0
    %3771 = vmatprep.subr.mxu0 0.0
    %3772 = vmatpush1.msra.mxu0 0.0
    %3773 = vmatprep.subr.mxu0 0.0
    %3774 = vmatpush1.msra.mxu0 0.0
    %3775 = vmatprep.subr.mxu0 0.0
    %3776 = vmatpush1.msra.mxu0 0.0
    %3777 = vmatprep.subr.mxu0 0.0
    %3778 = vmatpush1.msra.mxu0 0.0
    %3779 = vmatprep.mubr.f32.mxu0 0.0
    %3780 = vmatmul.mubr.f32.gmra.mrb[0].mxu0 %v3710
    %v3781 = vpop.f32.mrb[0].mxu0
    %v3782 = vadd.f32 %v3707, %v3781
    %v3783 = vpop.f32.mrb[0].mxu0
    %3784 = vmatprep.mubr.f32.mxu0 0.0
    %3785 = vmatmul.mubr.f32.gmra.mrb[0].mxu0 %v3713
    %v3786 = vpop.f32.mrb[0].mxu0
    %v3787 = vadd.f32 %v3707, %v3786
    %v3788 = vpop.f32.mrb[0].mxu0
    %3789 = vdwg.mxu0
    %v3790 = vadd.f32 %v3498, %v3782
    %v3791 = vadd.f32 %v3499, %v3787
    %3792 = vst.msk [vmem:[%s12] sm:$0xff] %vm59, %v3790
    %3793 = vst.msk [vmem:[%s12 + $0x8] sm:$0xff] %vm59, %v3791
    // Predicated region
    $region54: #{transformer_forward_pallas.1} parent=1 // pred_check
      _
    $region55: #{transformer_forward_pallas.1} parent=1 // pred_check_branch
      %3795 = sbr.rel (0) target = $region57
    $region56: #{transformer_forward_pallas.1} parent=1 // pred_region
      _
    $region57: #{transformer_forward_pallas.1} parent=1 // pred_fallthru
      _
    // Predicated region
    $region58: #{transformer_forward_pallas.1} parent=1 // pred_check
      _
    $region59: #{transformer_forward_pallas.1} parent=1 // pred_check_branch
      %3797 = sbr.rel (0) target = $region61
    $region60: #{transformer_forward_pallas.1} parent=1 // pred_region
      _
    $region61: #{transformer_forward_pallas.1} parent=1 // pred_fallthru
      _
    %3798 = vsyncpa [#allocation3], 1

</llo_original>
